<compile_context>
chip_gen: v5e
topology: v5e:2x2
jax: 0.10.0
libtpu: 0.0.40
codegen_flags: <defaults>
</compile_context>

<pallas_src>
import jax
import jax.numpy as jnp
from jax.experimental import pallas as pl
from jax.experimental.pallas import tpu as pltpu

_LANE = 128


def _lstm_kernel(xT_ref, v_ref, b_ref, whhT_ref, woT_ref, bo_ref, out_ref):
    """Whole forward pass for one batch tile, batch on the LANE axis.

    xT_ref   : (S, TB)    f32       inputs; time on sublanes, batch on lanes
    v_ref    : (4H, 1)    f32       folded embed weight column  (wih^T @ we^T)
    b_ref    : (4H, 1)    f32       folded bias column (wih^T @ be^T + b_ih + b_hh)
    whhT_ref : (4H, H)    f32/bf16  hidden->gates weight, pre-transposed
    woT_ref  : (O, H)     f32       output layer weight, pre-transposed
    bo_ref   : (O, 1)     f32       output layer bias
    out_ref  : (O, TB)    f32       result (batch on lanes; transposed in wrapper)
    """
    S, TB = xT_ref.shape
    H = whhT_ref.shape[1]

    # ---- Hoist all loads once (no per-step reloads). ----
    xT = xT_ref[...]                         # (S, TB)
    v = v_ref[...]                           # (4H, 1)
    whhT = whhT_ref[...]                     # (4H, H), possibly bf16
    mxu_dtype = whhT.dtype
    # Loop-invariant broadcast hoisted (JAX does not CSE broadcast_in_dim).
    b_all = jnp.broadcast_to(b_ref[...], (4 * H, TB))

    # LSTM state carried purely in vregs, batch on lanes -> fully dense vregs.
    h = jnp.zeros((H, TB), jnp.float32)
    c = jnp.zeros((H, TB), jnp.float32)

    # S is small & static -> fully unroll for LLO scheduling visibility.
    # TODO(synk): if S grows past ~16-32, switch to lax.fori_loop(unroll=4-8)
    # to bound vreg live ranges.
    for s in range(S):
        xs = xT[s:s + 1, :]                                  # (1, TB) sublane slice
        # Input contribution is h-independent (VPU broadcast outer product);
        # only whh^T @ h sits on the serial MXU critical path.
        gates = (xs * v + b_all
                 + jnp.dot(whhT, h.astype(mxu_dtype),
                           preferred_element_type=jnp.float32))   # (4H, TB)

        # Sublane-aligned (H = 32 = 4 x 8) lane-dense gate slices.
        i = jax.nn.sigmoid(gates[0 * H:1 * H, :])
        f = jax.nn.sigmoid(gates[1 * H:2 * H, :])
        g = jnp.tanh(gates[2 * H:3 * H, :])
        o = jax.nn.sigmoid(gates[3 * H:4 * H, :])

        c = f * c + i * g
        h = o * jnp.tanh(c)

    # output_layer(in_hx): (O, H) @ (H, TB) + (O, 1) -> lane-dense (O, TB) store.
    out_ref[...] = (jnp.dot(woT_ref[...], h, preferred_element_type=jnp.float32)
                    + bo_ref[...])


def _choose_batch_tile(batch):
    """Batch lives on the lane axis: tiles are multiples of 128 lanes."""
    if batch <= _LANE:
        return _LANE            # one fully lane-padded tile
    if batch <= 4 * _LANE:
        return _LANE            # 2-4 tiles of 128 (>=2 tiles feeds both v7x TCs)
    return 2 * _LANE            # 256-lane tiles for large batches (MXU fill)


def seq2seq_pred_forward(x, params, *, mxu_dtype=jnp.bfloat16, batch_tile=None):
    """x: (B, S) float32 -> (B, out_seq_len) float32."""
    B, S = x.shape
    H = params["whh"].shape[0]
    O = params["wo"].shape[1]

    TB = batch_tile if batch_tile is not None else _choose_batch_tile(B)
    Bp = ((B + TB - 1) // TB) * TB
    num_tiles = Bp // TB

    # ---- Parameter-only folds, done ONCE in XLA (outside the kernel) ----
    # embed(x_t) @ W_ih^T == x_t * (we @ wih) + (be @ wih); exact reassociation.
    v = (params["embed_w"] @ params["wih"]).T                      # (4H, 1)
    b_all = (params["embed_b"] @ params["wih"] + params["b"]).T    # (4H, 1)
    whhT = params["whh"].T.astype(mxu_dtype)                       # (4H, H)
    woT = params["wo"].T                                           # (O, H)
    bo = params["bo"].T                                            # (O, 1)

    # Batch on the lane axis, zero-padded to a multiple of the tile.
    xT = jnp.zeros((S, Bp), jnp.float32).at[:, :B].set(x.T)

    cost = pl.CostEstimate(
        flops=Bp * S * 2 * H * 4 * H + Bp * 2 * H * O,
        transcendentals=Bp * S * 5 * H,
        bytes_accessed=(4 * (S * Bp + 4 * H + 4 * H + O * H + O + O * Bp)
                        + whhT.dtype.itemsize * 4 * H * H),
    )

    out_t = pl.pallas_call(
        _lstm_kernel,
        out_shape=jax.ShapeDtypeStruct((O, Bp), jnp.float32),
        grid=(num_tiles,),
        in_specs=[
            pl.BlockSpec((S, TB), lambda i: (0, i)),       # xT: tiled over batch lanes
            pl.BlockSpec((4 * H, 1), lambda i: (0, 0)),    # folded embed weight
            pl.BlockSpec((4 * H, 1), lambda i: (0, 0)),    # folded bias
            pl.BlockSpec((4 * H, H), lambda i: (0, 0)),    # whh^T (bf16 on MXU)
            pl.BlockSpec((O, H), lambda i: (0, 0)),        # wo^T
            pl.BlockSpec((O, 1), lambda i: (0, 0)),        # bo
        ],
        out_specs=pl.BlockSpec((O, TB), lambda i: (0, i)),
        compiler_params=pltpu.CompilerParams(
            dimension_semantics=("parallel",)),
        cost_estimate=cost,
    )(xT, v, b_all, whhT, woT, bo)

    return out_t.T[:B]


def make_params(key, rnn_inpt_size, hidden_size, out_seq_len):
    """Deterministic synthetic parameters matching the PyTorch module shapes
    (stored pre-transposed for row-major matmuls)."""
    ks = jax.random.split(key, 8)
    R, H, O = rnn_inpt_size, hidden_size, out_seq_len
    scale = 0.2
    return {
        # nn.Linear(1, R): weight (R,1), bias (R,) -> stored as (1,R)/(1,R)
        "embed_w": scale * jax.random.normal(ks[0], (1, R), jnp.float32),
        "embed_b": scale * jax.random.normal(ks[1], (1, R), jnp.float32),
        # nn.LSTMCell(R, H): W_ih (4H,R), W_hh (4H,H), b_ih (4H,), b_hh (4H,)
        "wih": scale * jax.random.normal(ks[2], (R, 4 * H), jnp.float32),
        "whh": scale * jax.random.normal(ks[3], (H, 4 * H), jnp.float32),
        "b": (scale * jax.random.normal(ks[4], (1, 4 * H), jnp.float32)
              + scale * jax.random.normal(ks[5], (1, 4 * H), jnp.float32)),
        # nn.Linear(H, out_seq_len): weight (O,H), bias (O,)
        "wo": scale * jax.random.normal(ks[6], (H, O), jnp.float32),
        "bo": scale * jax.random.normal(ks[7], (1, O), jnp.float32),
    }


def reference_forward(x, p):
    """Pure-JAX reference mirroring the PyTorch forward (eval mode)."""
    B, S = x.shape
    H = p["whh"].shape[0]
    emb = x[..., None] * p["embed_w"][0][None, None, :] + p["embed_b"][0]
    h = jnp.zeros((B, H), jnp.float32)
    c = jnp.zeros((B, H), jnp.float32)
    for s in range(S):
        gates = emb[:, s] @ p["wih"] + h @ p["whh"] + p["b"][0]
        i = jax.nn.sigmoid(gates[:, 0 * H:1 * H])
        f = jax.nn.sigmoid(gates[:, 1 * H:2 * H])
        g = jnp.tanh(gates[:, 2 * H:3 * H])
        o = jax.nn.sigmoid(gates[:, 3 * H:4 * H])
        c = f * c + i * g
        h = o * jnp.tanh(c)
    return h @ p["wo"] + p["bo"][0]


if __name__ == "__main__":
    # Small shapes consistent with the module's forward:
    # enc_inputs (batch, seq), ts_features=1 (unsqueeze(-1) in forward).
    batch, seq = 4, 8
    rnn_inpt_size, hidden_size, out_seq_len = 16, 32, 8

    key = jax.random.PRNGKey(0)
    k_x, k_p = jax.random.split(key)
    x = jax.random.normal(k_x, (batch, seq), jnp.float32)
    params = make_params(k_p, rnn_inpt_size, hidden_size, out_seq_len)

    ref = reference_forward(x, params)

    # f32-MXU path: matches the pure-JAX reference tightly.
    out_f32 = jax.block_until_ready(
        seq2seq_pred_forward(x, params, mxu_dtype=jnp.float32))
    assert out_f32.shape == (batch, out_seq_len)
    assert jnp.allclose(out_f32, ref, rtol=1e-4, atol=1e-5), "f32 mismatch vs reference"

    # bf16-on-MXU path (default; faster serial recurrence, f32 accumulation).
    out_bf16 = jax.block_until_ready(seq2seq_pred_forward(x, params))
    assert out_bf16.shape == (batch, out_seq_len)
    assert jnp.allclose(out_bf16, ref, rtol=5e-2, atol=5e-2), "bf16 mismatch vs reference"

    # TODO(synk): dropout is treated as identity (eval mode); training-mode
    # stochastic dropout would use pltpu.prng_seed/prng_random_bits.
    print("KERNEL_OK")
</pallas_src>

<mosaic_0001>
module attributes {stable_mosaic.version = 11 : i64} {
  func.func @_lstm_kernel(%arg0: i32, %arg1: memref<8x128xf32, #tpu.memory_space<vmem>>, %arg2: memref<128x1xf32, #tpu.memory_space<vmem>>, %arg3: memref<128x1xf32, #tpu.memory_space<vmem>>, %arg4: memref<128x32xf32, #tpu.memory_space<vmem>>, %arg5: memref<8x32xf32, #tpu.memory_space<vmem>>, %arg6: memref<8x1xf32, #tpu.memory_space<vmem>>, %arg7: memref<8x128xf32, #tpu.memory_space<vmem>>) attributes {dimension_semantics = [#tpu.dimension_semantics<parallel>], iteration_bounds = array<i64: 1>, scalar_prefetch = 0 : i64, scratch_operands = 0 : i64, tpu.core_type = #tpu.core_type<tc>, window_params = [{transform_indices = @transform_0, window_bounds = array<i64: 8, 128>}, {pipeline_mode = #tpu.pipeline_mode<synchronous>, transform_indices = @transform_1, window_bounds = array<i64: 128, 1>}, {pipeline_mode = #tpu.pipeline_mode<synchronous>, transform_indices = @transform_2, window_bounds = array<i64: 128, 1>}, {pipeline_mode = #tpu.pipeline_mode<synchronous>, transform_indices = @transform_3, window_bounds = array<i64: 128, 32>}, {pipeline_mode = #tpu.pipeline_mode<synchronous>, transform_indices = @transform_4, window_bounds = array<i64: 8, 32>}, {pipeline_mode = #tpu.pipeline_mode<synchronous>, transform_indices = @transform_5, window_bounds = array<i64: 8, 1>}, {transform_indices = @transform_6, window_bounds = array<i64: 8, 128>}]} {
    %c0 = arith.constant 0 : index
    %c0_0 = arith.constant 0 : index
    %0 = vector.load %arg1[%c0, %c0_0] : memref<8x128xf32, #tpu.memory_space<vmem>>, vector<8x128xf32>
    %c0_1 = arith.constant 0 : index
    %c0_2 = arith.constant 0 : index
    %1 = vector.load %arg2[%c0_1, %c0_2] : memref<128x1xf32, #tpu.memory_space<vmem>>, vector<128x1xf32>
    %c0_3 = arith.constant 0 : index
    %c0_4 = arith.constant 0 : index
    %2 = vector.load %arg4[%c0_3, %c0_4] : memref<128x32xf32, #tpu.memory_space<vmem>>, vector<128x32xf32>
    %c0_5 = arith.constant 0 : index
    %c0_6 = arith.constant 0 : index
    %3 = vector.load %arg3[%c0_5, %c0_6] : memref<128x1xf32, #tpu.memory_space<vmem>>, vector<128x1xf32>
    %4 = vector.shape_cast %3 : vector<128x1xf32> to vector<128x1xf32>
    %5 = vector.broadcast %4 : vector<128x1xf32> to vector<128x128xf32>
    %cst = arith.constant 0.000000e+00 : f32
    %6 = vector.broadcast %cst : f32 to vector<32x128xf32>
    %cst_7 = arith.constant 0.000000e+00 : f32
    %7 = vector.broadcast %cst_7 : f32 to vector<32x128xf32>
    %8 = vector.extract_strided_slice %0 {offsets = [0, 0], sizes = [1, 128], strides = [1, 1]} : vector<8x128xf32> to vector<1x128xf32>
    %9 = vector.broadcast %8 : vector<1x128xf32> to vector<128x128xf32>
    %10 = vector.broadcast %1 : vector<128x1xf32> to vector<128x128xf32>
    %11 = arith.mulf %9, %10 : vector<128x128xf32>
    %12 = arith.addf %11, %5 : vector<128x128xf32>
    %cst_8 = arith.constant dense<0.000000e+00> : vector<128x128xf32>
    %13 = tpu.matmul %2, %6, %cst_8 {dimension_numbers = #tpu.dot_dimension_numbers<[1], [0], [0], [1], [0, 0, 1, 1], [], []>} : vector<128x32xf32>, vector<32x128xf32>, vector<128x128xf32> -> vector<128x128xf32>
    %14 = arith.addf %12, %13 : vector<128x128xf32>
    %15 = vector.extract_strided_slice %14 {offsets = [0, 0], sizes = [32, 128], strides = [1, 1]} : vector<128x128xf32> to vector<32x128xf32>
    %16 = arith.negf %15 : vector<32x128xf32>
    %17 = math.exp %16 : vector<32x128xf32>
    %cst_9 = arith.constant 1.000000e+00 : f32
    %18 = vector.broadcast %cst_9 : f32 to vector<32x128xf32>
    %19 = arith.addf %18, %17 : vector<32x128xf32>
    %20 = arith.divf %18, %19 : vector<32x128xf32>
    %21 = vector.extract_strided_slice %14 {offsets = [32, 0], sizes = [32, 128], strides = [1, 1]} : vector<128x128xf32> to vector<32x128xf32>
    %22 = arith.negf %21 : vector<32x128xf32>
    %23 = math.exp %22 : vector<32x128xf32>
    %cst_10 = arith.constant 1.000000e+00 : f32
    %24 = vector.broadcast %cst_10 : f32 to vector<32x128xf32>
    %25 = arith.addf %24, %23 : vector<32x128xf32>
    %26 = arith.divf %24, %25 : vector<32x128xf32>
    %27 = vector.extract_strided_slice %14 {offsets = [64, 0], sizes = [32, 128], strides = [1, 1]} : vector<128x128xf32> to vector<32x128xf32>
    %28 = math.tanh %27 : vector<32x128xf32>
    %29 = vector.extract_strided_slice %14 {offsets = [96, 0], sizes = [32, 128], strides = [1, 1]} : vector<128x128xf32> to vector<32x128xf32>
    %30 = arith.negf %29 : vector<32x128xf32>
    %31 = math.exp %30 : vector<32x128xf32>
    %cst_11 = arith.constant 1.000000e+00 : f32
    %32 = vector.broadcast %cst_11 : f32 to vector<32x128xf32>
    %33 = arith.addf %32, %31 : vector<32x128xf32>
    %34 = arith.divf %32, %33 : vector<32x128xf32>
    %35 = arith.mulf %26, %7 : vector<32x128xf32>
    %36 = arith.mulf %20, %28 : vector<32x128xf32>
    %37 = arith.addf %35, %36 : vector<32x128xf32>
    %38 = math.tanh %37 : vector<32x128xf32>
    %39 = arith.mulf %34, %38 : vector<32x128xf32>
    %40 = vector.extract_strided_slice %0 {offsets = [1, 0], sizes = [1, 128], strides = [1, 1]} : vector<8x128xf32> to vector<1x128xf32>
    %41 = vector.broadcast %40 : vector<1x128xf32> to vector<128x128xf32>
    %42 = vector.broadcast %1 : vector<128x1xf32> to vector<128x128xf32>
    %43 = arith.mulf %41, %42 : vector<128x128xf32>
    %44 = arith.addf %43, %5 : vector<128x128xf32>
    %cst_12 = arith.constant dense<0.000000e+00> : vector<128x128xf32>
    %45 = tpu.matmul %2, %39, %cst_12 {dimension_numbers = #tpu.dot_dimension_numbers<[1], [0], [0], [1], [0, 0, 1, 1], [], []>} : vector<128x32xf32>, vector<32x128xf32>, vector<128x128xf32> -> vector<128x128xf32>
    %46 = arith.addf %44, %45 : vector<128x128xf32>
    %47 = vector.extract_strided_slice %46 {offsets = [0, 0], sizes = [32, 128], strides = [1, 1]} : vector<128x128xf32> to vector<32x128xf32>
    %48 = arith.negf %47 : vector<32x128xf32>
    %49 = math.exp %48 : vector<32x128xf32>
    %cst_13 = arith.constant 1.000000e+00 : f32
    %50 = vector.broadcast %cst_13 : f32 to vector<32x128xf32>
    %51 = arith.addf %50, %49 : vector<32x128xf32>
    %52 = arith.divf %50, %51 : vector<32x128xf32>
    %53 = vector.extract_strided_slice %46 {offsets = [32, 0], sizes = [32, 128], strides = [1, 1]} : vector<128x128xf32> to vector<32x128xf32>
    %54 = arith.negf %53 : vector<32x128xf32>
    %55 = math.exp %54 : vector<32x128xf32>
    %cst_14 = arith.constant 1.000000e+00 : f32
    %56 = vector.broadcast %cst_14 : f32 to vector<32x128xf32>
    %57 = arith.addf %56, %55 : vector<32x128xf32>
    %58 = arith.divf %56, %57 : vector<32x128xf32>
    %59 = vector.extract_strided_slice %46 {offsets = [64, 0], sizes = [32, 128], strides = [1, 1]} : vector<128x128xf32> to vector<32x128xf32>
    %60 = math.tanh %59 : vector<32x128xf32>
    %61 = vector.extract_strided_slice %46 {offsets = [96, 0], sizes = [32, 128], strides = [1, 1]} : vector<128x128xf32> to vector<32x128xf32>
    %62 = arith.negf %61 : vector<32x128xf32>
    %63 = math.exp %62 : vector<32x128xf32>
    %cst_15 = arith.constant 1.000000e+00 : f32
    %64 = vector.broadcast %cst_15 : f32 to vector<32x128xf32>
    %65 = arith.addf %64, %63 : vector<32x128xf32>
    %66 = arith.divf %64, %65 : vector<32x128xf32>
    %67 = arith.mulf %58, %37 : vector<32x128xf32>
    %68 = arith.mulf %52, %60 : vector<32x128xf32>
    %69 = arith.addf %67, %68 : vector<32x128xf32>
    %70 = math.tanh %69 : vector<32x128xf32>
    %71 = arith.mulf %66, %70 : vector<32x128xf32>
    %72 = vector.extract_strided_slice %0 {offsets = [2, 0], sizes = [1, 128], strides = [1, 1]} : vector<8x128xf32> to vector<1x128xf32>
    %73 = vector.broadcast %72 : vector<1x128xf32> to vector<128x128xf32>
    %74 = vector.broadcast %1 : vector<128x1xf32> to vector<128x128xf32>
    %75 = arith.mulf %73, %74 : vector<128x128xf32>
    %76 = arith.addf %75, %5 : vector<128x128xf32>
    %cst_16 = arith.constant dense<0.000000e+00> : vector<128x128xf32>
    %77 = tpu.matmul %2, %71, %cst_16 {dimension_numbers = #tpu.dot_dimension_numbers<[1], [0], [0], [1], [0, 0, 1, 1], [], []>} : vector<128x32xf32>, vector<32x128xf32>, vector<128x128xf32> -> vector<128x128xf32>
    %78 = arith.addf %76, %77 : vector<128x128xf32>
    %79 = vector.extract_strided_slice %78 {offsets = [0, 0], sizes = [32, 128], strides = [1, 1]} : vector<128x128xf32> to vector<32x128xf32>
    %80 = arith.negf %79 : vector<32x128xf32>
    %81 = math.exp %80 : vector<32x128xf32>
    %cst_17 = arith.constant 1.000000e+00 : f32
    %82 = vector.broadcast %cst_17 : f32 to vector<32x128xf32>
    %83 = arith.addf %82, %81 : vector<32x128xf32>
    %84 = arith.divf %82, %83 : vector<32x128xf32>
    %85 = vector.extract_strided_slice %78 {offsets = [32, 0], sizes = [32, 128], strides = [1, 1]} : vector<128x128xf32> to vector<32x128xf32>
    %86 = arith.negf %85 : vector<32x128xf32>
    %87 = math.exp %86 : vector<32x128xf32>
    %cst_18 = arith.constant 1.000000e+00 : f32
    %88 = vector.broadcast %cst_18 : f32 to vector<32x128xf32>
    %89 = arith.addf %88, %87 : vector<32x128xf32>
    %90 = arith.divf %88, %89 : vector<32x128xf32>
    %91 = vector.extract_strided_slice %78 {offsets = [64, 0], sizes = [32, 128], strides = [1, 1]} : vector<128x128xf32> to vector<32x128xf32>
    %92 = math.tanh %91 : vector<32x128xf32>
    %93 = vector.extract_strided_slice %78 {offsets = [96, 0], sizes = [32, 128], strides = [1, 1]} : vector<128x128xf32> to vector<32x128xf32>
    %94 = arith.negf %93 : vector<32x128xf32>
    %95 = math.exp %94 : vector<32x128xf32>
    %cst_19 = arith.constant 1.000000e+00 : f32
    %96 = vector.broadcast %cst_19 : f32 to vector<32x128xf32>
    %97 = arith.addf %96, %95 : vector<32x128xf32>
    %98 = arith.divf %96, %97 : vector<32x128xf32>
    %99 = arith.mulf %90, %69 : vector<32x128xf32>
    %100 = arith.mulf %84, %92 : vector<32x128xf32>
    %101 = arith.addf %99, %100 : vector<32x128xf32>
    %102 = math.tanh %101 : vector<32x128xf32>
    %103 = arith.mulf %98, %102 : vector<32x128xf32>
    %104 = vector.extract_strided_slice %0 {offsets = [3, 0], sizes = [1, 128], strides = [1, 1]} : vector<8x128xf32> to vector<1x128xf32>
    %105 = vector.broadcast %104 : vector<1x128xf32> to vector<128x128xf32>
    %106 = vector.broadcast %1 : vector<128x1xf32> to vector<128x128xf32>
    %107 = arith.mulf %105, %106 : vector<128x128xf32>
    %108 = arith.addf %107, %5 : vector<128x128xf32>
    %cst_20 = arith.constant dense<0.000000e+00> : vector<128x128xf32>
    %109 = tpu.matmul %2, %103, %cst_20 {dimension_numbers = #tpu.dot_dimension_numbers<[1], [0], [0], [1], [0, 0, 1, 1], [], []>} : vector<128x32xf32>, vector<32x128xf32>, vector<128x128xf32> -> vector<128x128xf32>
    %110 = arith.addf %108, %109 : vector<128x128xf32>
    %111 = vector.extract_strided_slice %110 {offsets = [0, 0], sizes = [32, 128], strides = [1, 1]} : vector<128x128xf32> to vector<32x128xf32>
    %112 = arith.negf %111 : vector<32x128xf32>
    %113 = math.exp %112 : vector<32x128xf32>
    %cst_21 = arith.constant 1.000000e+00 : f32
    %114 = vector.broadcast %cst_21 : f32 to vector<32x128xf32>
    %115 = arith.addf %114, %113 : vector<32x128xf32>
    %116 = arith.divf %114, %115 : vector<32x128xf32>
    %117 = vector.extract_strided_slice %110 {offsets = [32, 0], sizes = [32, 128], strides = [1, 1]} : vector<128x128xf32> to vector<32x128xf32>
    %118 = arith.negf %117 : vector<32x128xf32>
    %119 = math.exp %118 : vector<32x128xf32>
    %cst_22 = arith.constant 1.000000e+00 : f32
    %120 = vector.broadcast %cst_22 : f32 to vector<32x128xf32>
    %121 = arith.addf %120, %119 : vector<32x128xf32>
    %122 = arith.divf %120, %121 : vector<32x128xf32>
    %123 = vector.extract_strided_slice %110 {offsets = [64, 0], sizes = [32, 128], strides = [1, 1]} : vector<128x128xf32> to vector<32x128xf32>
    %124 = math.tanh %123 : vector<32x128xf32>
    %125 = vector.extract_strided_slice %110 {offsets = [96, 0], sizes = [32, 128], strides = [1, 1]} : vector<128x128xf32> to vector<32x128xf32>
    %126 = arith.negf %125 : vector<32x128xf32>
    %127 = math.exp %126 : vector<32x128xf32>
    %cst_23 = arith.constant 1.000000e+00 : f32
    %128 = vector.broadcast %cst_23 : f32 to vector<32x128xf32>
    %129 = arith.addf %128, %127 : vector<32x128xf32>
    %130 = arith.divf %128, %129 : vector<32x128xf32>
    %131 = arith.mulf %122, %101 : vector<32x128xf32>
    %132 = arith.mulf %116, %124 : vector<32x128xf32>
    %133 = arith.addf %131, %132 : vector<32x128xf32>
    %134 = math.tanh %133 : vector<32x128xf32>
    %135 = arith.mulf %130, %134 : vector<32x128xf32>
    %136 = vector.extract_strided_slice %0 {offsets = [4, 0], sizes = [1, 128], strides = [1, 1]} : vector<8x128xf32> to vector<1x128xf32>
    %137 = vector.broadcast %136 : vector<1x128xf32> to vector<128x128xf32>
    %138 = vector.broadcast %1 : vector<128x1xf32> to vector<128x128xf32>
    %139 = arith.mulf %137, %138 : vector<128x128xf32>
    %140 = arith.addf %139, %5 : vector<128x128xf32>
    %cst_24 = arith.constant dense<0.000000e+00> : vector<128x128xf32>
    %141 = tpu.matmul %2, %135, %cst_24 {dimension_numbers = #tpu.dot_dimension_numbers<[1], [0], [0], [1], [0, 0, 1, 1], [], []>} : vector<128x32xf32>, vector<32x128xf32>, vector<128x128xf32> -> vector<128x128xf32>
    %142 = arith.addf %140, %141 : vector<128x128xf32>
    %143 = vector.extract_strided_slice %142 {offsets = [0, 0], sizes = [32, 128], strides = [1, 1]} : vector<128x128xf32> to vector<32x128xf32>
    %144 = arith.negf %143 : vector<32x128xf32>
    %145 = math.exp %144 : vector<32x128xf32>
    %cst_25 = arith.constant 1.000000e+00 : f32
    %146 = vector.broadcast %cst_25 : f32 to vector<32x128xf32>
    %147 = arith.addf %146, %145 : vector<32x128xf32>
    %148 = arith.divf %146, %147 : vector<32x128xf32>
    %149 = vector.extract_strided_slice %142 {offsets = [32, 0], sizes = [32, 128], strides = [1, 1]} : vector<128x128xf32> to vector<32x128xf32>
    %150 = arith.negf %149 : vector<32x128xf32>
    %151 = math.exp %150 : vector<32x128xf32>
    %cst_26 = arith.constant 1.000000e+00 : f32
    %152 = vector.broadcast %cst_26 : f32 to vector<32x128xf32>
    %153 = arith.addf %152, %151 : vector<32x128xf32>
    %154 = arith.divf %152, %153 : vector<32x128xf32>
    %155 = vector.extract_strided_slice %142 {offsets = [64, 0], sizes = [32, 128], strides = [1, 1]} : vector<128x128xf32> to vector<32x128xf32>
    %156 = math.tanh %155 : vector<32x128xf32>
    %157 = vector.extract_strided_slice %142 {offsets = [96, 0], sizes = [32, 128], strides = [1, 1]} : vector<128x128xf32> to vector<32x128xf32>
    %158 = arith.negf %157 : vector<32x128xf32>
    %159 = math.exp %158 : vector<32x128xf32>
    %cst_27 = arith.constant 1.000000e+00 : f32
    %160 = vector.broadcast %cst_27 : f32 to vector<32x128xf32>
    %161 = arith.addf %160, %159 : vector<32x128xf32>
    %162 = arith.divf %160, %161 : vector<32x128xf32>
    %163 = arith.mulf %154, %133 : vector<32x128xf32>
    %164 = arith.mulf %148, %156 : vector<32x128xf32>
    %165 = arith.addf %163, %164 : vector<32x128xf32>
    %166 = math.tanh %165 : vector<32x128xf32>
    %167 = arith.mulf %162, %166 : vector<32x128xf32>
    %168 = vector.extract_strided_slice %0 {offsets = [5, 0], sizes = [1, 128], strides = [1, 1]} : vector<8x128xf32> to vector<1x128xf32>
    %169 = vector.broadcast %168 : vector<1x128xf32> to vector<128x128xf32>
    %170 = vector.broadcast %1 : vector<128x1xf32> to vector<128x128xf32>
    %171 = arith.mulf %169, %170 : vector<128x128xf32>
    %172 = arith.addf %171, %5 : vector<128x128xf32>
    %cst_28 = arith.constant dense<0.000000e+00> : vector<128x128xf32>
    %173 = tpu.matmul %2, %167, %cst_28 {dimension_numbers = #tpu.dot_dimension_numbers<[1], [0], [0], [1], [0, 0, 1, 1], [], []>} : vector<128x32xf32>, vector<32x128xf32>, vector<128x128xf32> -> vector<128x128xf32>
    %174 = arith.addf %172, %173 : vector<128x128xf32>
    %175 = vector.extract_strided_slice %174 {offsets = [0, 0], sizes = [32, 128], strides = [1, 1]} : vector<128x128xf32> to vector<32x128xf32>
    %176 = arith.negf %175 : vector<32x128xf32>
    %177 = math.exp %176 : vector<32x128xf32>
    %cst_29 = arith.constant 1.000000e+00 : f32
    %178 = vector.broadcast %cst_29 : f32 to vector<32x128xf32>
    %179 = arith.addf %178, %177 : vector<32x128xf32>
    %180 = arith.divf %178, %179 : vector<32x128xf32>
    %181 = vector.extract_strided_slice %174 {offsets = [32, 0], sizes = [32, 128], strides = [1, 1]} : vector<128x128xf32> to vector<32x128xf32>
    %182 = arith.negf %181 : vector<32x128xf32>
    %183 = math.exp %182 : vector<32x128xf32>
    %cst_30 = arith.constant 1.000000e+00 : f32
    %184 = vector.broadcast %cst_30 : f32 to vector<32x128xf32>
    %185 = arith.addf %184, %183 : vector<32x128xf32>
    %186 = arith.divf %184, %185 : vector<32x128xf32>
    %187 = vector.extract_strided_slice %174 {offsets = [64, 0], sizes = [32, 128], strides = [1, 1]} : vector<128x128xf32> to vector<32x128xf32>
    %188 = math.tanh %187 : vector<32x128xf32>
    %189 = vector.extract_strided_slice %174 {offsets = [96, 0], sizes = [32, 128], strides = [1, 1]} : vector<128x128xf32> to vector<32x128xf32>
    %190 = arith.negf %189 : vector<32x128xf32>
    %191 = math.exp %190 : vector<32x128xf32>
    %cst_31 = arith.constant 1.000000e+00 : f32
    %192 = vector.broadcast %cst_31 : f32 to vector<32x128xf32>
    %193 = arith.addf %192, %191 : vector<32x128xf32>
    %194 = arith.divf %192, %193 : vector<32x128xf32>
    %195 = arith.mulf %186, %165 : vector<32x128xf32>
    %196 = arith.mulf %180, %188 : vector<32x128xf32>
    %197 = arith.addf %195, %196 : vector<32x128xf32>
    %198 = math.tanh %197 : vector<32x128xf32>
    %199 = arith.mulf %194, %198 : vector<32x128xf32>
    %200 = vector.extract_strided_slice %0 {offsets = [6, 0], sizes = [1, 128], strides = [1, 1]} : vector<8x128xf32> to vector<1x128xf32>
    %201 = vector.broadcast %200 : vector<1x128xf32> to vector<128x128xf32>
    %202 = vector.broadcast %1 : vector<128x1xf32> to vector<128x128xf32>
    %203 = arith.mulf %201, %202 : vector<128x128xf32>
    %204 = arith.addf %203, %5 : vector<128x128xf32>
    %cst_32 = arith.constant dense<0.000000e+00> : vector<128x128xf32>
    %205 = tpu.matmul %2, %199, %cst_32 {dimension_numbers = #tpu.dot_dimension_numbers<[1], [0], [0], [1], [0, 0, 1, 1], [], []>} : vector<128x32xf32>, vector<32x128xf32>, vector<128x128xf32> -> vector<128x128xf32>
    %206 = arith.addf %204, %205 : vector<128x128xf32>
    %207 = vector.extract_strided_slice %206 {offsets = [0, 0], sizes = [32, 128], strides = [1, 1]} : vector<128x128xf32> to vector<32x128xf32>
    %208 = arith.negf %207 : vector<32x128xf32>
    %209 = math.exp %208 : vector<32x128xf32>
    %cst_33 = arith.constant 1.000000e+00 : f32
    %210 = vector.broadcast %cst_33 : f32 to vector<32x128xf32>
    %211 = arith.addf %210, %209 : vector<32x128xf32>
    %212 = arith.divf %210, %211 : vector<32x128xf32>
    %213 = vector.extract_strided_slice %206 {offsets = [32, 0], sizes = [32, 128], strides = [1, 1]} : vector<128x128xf32> to vector<32x128xf32>
    %214 = arith.negf %213 : vector<32x128xf32>
    %215 = math.exp %214 : vector<32x128xf32>
    %cst_34 = arith.constant 1.000000e+00 : f32
    %216 = vector.broadcast %cst_34 : f32 to vector<32x128xf32>
    %217 = arith.addf %216, %215 : vector<32x128xf32>
    %218 = arith.divf %216, %217 : vector<32x128xf32>
    %219 = vector.extract_strided_slice %206 {offsets = [64, 0], sizes = [32, 128], strides = [1, 1]} : vector<128x128xf32> to vector<32x128xf32>
    %220 = math.tanh %219 : vector<32x128xf32>
    %221 = vector.extract_strided_slice %206 {offsets = [96, 0], sizes = [32, 128], strides = [1, 1]} : vector<128x128xf32> to vector<32x128xf32>
    %222 = arith.negf %221 : vector<32x128xf32>
    %223 = math.exp %222 : vector<32x128xf32>
    %cst_35 = arith.constant 1.000000e+00 : f32
    %224 = vector.broadcast %cst_35 : f32 to vector<32x128xf32>
    %225 = arith.addf %224, %223 : vector<32x128xf32>
    %226 = arith.divf %224, %225 : vector<32x128xf32>
    %227 = arith.mulf %218, %197 : vector<32x128xf32>
    %228 = arith.mulf %212, %220 : vector<32x128xf32>
    %229 = arith.addf %227, %228 : vector<32x128xf32>
    %230 = math.tanh %229 : vector<32x128xf32>
    %231 = arith.mulf %226, %230 : vector<32x128xf32>
    %232 = vector.extract_strided_slice %0 {offsets = [7, 0], sizes = [1, 128], strides = [1, 1]} : vector<8x128xf32> to vector<1x128xf32>
    %233 = vector.broadcast %232 : vector<1x128xf32> to vector<128x128xf32>
    %234 = vector.broadcast %1 : vector<128x1xf32> to vector<128x128xf32>
    %235 = arith.mulf %233, %234 : vector<128x128xf32>
    %236 = arith.addf %235, %5 : vector<128x128xf32>
    %cst_36 = arith.constant dense<0.000000e+00> : vector<128x128xf32>
    %237 = tpu.matmul %2, %231, %cst_36 {dimension_numbers = #tpu.dot_dimension_numbers<[1], [0], [0], [1], [0, 0, 1, 1], [], []>} : vector<128x32xf32>, vector<32x128xf32>, vector<128x128xf32> -> vector<128x128xf32>
    %238 = arith.addf %236, %237 : vector<128x128xf32>
    %239 = vector.extract_strided_slice %238 {offsets = [0, 0], sizes = [32, 128], strides = [1, 1]} : vector<128x128xf32> to vector<32x128xf32>
    %240 = arith.negf %239 : vector<32x128xf32>
    %241 = math.exp %240 : vector<32x128xf32>
    %cst_37 = arith.constant 1.000000e+00 : f32
    %242 = vector.broadcast %cst_37 : f32 to vector<32x128xf32>
    %243 = arith.addf %242, %241 : vector<32x128xf32>
    %244 = arith.divf %242, %243 : vector<32x128xf32>
    %245 = vector.extract_strided_slice %238 {offsets = [32, 0], sizes = [32, 128], strides = [1, 1]} : vector<128x128xf32> to vector<32x128xf32>
    %246 = arith.negf %245 : vector<32x128xf32>
    %247 = math.exp %246 : vector<32x128xf32>
    %cst_38 = arith.constant 1.000000e+00 : f32
    %248 = vector.broadcast %cst_38 : f32 to vector<32x128xf32>
    %249 = arith.addf %248, %247 : vector<32x128xf32>
    %250 = arith.divf %248, %249 : vector<32x128xf32>
    %251 = vector.extract_strided_slice %238 {offsets = [64, 0], sizes = [32, 128], strides = [1, 1]} : vector<128x128xf32> to vector<32x128xf32>
    %252 = math.tanh %251 : vector<32x128xf32>
    %253 = vector.extract_strided_slice %238 {offsets = [96, 0], sizes = [32, 128], strides = [1, 1]} : vector<128x128xf32> to vector<32x128xf32>
    %254 = arith.negf %253 : vector<32x128xf32>
    %255 = math.exp %254 : vector<32x128xf32>
    %cst_39 = arith.constant 1.000000e+00 : f32
    %256 = vector.broadcast %cst_39 : f32 to vector<32x128xf32>
    %257 = arith.addf %256, %255 : vector<32x128xf32>
    %258 = arith.divf %256, %257 : vector<32x128xf32>
    %259 = arith.mulf %250, %229 : vector<32x128xf32>
    %260 = arith.mulf %244, %252 : vector<32x128xf32>
    %261 = arith.addf %259, %260 : vector<32x128xf32>
    %262 = math.tanh %261 : vector<32x128xf32>
    %263 = arith.mulf %258, %262 : vector<32x128xf32>
    %c0_40 = arith.constant 0 : index
    %c0_41 = arith.constant 0 : index
    %264 = vector.load %arg5[%c0_40, %c0_41] : memref<8x32xf32, #tpu.memory_space<vmem>>, vector<8x32xf32>
    %cst_42 = arith.constant dense<0.000000e+00> : vector<8x128xf32>
    %265 = tpu.matmul %264, %263, %cst_42 {dimension_numbers = #tpu.dot_dimension_numbers<[1], [0], [0], [1], [0, 0, 1, 1], [], []>} : vector<8x32xf32>, vector<32x128xf32>, vector<8x128xf32> -> vector<8x128xf32>
    %c0_43 = arith.constant 0 : index
    %c0_44 = arith.constant 0 : index
    %266 = vector.load %arg6[%c0_43, %c0_44] : memref<8x1xf32, #tpu.memory_space<vmem>>, vector<8x1xf32>
    %267 = vector.broadcast %266 : vector<8x1xf32> to vector<8x128xf32>
    %268 = arith.addf %265, %267 : vector<8x128xf32>
    %c0_45 = arith.constant 0 : index
    %c0_46 = arith.constant 0 : index
    %269 = vector.load %arg7[%c0_45, %c0_46] : memref<8x128xf32, #tpu.memory_space<vmem>>, vector<8x128xf32>
    tpu.vector_store %arg7[%c0_45, %c0_46], %268 {strides = array<i32>} : memref<8x128xf32, #tpu.memory_space<vmem>>, vector<8x128xf32>,
    return
  }
  func.func @transform_0(%arg0: i32) -> (i32, i32) {
    %c0_i32 = arith.constant 0 : i32
    %c0_i32_0 = arith.constant 0 : i32
    return %c0_i32, %arg0 : i32, i32
  }
  func.func @transform_1(%arg0: i32) -> (i32, i32) {
    %c0_i32 = arith.constant 0 : i32
    %c0_i32_0 = arith.constant 0 : i32
    %c0_i32_1 = arith.constant 0 : i32
    return %c0_i32, %c0_i32_0 : i32, i32
  }
  func.func @transform_2(%arg0: i32) -> (i32, i32) {
    %c0_i32 = arith.constant 0 : i32
    %c0_i32_0 = arith.constant 0 : i32
    %c0_i32_1 = arith.constant 0 : i32
    return %c0_i32, %c0_i32_0 : i32, i32
  }
  func.func @transform_3(%arg0: i32) -> (i32, i32) {
    %c0_i32 = arith.constant 0 : i32
    %c0_i32_0 = arith.constant 0 : i32
    %c0_i32_1 = arith.constant 0 : i32
    return %c0_i32, %c0_i32_0 : i32, i32
  }
  func.func @transform_4(%arg0: i32) -> (i32, i32) {
    %c0_i32 = arith.constant 0 : i32
    %c0_i32_0 = arith.constant 0 : i32
    %c0_i32_1 = arith.constant 0 : i32
    return %c0_i32, %c0_i32_0 : i32, i32
  }
  func.func @transform_5(%arg0: i32) -> (i32, i32) {
    %c0_i32 = arith.constant 0 : i32
    %c0_i32_0 = arith.constant 0 : i32
    %c0_i32_1 = arith.constant 0 : i32
    return %c0_i32, %c0_i32_0 : i32, i32
  }
  func.func @transform_6(%arg0: i32) -> (i32, i32) {
    %c0_i32 = arith.constant 0 : i32
    %c0_i32_0 = arith.constant 0 : i32
    return %c0_i32, %arg0 : i32, i32
  }
}

</mosaic_0001>

<llo_original>
// kernel: tpu_custom_call.1
$region0: #{tpu_custom_call.1}
  #allocation0 [shape = 'u32[]', space=smem, size = 0x4, offset = 0x4, fixed_abs, tag = 'smem constant byte address 0x4 - core index']
  #allocation1 [shape = 'u32[72,128]{1,0:T(1,128)}', space=vmem, size = 0x9000, scoped, tag = 'internal scratch']
  %s0 = inlined_call_operand.vmem [shape: f32[8,128], index: 0, kind: input, shape index: {}]
  %s1 = inlined_call_operand.vmem [shape: f32[128,1], index: 1, kind: input, shape index: {}]
  %s2 = inlined_call_operand.vmem [shape: f32[128,1], index: 2, kind: input, shape index: {}]
  %s3 = inlined_call_operand.vmem [shape: f32[128,32], index: 3, kind: input, shape index: {}]
  %s4 = inlined_call_operand.vmem [shape: f32[8,32], index: 4, kind: input, shape index: {}]
  %s5 = inlined_call_operand.vmem [shape: f32[8,1], index: 5, kind: input, shape index: {}]
  %s6 = inlined_call_operand.hbm [shape: f32[8,128], index: 6, kind: output, shape index: {}]
  %s7 = sld [smem:[#allocation0]]
  $region34: #{tpu_custom_call.1} parent=0
    _
  %s9 = ssub.s32 1, %s7
  %s10 = scalar_select 0, %s9, %s7
  $region1: #{tpu_custom_call.1} parent=0
    #allocation2 [shape = 'u8[4096]{0}', space=vmem, size = 0x1000, scoped, tag = 'output window, operand 0, single buffered']
    #allocation3 [shape = 's32[1]{0}', space=sflag, size = 0x4, scoped, tag = 'scoped memory for tpu_custom_call.1']
    %11 = vsyncpa [#allocation3], 0
    // Predicated region
    $region2: #{tpu_custom_call.1} parent=1 // pred_check
      _
    $region3: #{tpu_custom_call.1} parent=1 // pred_check_branch
      %13 = sbr.rel (0) target = $region5
    $region4: #{tpu_custom_call.1} parent=1 // pred_region
      _
    $region5: #{tpu_custom_call.1} parent=1 // pred_fallthru
      _
    // Predicated region
    $region6: #{tpu_custom_call.1} parent=1 // pred_check
      _
    $region7: #{tpu_custom_call.1} parent=1 // pred_check_branch
      %15 = sbr.rel (0) target = $region9
    $region8: #{tpu_custom_call.1} parent=1 // pred_region
      _
    $region9: #{tpu_custom_call.1} parent=1 // pred_fallthru
      _
    // Predicated region
    $region10: #{tpu_custom_call.1} parent=1 // pred_check
      _
    $region11: #{tpu_custom_call.1} parent=1 // pred_check_branch
      %17 = sbr.rel (0) target = $region13
    $region12: #{tpu_custom_call.1} parent=1 // pred_region
      _
    $region13: #{tpu_custom_call.1} parent=1 // pred_fallthru
      _
    // Predicated region
    $region14: #{tpu_custom_call.1} parent=1 // pred_check
      _
    $region15: #{tpu_custom_call.1} parent=1 // pred_check_branch
      %19 = sbr.rel (0) target = $region17
    $region16: #{tpu_custom_call.1} parent=1 // pred_region
      _
    $region17: #{tpu_custom_call.1} parent=1 // pred_fallthru
      _
    // Predicated region
    $region18: #{tpu_custom_call.1} parent=1 // pred_check
      _
    $region19: #{tpu_custom_call.1} parent=1 // pred_check_branch
      %21 = sbr.rel (0) target = $region21
    $region20: #{tpu_custom_call.1} parent=1 // pred_region
      _
    $region21: #{tpu_custom_call.1} parent=1 // pred_fallthru
      _
    // Predicated region
    $region22: #{tpu_custom_call.1} parent=1 // pred_check
      _
    $region23: #{tpu_custom_call.1} parent=1 // pred_check_branch
      %23 = sbr.rel (0) target = $region25
    $region24: #{tpu_custom_call.1} parent=1 // pred_region
      _
    $region25: #{tpu_custom_call.1} parent=1 // pred_fallthru
      _
    %v24 = vld [vmem:[%s0] sm:$0xff]
    %v25 = vld [vmem:[%s1] sm:$0xff]
    %v26 = vld [vmem:[%s1 + $0x8] sm:$0xff]
    %v27 = vld [vmem:[%s1 + $0x10] sm:$0xff]
    %v28 = vld [vmem:[%s1 + $0x18] sm:$0xff]
    %v29 = vld [vmem:[%s1 + $0x20] sm:$0xff]
    %v30 = vld [vmem:[%s1 + $0x28] sm:$0xff]
    %v31 = vld [vmem:[%s1 + $0x30] sm:$0xff]
    %v32 = vld [vmem:[%s1 + $0x38] sm:$0xff]
    %v33 = vld [vmem:[%s1 + $0x40] sm:$0xff]
    %v34 = vld [vmem:[%s1 + $0x48] sm:$0xff]
    %v35 = vld [vmem:[%s1 + $0x50] sm:$0xff]
    %v36 = vld [vmem:[%s1 + $0x58] sm:$0xff]
    %v37 = vld [vmem:[%s1 + $0x60] sm:$0xff]
    %v38 = vld [vmem:[%s1 + $0x68] sm:$0xff]
    %v39 = vld [vmem:[%s1 + $0x70] sm:$0xff]
    %v40 = vld [vmem:[%s1 + $0x78] sm:$0xff]
    %v41 = vld [vmem:[%s3] sm:$0xff]
    %v42 = vld [vmem:[%s3 + $0x8] sm:$0xff]
    %v43 = vld [vmem:[%s3 + $0x10] sm:$0xff]
    %v44 = vld [vmem:[%s3 + $0x18] sm:$0xff]
    %v45 = vld [vmem:[%s3 + $0x20] sm:$0xff]
    %v46 = vld [vmem:[%s3 + $0x28] sm:$0xff]
    %v47 = vld [vmem:[%s3 + $0x30] sm:$0xff]
    %v48 = vld [vmem:[%s3 + $0x38] sm:$0xff]
    %v49 = vld [vmem:[%s3 + $0x40] sm:$0xff]
    %v50 = vld [vmem:[%s3 + $0x48] sm:$0xff]
    %v51 = vld [vmem:[%s3 + $0x50] sm:$0xff]
    %v52 = vld [vmem:[%s3 + $0x58] sm:$0xff]
    %v53 = vld [vmem:[%s3 + $0x60] sm:$0xff]
    %v54 = vld [vmem:[%s3 + $0x68] sm:$0xff]
    %v55 = vld [vmem:[%s3 + $0x70] sm:$0xff]
    %v56 = vld [vmem:[%s3 + $0x78] sm:$0xff]
    %v57 = vld [vmem:[%s2] sm:$0xff]
    %v58 = vld [vmem:[%s2 + $0x8] sm:$0xff]
    %v59 = vld [vmem:[%s2 + $0x10] sm:$0xff]
    %v60 = vld [vmem:[%s2 + $0x18] sm:$0xff]
    %v61 = vld [vmem:[%s2 + $0x20] sm:$0xff]
    %v62 = vld [vmem:[%s2 + $0x28] sm:$0xff]
    %v63 = vld [vmem:[%s2 + $0x30] sm:$0xff]
    %v64 = vld [vmem:[%s2 + $0x38] sm:$0xff]
    %v65 = vld [vmem:[%s2 + $0x40] sm:$0xff]
    %v66 = vld [vmem:[%s2 + $0x48] sm:$0xff]
    %v67 = vld [vmem:[%s2 + $0x50] sm:$0xff]
    %v68 = vld [vmem:[%s2 + $0x58] sm:$0xff]
    %v69 = vld [vmem:[%s2 + $0x60] sm:$0xff]
    %v70 = vld [vmem:[%s2 + $0x68] sm:$0xff]
    %v71 = vld [vmem:[%s2 + $0x70] sm:$0xff]
    %v72 = vld [vmem:[%s2 + $0x78] sm:$0xff]
    %74 = vset.pattern.permute.xlu0 0
    %75 = vperm.xlu0 %74, %v57
    %v76 = vpop.permute.xlu0 %75
    %79 = vset.pattern.permute.xlu0 0
    %80 = vperm.xlu0 %79, %v58
    %v81 = vpop.permute.xlu0 %80
    %84 = vset.pattern.permute.xlu0 0
    %85 = vperm.xlu0 %84, %v59
    %v86 = vpop.permute.xlu0 %85
    %89 = vset.pattern.permute.xlu0 0
    %90 = vperm.xlu0 %89, %v60
    %v91 = vpop.permute.xlu0 %90
    %94 = vset.pattern.permute.xlu0 0
    %95 = vperm.xlu0 %94, %v61
    %v96 = vpop.permute.xlu0 %95
    %99 = vset.pattern.permute.xlu0 0
    %100 = vperm.xlu0 %99, %v62
    %v101 = vpop.permute.xlu0 %100
    %104 = vset.pattern.permute.xlu0 0
    %105 = vperm.xlu0 %104, %v63
    %v106 = vpop.permute.xlu0 %105
    %109 = vset.pattern.permute.xlu0 0
    %110 = vperm.xlu0 %109, %v64
    %v111 = vpop.permute.xlu0 %110
    %114 = vset.pattern.permute.xlu0 0
    %115 = vperm.xlu0 %114, %v65
    %v116 = vpop.permute.xlu0 %115
    %119 = vset.pattern.permute.xlu0 0
    %120 = vperm.xlu0 %119, %v66
    %v121 = vpop.permute.xlu0 %120
    %124 = vset.pattern.permute.xlu0 0
    %125 = vperm.xlu0 %124, %v67
    %v126 = vpop.permute.xlu0 %125
    %129 = vset.pattern.permute.xlu0 0
    %130 = vperm.xlu0 %129, %v68
    %v131 = vpop.permute.xlu0 %130
    %134 = vset.pattern.permute.xlu0 0
    %135 = vperm.xlu0 %134, %v69
    %v136 = vpop.permute.xlu0 %135
    %139 = vset.pattern.permute.xlu0 0
    %140 = vperm.xlu0 %139, %v70
    %v141 = vpop.permute.xlu0 %140
    %144 = vset.pattern.permute.xlu0 0
    %145 = vperm.xlu0 %144, %v71
    %v146 = vpop.permute.xlu0 %145
    %149 = vset.pattern.permute.xlu0 0
    %150 = vperm.xlu0 %149, %v72
    %v151 = vpop.permute.xlu0 %150
    %v153 = vperm.slane %v24, 0
    %155 = vset.pattern.permute.xlu0 0
    %156 = vperm.xlu0 %155, %v25
    %v157 = vpop.permute.xlu0 %156
    %160 = vset.pattern.permute.xlu0 0
    %161 = vperm.xlu0 %160, %v26
    %v162 = vpop.permute.xlu0 %161
    %165 = vset.pattern.permute.xlu0 0
    %166 = vperm.xlu0 %165, %v27
    %v167 = vpop.permute.xlu0 %166
    %170 = vset.pattern.permute.xlu0 0
    %171 = vperm.xlu0 %170, %v28
    %v172 = vpop.permute.xlu0 %171
    %175 = vset.pattern.permute.xlu0 0
    %176 = vperm.xlu0 %175, %v29
    %v177 = vpop.permute.xlu0 %176
    %180 = vset.pattern.permute.xlu0 0
    %181 = vperm.xlu0 %180, %v30
    %v182 = vpop.permute.xlu0 %181
    %185 = vset.pattern.permute.xlu0 0
    %186 = vperm.xlu0 %185, %v31
    %v187 = vpop.permute.xlu0 %186
    %190 = vset.pattern.permute.xlu0 0
    %191 = vperm.xlu0 %190, %v32
    %v192 = vpop.permute.xlu0 %191
    %195 = vset.pattern.permute.xlu0 0
    %196 = vperm.xlu0 %195, %v33
    %v197 = vpop.permute.xlu0 %196
    %200 = vset.pattern.permute.xlu0 0
    %201 = vperm.xlu0 %200, %v34
    %v202 = vpop.permute.xlu0 %201
    %205 = vset.pattern.permute.xlu0 0
    %206 = vperm.xlu0 %205, %v35
    %v207 = vpop.permute.xlu0 %206
    %210 = vset.pattern.permute.xlu0 0
    %211 = vperm.xlu0 %210, %v36
    %v212 = vpop.permute.xlu0 %211
    %215 = vset.pattern.permute.xlu0 0
    %216 = vperm.xlu0 %215, %v37
    %v217 = vpop.permute.xlu0 %216
    %220 = vset.pattern.permute.xlu0 0
    %221 = vperm.xlu0 %220, %v38
    %v222 = vpop.permute.xlu0 %221
    %225 = vset.pattern.permute.xlu0 0
    %226 = vperm.xlu0 %225, %v39
    %v227 = vpop.permute.xlu0 %226
    %230 = vset.pattern.permute.xlu0 0
    %231 = vperm.xlu0 %230, %v40
    %v232 = vpop.permute.xlu0 %231
    %v234 = vmul.f32 %v153, %v157
    %v235 = vmul.f32 %v153, %v162
    %v236 = vmul.f32 %v153, %v167
    %v237 = vmul.f32 %v153, %v172
    %v238 = vmul.f32 %v153, %v177
    %v239 = vmul.f32 %v153, %v182
    %v240 = vmul.f32 %v153, %v187
    %v241 = vmul.f32 %v153, %v192
    %v242 = vmul.f32 %v153, %v197
    %v243 = vmul.f32 %v153, %v202
    %v244 = vmul.f32 %v153, %v207
    %v245 = vmul.f32 %v153, %v212
    %v246 = vmul.f32 %v153, %v217
    %v247 = vmul.f32 %v153, %v222
    %v248 = vmul.f32 %v153, %v227
    %v249 = vmul.f32 %v153, %v232
    %v250 = vadd.f32 %v234, %v76
    %v251 = vadd.f32 %v235, %v81
    %v252 = vadd.f32 %v236, %v86
    %v253 = vadd.f32 %v237, %v91
    %v254 = vadd.f32 %v238, %v96
    %v255 = vadd.f32 %v239, %v101
    %v256 = vadd.f32 %v240, %v106
    %v257 = vadd.f32 %v241, %v111
    %v258 = vadd.f32 %v242, %v116
    %v259 = vadd.f32 %v243, %v121
    %v260 = vadd.f32 %v244, %v126
    %v261 = vadd.f32 %v245, %v131
    %v262 = vadd.f32 %v246, %v136
    %v263 = vadd.f32 %v247, %v141
    %v264 = vadd.f32 %v248, %v146
    %v265 = vadd.f32 %v249, %v151
    %vm266 = vcmask 261120
    %v268 = vsel %vm266, %v41, 0
    %v271 = vsel %vm266, %v42, 0
    %v274 = vsel %vm266, %v43, 0
    %v277 = vsel %vm266, %v44, 0
    %v280 = vsel %vm266, %v45, 0
    %v283 = vsel %vm266, %v46, 0
    %v286 = vsel %vm266, %v47, 0
    %v289 = vsel %vm266, %v48, 0
    %v292 = vsel %vm266, %v49, 0
    %v295 = vsel %vm266, %v50, 0
    %v298 = vsel %vm266, %v51, 0
    %v301 = vsel %vm266, %v52, 0
    %v304 = vsel %vm266, %v53, 0
    %v307 = vsel %vm266, %v54, 0
    %v310 = vsel %vm266, %v55, 0
    %v313 = vsel %vm266, %v56, 0
    %315 = vmatpush.msra.mxu0 0.0
    %316 = vmatpush.msra.mxu0 0.0
    %317 = vmatpush.msra.mxu0 0.0
    %318 = vmatpush.msra.mxu0 0.0
    %319 = vmatpush.msra.mxu0 0.0
    %320 = vmatpush.msra.mxu0 0.0
    %321 = vmatpush.msra.mxu0 0.0
    %322 = vmatpush.msra.mxu0 0.0
    %323 = vmatpush.msra.mxu0 0.0
    %324 = vmatpush.msra.mxu0 0.0
    %325 = vmatpush.msra.mxu0 0.0
    %326 = vmatpush.msra.mxu0 0.0
    %327 = vmatpush.msra.mxu0 0.0
    %328 = vmatpush.msra.mxu0 0.0
    %329 = vmatpush.msra.mxu0 0.0
    %330 = vmatpush.msra.mxu0 0.0
    %331 = vmatmul.f32.gmra.mxu0 %v268
    %v332 = vpop.f32.mrf.mxu0
    %v333 = vadd.f32 0.0, %v332
    %334 = vmatmul.f32.gmra.mxu0 %v271
    %v335 = vpop.f32.mrf.mxu0
    %v336 = vadd.f32 0.0, %v335
    %337 = vmatmul.f32.gmra.mxu0 %v274
    %v338 = vpop.f32.mrf.mxu0
    %v339 = vadd.f32 0.0, %v338
    %340 = vmatmul.f32.gmra.mxu0 %v277
    %v341 = vpop.f32.mrf.mxu0
    %v342 = vadd.f32 0.0, %v341
    %343 = vmatmul.f32.gmra.mxu0 %v280
    %v344 = vpop.f32.mrf.mxu0
    %v345 = vadd.f32 0.0, %v344
    %346 = vmatmul.f32.gmra.mxu0 %v283
    %v347 = vpop.f32.mrf.mxu0
    %v348 = vadd.f32 0.0, %v347
    %349 = vmatmul.f32.gmra.mxu0 %v286
    %v350 = vpop.f32.mrf.mxu0
    %v351 = vadd.f32 0.0, %v350
    %352 = vmatmul.f32.gmra.mxu0 %v289
    %v353 = vpop.f32.mrf.mxu0
    %v354 = vadd.f32 0.0, %v353
    %355 = vmatmul.f32.gmra.mxu0 %v292
    %v356 = vpop.f32.mrf.mxu0
    %v357 = vadd.f32 0.0, %v356
    %358 = vmatmul.f32.gmra.mxu0 %v295
    %v359 = vpop.f32.mrf.mxu0
    %v360 = vadd.f32 0.0, %v359
    %361 = vmatmul.f32.gmra.mxu0 %v298
    %v362 = vpop.f32.mrf.mxu0
    %v363 = vadd.f32 0.0, %v362
    %364 = vmatmul.f32.gmra.mxu0 %v301
    %v365 = vpop.f32.mrf.mxu0
    %v366 = vadd.f32 0.0, %v365
    %367 = vmatmul.f32.gmra.mxu0 %v304
    %v368 = vpop.f32.mrf.mxu0
    %v369 = vadd.f32 0.0, %v368
    %370 = vmatmul.f32.gmra.mxu0 %v307
    %v371 = vpop.f32.mrf.mxu0
    %v372 = vadd.f32 0.0, %v371
    %373 = vmatmul.f32.gmra.mxu0 %v310
    %v374 = vpop.f32.mrf.mxu0
    %v375 = vadd.f32 0.0, %v374
    %376 = vmatmul.f32.gmra.mxu0 %v313
    %v377 = vpop.f32.mrf.mxu0
    %v378 = vadd.f32 0.0, %v377
    %379 = vdwg.mxu0
    %v380 = vadd.f32 %v250, %v333
    %v381 = vadd.f32 %v251, %v336
    %v382 = vadd.f32 %v252, %v339
    %v383 = vadd.f32 %v253, %v342
    %v384 = vadd.f32 %v254, %v345
    %v385 = vadd.f32 %v255, %v348
    %v386 = vadd.f32 %v256, %v351
    %v387 = vadd.f32 %v257, %v354
    %v388 = vadd.f32 %v258, %v357
    %v389 = vadd.f32 %v259, %v360
    %v390 = vadd.f32 %v260, %v363
    %v391 = vadd.f32 %v261, %v366
    %v392 = vadd.f32 %v262, %v369
    %v393 = vadd.f32 %v263, %v372
    %v394 = vadd.f32 %v264, %v375
    %v395 = vadd.f32 %v265, %v378
    %v396 = vxor.u32 %v380, 2147483648
    %v397 = vxor.u32 %v381, 2147483648
    %v398 = vxor.u32 %v382, 2147483648
    %v399 = vxor.u32 %v383, 2147483648
    %v400 = vmul.f32 %v396, 1.442695
    %v401 = vpow.pop %v400
    %v402 = vmul.f32 %v397, 1.442695
    %v403 = vpow.pop %v402
    %v404 = vmul.f32 %v398, 1.442695
    %v405 = vpow.pop %v404
    %v406 = vmul.f32 %v399, 1.442695
    %v407 = vpow.pop %v406
    %v408 = vadd.f32 %v401, 1.0
    %v409 = vadd.f32 %v403, 1.0
    %v410 = vadd.f32 %v405, 1.0
    %v411 = vadd.f32 %v407, 1.0
    %v412 = vrcp.pop %v408
    %v413 = vmul.f32 %v408, %v412
    %v414 = vsub.f32 1.0, %v413
    %v415 = vmul.f32 %v412, %v414
    %v416 = vadd.f32 %v412, %v415
    %vm417 = vweird.f32 %v408
    %vm418 = vweird.f32 %v412
    %vm419 = vmor %vm417, %vm418
    %v420 = vsel %vm419, %v412, %v416
    %v421 = vand.u32 2147483647, %v408
    %vm422 = vcmp.eq.f32.partialorder %v421, 8.507059e+37
    %v423 = vand.u32 %v408, 2147483648
    %v424 = vor.u32 1.1754944e-38, %v423
    %v425 = vsel %vm422, %v424, %v420
    %v426 = vmul.f32 1.0, %v425
    %v427 = vrcp.pop %v409
    %v428 = vmul.f32 %v409, %v427
    %v429 = vsub.f32 1.0, %v428
    %v430 = vmul.f32 %v427, %v429
    %v431 = vadd.f32 %v427, %v430
    %vm432 = vweird.f32 %v409
    %vm433 = vweird.f32 %v427
    %vm434 = vmor %vm432, %vm433
    %v435 = vsel %vm434, %v427, %v431
    %v436 = vand.u32 2147483647, %v409
    %vm437 = vcmp.eq.f32.partialorder %v436, 8.507059e+37
    %v438 = vand.u32 %v409, 2147483648
    %v439 = vor.u32 1.1754944e-38, %v438
    %v440 = vsel %vm437, %v439, %v435
    %v441 = vmul.f32 1.0, %v440
    %v442 = vrcp.pop %v410
    %v443 = vmul.f32 %v410, %v442
    %v444 = vsub.f32 1.0, %v443
    %v445 = vmul.f32 %v442, %v444
    %v446 = vadd.f32 %v442, %v445
    %vm447 = vweird.f32 %v410
    %vm448 = vweird.f32 %v442
    %vm449 = vmor %vm447, %vm448
    %v450 = vsel %vm449, %v442, %v446
    %v451 = vand.u32 2147483647, %v410
    %vm452 = vcmp.eq.f32.partialorder %v451, 8.507059e+37
    %v453 = vand.u32 %v410, 2147483648
    %v454 = vor.u32 1.1754944e-38, %v453
    %v455 = vsel %vm452, %v454, %v450
    %v456 = vmul.f32 1.0, %v455
    %v457 = vrcp.pop %v411
    %v458 = vmul.f32 %v411, %v457
    %v459 = vsub.f32 1.0, %v458
    %v460 = vmul.f32 %v457, %v459
    %v461 = vadd.f32 %v457, %v460
    %vm462 = vweird.f32 %v411
    %vm463 = vweird.f32 %v457
    %vm464 = vmor %vm462, %vm463
    %v465 = vsel %vm464, %v457, %v461
    %v466 = vand.u32 2147483647, %v411
    %vm467 = vcmp.eq.f32.partialorder %v466, 8.507059e+37
    %v468 = vand.u32 %v411, 2147483648
    %v469 = vor.u32 1.1754944e-38, %v468
    %v470 = vsel %vm467, %v469, %v465
    %v471 = vmul.f32 1.0, %v470
    %v472 = vxor.u32 %v384, 2147483648
    %v473 = vxor.u32 %v385, 2147483648
    %v474 = vxor.u32 %v386, 2147483648
    %v475 = vxor.u32 %v387, 2147483648
    %v476 = vmul.f32 %v472, 1.442695
    %v477 = vpow.pop %v476
    %v478 = vmul.f32 %v473, 1.442695
    %v479 = vpow.pop %v478
    %v480 = vmul.f32 %v474, 1.442695
    %v481 = vpow.pop %v480
    %v482 = vmul.f32 %v475, 1.442695
    %v483 = vpow.pop %v482
    %v484 = vadd.f32 %v477, 1.0
    %v485 = vadd.f32 %v479, 1.0
    %v486 = vadd.f32 %v481, 1.0
    %v487 = vadd.f32 %v483, 1.0
    %v488 = vrcp.pop %v484
    %v489 = vmul.f32 %v484, %v488
    %v490 = vsub.f32 1.0, %v489
    %v491 = vmul.f32 %v488, %v490
    %v492 = vadd.f32 %v488, %v491
    %vm493 = vweird.f32 %v484
    %vm494 = vweird.f32 %v488
    %vm495 = vmor %vm493, %vm494
    %v496 = vsel %vm495, %v488, %v492
    %v497 = vand.u32 2147483647, %v484
    %vm498 = vcmp.eq.f32.partialorder %v497, 8.507059e+37
    %v499 = vand.u32 %v484, 2147483648
    %v500 = vor.u32 1.1754944e-38, %v499
    %v501 = vsel %vm498, %v500, %v496
    %v502 = vmul.f32 1.0, %v501
    %v503 = vrcp.pop %v485
    %v504 = vmul.f32 %v485, %v503
    %v505 = vsub.f32 1.0, %v504
    %v506 = vmul.f32 %v503, %v505
    %v507 = vadd.f32 %v503, %v506
    %vm508 = vweird.f32 %v485
    %vm509 = vweird.f32 %v503
    %vm510 = vmor %vm508, %vm509
    %v511 = vsel %vm510, %v503, %v507
    %v512 = vand.u32 2147483647, %v485
    %vm513 = vcmp.eq.f32.partialorder %v512, 8.507059e+37
    %v514 = vand.u32 %v485, 2147483648
    %v515 = vor.u32 1.1754944e-38, %v514
    %v516 = vsel %vm513, %v515, %v511
    %v517 = vmul.f32 1.0, %v516
    %v518 = vrcp.pop %v486
    %v519 = vmul.f32 %v486, %v518
    %v520 = vsub.f32 1.0, %v519
    %v521 = vmul.f32 %v518, %v520
    %v522 = vadd.f32 %v518, %v521
    %vm523 = vweird.f32 %v486
    %vm524 = vweird.f32 %v518
    %vm525 = vmor %vm523, %vm524
    %v526 = vsel %vm525, %v518, %v522
    %v527 = vand.u32 2147483647, %v486
    %vm528 = vcmp.eq.f32.partialorder %v527, 8.507059e+37
    %v529 = vand.u32 %v486, 2147483648
    %v530 = vor.u32 1.1754944e-38, %v529
    %v531 = vsel %vm528, %v530, %v526
    %v532 = vmul.f32 1.0, %v531
    %v533 = vrcp.pop %v487
    %v534 = vmul.f32 %v487, %v533
    %v535 = vsub.f32 1.0, %v534
    %v536 = vmul.f32 %v533, %v535
    %v537 = vadd.f32 %v533, %v536
    %vm538 = vweird.f32 %v487
    %vm539 = vweird.f32 %v533
    %vm540 = vmor %vm538, %vm539
    %v541 = vsel %vm540, %v533, %v537
    %v542 = vand.u32 2147483647, %v487
    %vm543 = vcmp.eq.f32.partialorder %v542, 8.507059e+37
    %v544 = vand.u32 %v487, 2147483648
    %v545 = vor.u32 1.1754944e-38, %v544
    %v546 = vsel %vm543, %v545, %v541
    %v547 = vmul.f32 1.0, %v546
    %v548 = vtanh.pop %v388
    %v549 = vtanh.pop %v389
    %v550 = vtanh.pop %v390
    %v551 = vtanh.pop %v391
    %v552 = vxor.u32 %v392, 2147483648
    %v553 = vxor.u32 %v393, 2147483648
    %v554 = vxor.u32 %v394, 2147483648
    %v555 = vxor.u32 %v395, 2147483648
    %v556 = vmul.f32 %v552, 1.442695
    %v557 = vpow.pop %v556
    %v558 = vmul.f32 %v553, 1.442695
    %v559 = vpow.pop %v558
    %v560 = vmul.f32 %v554, 1.442695
    %v561 = vpow.pop %v560
    %v562 = vmul.f32 %v555, 1.442695
    %v563 = vpow.pop %v562
    %v564 = vadd.f32 %v557, 1.0
    %v565 = vadd.f32 %v559, 1.0
    %v566 = vadd.f32 %v561, 1.0
    %v567 = vadd.f32 %v563, 1.0
    %v568 = vrcp.pop %v564
    %v569 = vmul.f32 %v564, %v568
    %v570 = vsub.f32 1.0, %v569
    %v571 = vmul.f32 %v568, %v570
    %v572 = vadd.f32 %v568, %v571
    %vm573 = vweird.f32 %v564
    %vm574 = vweird.f32 %v568
    %vm575 = vmor %vm573, %vm574
    %v576 = vsel %vm575, %v568, %v572
    %v577 = vand.u32 2147483647, %v564
    %vm578 = vcmp.eq.f32.partialorder %v577, 8.507059e+37
    %v579 = vand.u32 %v564, 2147483648
    %v580 = vor.u32 1.1754944e-38, %v579
    %v581 = vsel %vm578, %v580, %v576
    %v582 = vmul.f32 1.0, %v581
    %v583 = vrcp.pop %v565
    %v584 = vmul.f32 %v565, %v583
    %v585 = vsub.f32 1.0, %v584
    %v586 = vmul.f32 %v583, %v585
    %v587 = vadd.f32 %v583, %v586
    %vm588 = vweird.f32 %v565
    %vm589 = vweird.f32 %v583
    %vm590 = vmor %vm588, %vm589
    %v591 = vsel %vm590, %v583, %v587
    %v592 = vand.u32 2147483647, %v565
    %vm593 = vcmp.eq.f32.partialorder %v592, 8.507059e+37
    %v594 = vand.u32 %v565, 2147483648
    %v595 = vor.u32 1.1754944e-38, %v594
    %v596 = vsel %vm593, %v595, %v591
    %v597 = vmul.f32 1.0, %v596
    %v598 = vrcp.pop %v566
    %v599 = vmul.f32 %v566, %v598
    %v600 = vsub.f32 1.0, %v599
    %v601 = vmul.f32 %v598, %v600
    %v602 = vadd.f32 %v598, %v601
    %vm603 = vweird.f32 %v566
    %vm604 = vweird.f32 %v598
    %vm605 = vmor %vm603, %vm604
    %v606 = vsel %vm605, %v598, %v602
    %v607 = vand.u32 2147483647, %v566
    %vm608 = vcmp.eq.f32.partialorder %v607, 8.507059e+37
    %v609 = vand.u32 %v566, 2147483648
    %v610 = vor.u32 1.1754944e-38, %v609
    %v611 = vsel %vm608, %v610, %v606
    %v612 = vmul.f32 1.0, %v611
    %v613 = vrcp.pop %v567
    %v614 = vmul.f32 %v567, %v613
    %v615 = vsub.f32 1.0, %v614
    %v616 = vmul.f32 %v613, %v615
    %v617 = vadd.f32 %v613, %v616
    %vm618 = vweird.f32 %v567
    %vm619 = vweird.f32 %v613
    %vm620 = vmor %vm618, %vm619
    %v621 = vsel %vm620, %v613, %v617
    %v622 = vand.u32 2147483647, %v567
    %vm623 = vcmp.eq.f32.partialorder %v622, 8.507059e+37
    %v624 = vand.u32 %v567, 2147483648
    %v625 = vor.u32 1.1754944e-38, %v624
    %v626 = vsel %vm623, %v625, %v621
    %v627 = vmul.f32 1.0, %v626
    %v628 = vmul.f32 %v502, 0.0
    %v629 = vmul.f32 %v517, 0.0
    %v630 = vmul.f32 %v532, 0.0
    %v631 = vmul.f32 %v547, 0.0
    %v632 = vmul.f32 %v426, %v548
    %v633 = vmul.f32 %v441, %v549
    %v634 = vmul.f32 %v456, %v550
    %v635 = vmul.f32 %v471, %v551
    %v636 = vadd.f32 %v628, %v632
    %v637 = vadd.f32 %v629, %v633
    %v638 = vadd.f32 %v630, %v634
    %v639 = vadd.f32 %v631, %v635
    %v640 = vtanh.pop %v636
    %v641 = vtanh.pop %v637
    %v642 = vtanh.pop %v638
    %v643 = vtanh.pop %v639
    %v644 = vmul.f32 %v582, %v640
    %v645 = vmul.f32 %v597, %v641
    %v646 = vmul.f32 %v612, %v642
    %v647 = vmul.f32 %v627, %v643
    %v648 = vperm.slane %v24, 1
    %v649 = vmul.f32 %v648, %v157
    %v650 = vmul.f32 %v648, %v162
    %v651 = vmul.f32 %v648, %v167
    %v652 = vmul.f32 %v648, %v172
    %v653 = vmul.f32 %v648, %v177
    %v654 = vmul.f32 %v648, %v182
    %v655 = vmul.f32 %v648, %v187
    %v656 = vmul.f32 %v648, %v192
    %v657 = vmul.f32 %v648, %v197
    %v658 = vmul.f32 %v648, %v202
    %v659 = vmul.f32 %v648, %v207
    %v660 = vmul.f32 %v648, %v212
    %v661 = vmul.f32 %v648, %v217
    %v662 = vmul.f32 %v648, %v222
    %v663 = vmul.f32 %v648, %v227
    %v664 = vmul.f32 %v648, %v232
    %v665 = vadd.f32 %v649, %v76
    %v666 = vadd.f32 %v650, %v81
    %v667 = vadd.f32 %v651, %v86
    %v668 = vadd.f32 %v652, %v91
    %v669 = vadd.f32 %v653, %v96
    %v670 = vadd.f32 %v654, %v101
    %v671 = vadd.f32 %v655, %v106
    %v672 = vadd.f32 %v656, %v111
    %v673 = vadd.f32 %v657, %v116
    %v674 = vadd.f32 %v658, %v121
    %v675 = vadd.f32 %v659, %v126
    %v676 = vadd.f32 %v660, %v131
    %v677 = vadd.f32 %v661, %v136
    %v678 = vadd.f32 %v662, %v141
    %v679 = vadd.f32 %v663, %v146
    %v680 = vadd.f32 %v664, %v151
    %681 = vmatpush.msra.mxu0 0.0
    %682 = vmatpush.msra.mxu0 0.0
    %683 = vmatpush.msra.mxu0 0.0
    %684 = vmatpush.msra.mxu0 0.0
    %685 = vmatpush.msra.mxu0 0.0
    %686 = vmatpush.msra.mxu0 0.0
    %687 = vmatpush.msra.mxu0 0.0
    %688 = vmatpush.msra.mxu0 0.0
    %689 = vmatpush.msra.mxu0 0.0
    %690 = vmatpush.msra.mxu0 0.0
    %691 = vmatpush.msra.mxu0 0.0
    %692 = vmatpush.msra.mxu0 0.0
    %693 = vmatpush.msra.mxu0 %v647
    %694 = vmatpush.msra.mxu0 %v646
    %695 = vmatpush.msra.mxu0 %v645
    %696 = vmatpush.msra.mxu0 %v644
    %697 = vmatmul.f32.gmra.mxu0 %v268
    %v698 = vpop.f32.mrf.mxu0
    %v699 = vadd.f32 0.0, %v698
    %700 = vmatmul.f32.gmra.mxu0 %v271
    %v701 = vpop.f32.mrf.mxu0
    %v702 = vadd.f32 0.0, %v701
    %703 = vmatmul.f32.gmra.mxu0 %v274
    %v704 = vpop.f32.mrf.mxu0
    %v705 = vadd.f32 0.0, %v704
    %706 = vmatmul.f32.gmra.mxu0 %v277
    %v707 = vpop.f32.mrf.mxu0
    %v708 = vadd.f32 0.0, %v707
    %709 = vmatmul.f32.gmra.mxu0 %v280
    %v710 = vpop.f32.mrf.mxu0
    %v711 = vadd.f32 0.0, %v710
    %712 = vmatmul.f32.gmra.mxu0 %v283
    %v713 = vpop.f32.mrf.mxu0
    %v714 = vadd.f32 0.0, %v713
    %715 = vmatmul.f32.gmra.mxu0 %v286
    %v716 = vpop.f32.mrf.mxu0
    %v717 = vadd.f32 0.0, %v716
    %718 = vmatmul.f32.gmra.mxu0 %v289
    %v719 = vpop.f32.mrf.mxu0
    %v720 = vadd.f32 0.0, %v719
    %721 = vmatmul.f32.gmra.mxu0 %v292
    %v722 = vpop.f32.mrf.mxu0
    %v723 = vadd.f32 0.0, %v722
    %724 = vmatmul.f32.gmra.mxu0 %v295
    %v725 = vpop.f32.mrf.mxu0
    %v726 = vadd.f32 0.0, %v725
    %727 = vmatmul.f32.gmra.mxu0 %v298
    %v728 = vpop.f32.mrf.mxu0
    %v729 = vadd.f32 0.0, %v728
    %730 = vmatmul.f32.gmra.mxu0 %v301
    %v731 = vpop.f32.mrf.mxu0
    %v732 = vadd.f32 0.0, %v731
    %733 = vmatmul.f32.gmra.mxu0 %v304
    %v734 = vpop.f32.mrf.mxu0
    %v735 = vadd.f32 0.0, %v734
    %736 = vmatmul.f32.gmra.mxu0 %v307
    %v737 = vpop.f32.mrf.mxu0
    %v738 = vadd.f32 0.0, %v737
    %739 = vmatmul.f32.gmra.mxu0 %v310
    %v740 = vpop.f32.mrf.mxu0
    %v741 = vadd.f32 0.0, %v740
    %742 = vmatmul.f32.gmra.mxu0 %v313
    %v743 = vpop.f32.mrf.mxu0
    %v744 = vadd.f32 0.0, %v743
    %745 = vdwg.mxu0
    %v746 = vadd.f32 %v665, %v699
    %v747 = vadd.f32 %v666, %v702
    %v748 = vadd.f32 %v667, %v705
    %v749 = vadd.f32 %v668, %v708
    %v750 = vadd.f32 %v669, %v711
    %v751 = vadd.f32 %v670, %v714
    %v752 = vadd.f32 %v671, %v717
    %v753 = vadd.f32 %v672, %v720
    %v754 = vadd.f32 %v673, %v723
    %v755 = vadd.f32 %v674, %v726
    %v756 = vadd.f32 %v675, %v729
    %v757 = vadd.f32 %v676, %v732
    %v758 = vadd.f32 %v677, %v735
    %v759 = vadd.f32 %v678, %v738
    %v760 = vadd.f32 %v679, %v741
    %v761 = vadd.f32 %v680, %v744
    %v762 = vxor.u32 %v746, 2147483648
    %v763 = vxor.u32 %v747, 2147483648
    %v764 = vxor.u32 %v748, 2147483648
    %v765 = vxor.u32 %v749, 2147483648
    %v766 = vmul.f32 %v762, 1.442695
    %v767 = vpow.pop %v766
    %v768 = vmul.f32 %v763, 1.442695
    %v769 = vpow.pop %v768
    %v770 = vmul.f32 %v764, 1.442695
    %v771 = vpow.pop %v770
    %v772 = vmul.f32 %v765, 1.442695
    %v773 = vpow.pop %v772
    %v774 = vadd.f32 %v767, 1.0
    %v775 = vadd.f32 %v769, 1.0
    %v776 = vadd.f32 %v771, 1.0
    %v777 = vadd.f32 %v773, 1.0
    %v778 = vrcp.pop %v774
    %v779 = vmul.f32 %v774, %v778
    %v780 = vsub.f32 1.0, %v779
    %v781 = vmul.f32 %v778, %v780
    %v782 = vadd.f32 %v778, %v781
    %vm783 = vweird.f32 %v774
    %vm784 = vweird.f32 %v778
    %vm785 = vmor %vm783, %vm784
    %v786 = vsel %vm785, %v778, %v782
    %v787 = vand.u32 2147483647, %v774
    %vm788 = vcmp.eq.f32.partialorder %v787, 8.507059e+37
    %v789 = vand.u32 %v774, 2147483648
    %v790 = vor.u32 1.1754944e-38, %v789
    %v791 = vsel %vm788, %v790, %v786
    %v792 = vmul.f32 1.0, %v791
    %v793 = vrcp.pop %v775
    %v794 = vmul.f32 %v775, %v793
    %v795 = vsub.f32 1.0, %v794
    %v796 = vmul.f32 %v793, %v795
    %v797 = vadd.f32 %v793, %v796
    %vm798 = vweird.f32 %v775
    %vm799 = vweird.f32 %v793
    %vm800 = vmor %vm798, %vm799
    %v801 = vsel %vm800, %v793, %v797
    %v802 = vand.u32 2147483647, %v775
    %vm803 = vcmp.eq.f32.partialorder %v802, 8.507059e+37
    %v804 = vand.u32 %v775, 2147483648
    %v805 = vor.u32 1.1754944e-38, %v804
    %v806 = vsel %vm803, %v805, %v801
    %v807 = vmul.f32 1.0, %v806
    %v808 = vrcp.pop %v776
    %v809 = vmul.f32 %v776, %v808
    %v810 = vsub.f32 1.0, %v809
    %v811 = vmul.f32 %v808, %v810
    %v812 = vadd.f32 %v808, %v811
    %vm813 = vweird.f32 %v776
    %vm814 = vweird.f32 %v808
    %vm815 = vmor %vm813, %vm814
    %v816 = vsel %vm815, %v808, %v812
    %v817 = vand.u32 2147483647, %v776
    %vm818 = vcmp.eq.f32.partialorder %v817, 8.507059e+37
    %v819 = vand.u32 %v776, 2147483648
    %v820 = vor.u32 1.1754944e-38, %v819
    %v821 = vsel %vm818, %v820, %v816
    %v822 = vmul.f32 1.0, %v821
    %v823 = vrcp.pop %v777
    %v824 = vmul.f32 %v777, %v823
    %v825 = vsub.f32 1.0, %v824
    %v826 = vmul.f32 %v823, %v825
    %v827 = vadd.f32 %v823, %v826
    %vm828 = vweird.f32 %v777
    %vm829 = vweird.f32 %v823
    %vm830 = vmor %vm828, %vm829
    %v831 = vsel %vm830, %v823, %v827
    %v832 = vand.u32 2147483647, %v777
    %vm833 = vcmp.eq.f32.partialorder %v832, 8.507059e+37
    %v834 = vand.u32 %v777, 2147483648
    %v835 = vor.u32 1.1754944e-38, %v834
    %v836 = vsel %vm833, %v835, %v831
    %v837 = vmul.f32 1.0, %v836
    %v838 = vxor.u32 %v750, 2147483648
    %v839 = vxor.u32 %v751, 2147483648
    %v840 = vxor.u32 %v752, 2147483648
    %v841 = vxor.u32 %v753, 2147483648
    %v842 = vmul.f32 %v838, 1.442695
    %v843 = vpow.pop %v842
    %v844 = vmul.f32 %v839, 1.442695
    %v845 = vpow.pop %v844
    %v846 = vmul.f32 %v840, 1.442695
    %v847 = vpow.pop %v846
    %v848 = vmul.f32 %v841, 1.442695
    %v849 = vpow.pop %v848
    %v850 = vadd.f32 %v843, 1.0
    %v851 = vadd.f32 %v845, 1.0
    %v852 = vadd.f32 %v847, 1.0
    %v853 = vadd.f32 %v849, 1.0
    %v854 = vrcp.pop %v850
    %v855 = vmul.f32 %v850, %v854
    %v856 = vsub.f32 1.0, %v855
    %v857 = vmul.f32 %v854, %v856
    %v858 = vadd.f32 %v854, %v857
    %vm859 = vweird.f32 %v850
    %vm860 = vweird.f32 %v854
    %vm861 = vmor %vm859, %vm860
    %v862 = vsel %vm861, %v854, %v858
    %v863 = vand.u32 2147483647, %v850
    %vm864 = vcmp.eq.f32.partialorder %v863, 8.507059e+37
    %v865 = vand.u32 %v850, 2147483648
    %v866 = vor.u32 1.1754944e-38, %v865
    %v867 = vsel %vm864, %v866, %v862
    %v868 = vmul.f32 1.0, %v867
    %v869 = vrcp.pop %v851
    %v870 = vmul.f32 %v851, %v869
    %v871 = vsub.f32 1.0, %v870
    %v872 = vmul.f32 %v869, %v871
    %v873 = vadd.f32 %v869, %v872
    %vm874 = vweird.f32 %v851
    %vm875 = vweird.f32 %v869
    %vm876 = vmor %vm874, %vm875
    %v877 = vsel %vm876, %v869, %v873
    %v878 = vand.u32 2147483647, %v851
    %vm879 = vcmp.eq.f32.partialorder %v878, 8.507059e+37
    %v880 = vand.u32 %v851, 2147483648
    %v881 = vor.u32 1.1754944e-38, %v880
    %v882 = vsel %vm879, %v881, %v877
    %v883 = vmul.f32 1.0, %v882
    %v884 = vrcp.pop %v852
    %v885 = vmul.f32 %v852, %v884
    %v886 = vsub.f32 1.0, %v885
    %v887 = vmul.f32 %v884, %v886
    %v888 = vadd.f32 %v884, %v887
    %vm889 = vweird.f32 %v852
    %vm890 = vweird.f32 %v884
    %vm891 = vmor %vm889, %vm890
    %v892 = vsel %vm891, %v884, %v888
    %v893 = vand.u32 2147483647, %v852
    %vm894 = vcmp.eq.f32.partialorder %v893, 8.507059e+37
    %v895 = vand.u32 %v852, 2147483648
    %v896 = vor.u32 1.1754944e-38, %v895
    %v897 = vsel %vm894, %v896, %v892
    %v898 = vmul.f32 1.0, %v897
    %v899 = vrcp.pop %v853
    %v900 = vmul.f32 %v853, %v899
    %v901 = vsub.f32 1.0, %v900
    %v902 = vmul.f32 %v899, %v901
    %v903 = vadd.f32 %v899, %v902
    %vm904 = vweird.f32 %v853
    %vm905 = vweird.f32 %v899
    %vm906 = vmor %vm904, %vm905
    %v907 = vsel %vm906, %v899, %v903
    %v908 = vand.u32 2147483647, %v853
    %vm909 = vcmp.eq.f32.partialorder %v908, 8.507059e+37
    %v910 = vand.u32 %v853, 2147483648
    %v911 = vor.u32 1.1754944e-38, %v910
    %v912 = vsel %vm909, %v911, %v907
    %v913 = vmul.f32 1.0, %v912
    %v914 = vtanh.pop %v754
    %v915 = vtanh.pop %v755
    %v916 = vtanh.pop %v756
    %v917 = vtanh.pop %v757
    %v918 = vxor.u32 %v758, 2147483648
    %v919 = vxor.u32 %v759, 2147483648
    %v920 = vxor.u32 %v760, 2147483648
    %v921 = vxor.u32 %v761, 2147483648
    %v922 = vmul.f32 %v918, 1.442695
    %v923 = vpow.pop %v922
    %v924 = vmul.f32 %v919, 1.442695
    %v925 = vpow.pop %v924
    %v926 = vmul.f32 %v920, 1.442695
    %v927 = vpow.pop %v926
    %v928 = vmul.f32 %v921, 1.442695
    %v929 = vpow.pop %v928
    %v930 = vadd.f32 %v923, 1.0
    %v931 = vadd.f32 %v925, 1.0
    %v932 = vadd.f32 %v927, 1.0
    %v933 = vadd.f32 %v929, 1.0
    %v934 = vrcp.pop %v930
    %v935 = vmul.f32 %v930, %v934
    %v936 = vsub.f32 1.0, %v935
    %v937 = vmul.f32 %v934, %v936
    %v938 = vadd.f32 %v934, %v937
    %vm939 = vweird.f32 %v930
    %vm940 = vweird.f32 %v934
    %vm941 = vmor %vm939, %vm940
    %v942 = vsel %vm941, %v934, %v938
    %v943 = vand.u32 2147483647, %v930
    %vm944 = vcmp.eq.f32.partialorder %v943, 8.507059e+37
    %v945 = vand.u32 %v930, 2147483648
    %v946 = vor.u32 1.1754944e-38, %v945
    %v947 = vsel %vm944, %v946, %v942
    %v948 = vmul.f32 1.0, %v947
    %v949 = vrcp.pop %v931
    %v950 = vmul.f32 %v931, %v949
    %v951 = vsub.f32 1.0, %v950
    %v952 = vmul.f32 %v949, %v951
    %v953 = vadd.f32 %v949, %v952
    %vm954 = vweird.f32 %v931
    %vm955 = vweird.f32 %v949
    %vm956 = vmor %vm954, %vm955
    %v957 = vsel %vm956, %v949, %v953
    %v958 = vand.u32 2147483647, %v931
    %vm959 = vcmp.eq.f32.partialorder %v958, 8.507059e+37
    %v960 = vand.u32 %v931, 2147483648
    %v961 = vor.u32 1.1754944e-38, %v960
    %v962 = vsel %vm959, %v961, %v957
    %v963 = vmul.f32 1.0, %v962
    %v964 = vrcp.pop %v932
    %v965 = vmul.f32 %v932, %v964
    %v966 = vsub.f32 1.0, %v965
    %v967 = vmul.f32 %v964, %v966
    %v968 = vadd.f32 %v964, %v967
    %vm969 = vweird.f32 %v932
    %vm970 = vweird.f32 %v964
    %vm971 = vmor %vm969, %vm970
    %v972 = vsel %vm971, %v964, %v968
    %v973 = vand.u32 2147483647, %v932
    %vm974 = vcmp.eq.f32.partialorder %v973, 8.507059e+37
    %v975 = vand.u32 %v932, 2147483648
    %v976 = vor.u32 1.1754944e-38, %v975
    %v977 = vsel %vm974, %v976, %v972
    %v978 = vmul.f32 1.0, %v977
    %v979 = vrcp.pop %v933
    %v980 = vmul.f32 %v933, %v979
    %v981 = vsub.f32 1.0, %v980
    %v982 = vmul.f32 %v979, %v981
    %v983 = vadd.f32 %v979, %v982
    %vm984 = vweird.f32 %v933
    %vm985 = vweird.f32 %v979
    %vm986 = vmor %vm984, %vm985
    %v987 = vsel %vm986, %v979, %v983
    %v988 = vand.u32 2147483647, %v933
    %vm989 = vcmp.eq.f32.partialorder %v988, 8.507059e+37
    %v990 = vand.u32 %v933, 2147483648
    %v991 = vor.u32 1.1754944e-38, %v990
    %v992 = vsel %vm989, %v991, %v987
    %v993 = vmul.f32 1.0, %v992
    %v994 = vmul.f32 %v868, %v636
    %v995 = vmul.f32 %v883, %v637
    %v996 = vmul.f32 %v898, %v638
    %v997 = vmul.f32 %v913, %v639
    %v998 = vmul.f32 %v792, %v914
    %v999 = vmul.f32 %v807, %v915
    %v1000 = vmul.f32 %v822, %v916
    %v1001 = vmul.f32 %v837, %v917
    %v1002 = vadd.f32 %v994, %v998
    %v1003 = vadd.f32 %v995, %v999
    %v1004 = vadd.f32 %v996, %v1000
    %v1005 = vadd.f32 %v997, %v1001
    %v1006 = vtanh.pop %v1002
    %v1007 = vtanh.pop %v1003
    %v1008 = vtanh.pop %v1004
    %v1009 = vtanh.pop %v1005
    %v1010 = vmul.f32 %v948, %v1006
    %v1011 = vmul.f32 %v963, %v1007
    %v1012 = vmul.f32 %v978, %v1008
    %v1013 = vmul.f32 %v993, %v1009
    %v1014 = vperm.slane %v24, 2
    %v1015 = vmul.f32 %v1014, %v157
    %v1016 = vmul.f32 %v1014, %v162
    %v1017 = vmul.f32 %v1014, %v167
    %v1018 = vmul.f32 %v1014, %v172
    %v1019 = vmul.f32 %v1014, %v177
    %v1020 = vmul.f32 %v1014, %v182
    %v1021 = vmul.f32 %v1014, %v187
    %v1022 = vmul.f32 %v1014, %v192
    %v1023 = vmul.f32 %v1014, %v197
    %v1024 = vmul.f32 %v1014, %v202
    %v1025 = vmul.f32 %v1014, %v207
    %v1026 = vmul.f32 %v1014, %v212
    %v1027 = vmul.f32 %v1014, %v217
    %v1028 = vmul.f32 %v1014, %v222
    %v1029 = vmul.f32 %v1014, %v227
    %v1030 = vmul.f32 %v1014, %v232
    %v1031 = vadd.f32 %v1015, %v76
    %v1032 = vadd.f32 %v1016, %v81
    %v1033 = vadd.f32 %v1017, %v86
    %v1034 = vadd.f32 %v1018, %v91
    %v1035 = vadd.f32 %v1019, %v96
    %v1036 = vadd.f32 %v1020, %v101
    %v1037 = vadd.f32 %v1021, %v106
    %v1038 = vadd.f32 %v1022, %v111
    %v1039 = vadd.f32 %v1023, %v116
    %v1040 = vadd.f32 %v1024, %v121
    %v1041 = vadd.f32 %v1025, %v126
    %v1042 = vadd.f32 %v1026, %v131
    %v1043 = vadd.f32 %v1027, %v136
    %v1044 = vadd.f32 %v1028, %v141
    %v1045 = vadd.f32 %v1029, %v146
    %v1046 = vadd.f32 %v1030, %v151
    %1047 = vmatpush.msra.mxu0 0.0
    %1048 = vmatpush.msra.mxu0 0.0
    %1049 = vmatpush.msra.mxu0 0.0
    %1050 = vmatpush.msra.mxu0 0.0
    %1051 = vmatpush.msra.mxu0 0.0
    %1052 = vmatpush.msra.mxu0 0.0
    %1053 = vmatpush.msra.mxu0 0.0
    %1054 = vmatpush.msra.mxu0 0.0
    %1055 = vmatpush.msra.mxu0 0.0
    %1056 = vmatpush.msra.mxu0 0.0
    %1057 = vmatpush.msra.mxu0 0.0
    %1058 = vmatpush.msra.mxu0 0.0
    %1059 = vmatpush.msra.mxu0 %v1013
    %1060 = vmatpush.msra.mxu0 %v1012
    %1061 = vmatpush.msra.mxu0 %v1011
    %1062 = vmatpush.msra.mxu0 %v1010
    %1063 = vmatmul.f32.gmra.mxu0 %v268
    %v1064 = vpop.f32.mrf.mxu0
    %v1065 = vadd.f32 0.0, %v1064
    %1066 = vmatmul.f32.gmra.mxu0 %v271
    %v1067 = vpop.f32.mrf.mxu0
    %v1068 = vadd.f32 0.0, %v1067
    %1069 = vmatmul.f32.gmra.mxu0 %v274
    %v1070 = vpop.f32.mrf.mxu0
    %v1071 = vadd.f32 0.0, %v1070
    %1072 = vmatmul.f32.gmra.mxu0 %v277
    %v1073 = vpop.f32.mrf.mxu0
    %v1074 = vadd.f32 0.0, %v1073
    %1075 = vmatmul.f32.gmra.mxu0 %v280
    %v1076 = vpop.f32.mrf.mxu0
    %v1077 = vadd.f32 0.0, %v1076
    %1078 = vmatmul.f32.gmra.mxu0 %v283
    %v1079 = vpop.f32.mrf.mxu0
    %v1080 = vadd.f32 0.0, %v1079
    %1081 = vmatmul.f32.gmra.mxu0 %v286
    %v1082 = vpop.f32.mrf.mxu0
    %v1083 = vadd.f32 0.0, %v1082
    %1084 = vmatmul.f32.gmra.mxu0 %v289
    %v1085 = vpop.f32.mrf.mxu0
    %v1086 = vadd.f32 0.0, %v1085
    %1087 = vmatmul.f32.gmra.mxu0 %v292
    %v1088 = vpop.f32.mrf.mxu0
    %v1089 = vadd.f32 0.0, %v1088
    %1090 = vmatmul.f32.gmra.mxu0 %v295
    %v1091 = vpop.f32.mrf.mxu0
    %v1092 = vadd.f32 0.0, %v1091
    %1093 = vmatmul.f32.gmra.mxu0 %v298
    %v1094 = vpop.f32.mrf.mxu0
    %v1095 = vadd.f32 0.0, %v1094
    %1096 = vmatmul.f32.gmra.mxu0 %v301
    %v1097 = vpop.f32.mrf.mxu0
    %v1098 = vadd.f32 0.0, %v1097
    %1099 = vmatmul.f32.gmra.mxu0 %v304
    %v1100 = vpop.f32.mrf.mxu0
    %v1101 = vadd.f32 0.0, %v1100
    %1102 = vmatmul.f32.gmra.mxu0 %v307
    %v1103 = vpop.f32.mrf.mxu0
    %v1104 = vadd.f32 0.0, %v1103
    %1105 = vmatmul.f32.gmra.mxu0 %v310
    %v1106 = vpop.f32.mrf.mxu0
    %v1107 = vadd.f32 0.0, %v1106
    %1108 = vmatmul.f32.gmra.mxu0 %v313
    %v1109 = vpop.f32.mrf.mxu0
    %v1110 = vadd.f32 0.0, %v1109
    %1111 = vdwg.mxu0
    %v1112 = vadd.f32 %v1031, %v1065
    %v1113 = vadd.f32 %v1032, %v1068
    %v1114 = vadd.f32 %v1033, %v1071
    %v1115 = vadd.f32 %v1034, %v1074
    %v1116 = vadd.f32 %v1035, %v1077
    %v1117 = vadd.f32 %v1036, %v1080
    %v1118 = vadd.f32 %v1037, %v1083
    %v1119 = vadd.f32 %v1038, %v1086
    %v1120 = vadd.f32 %v1039, %v1089
    %v1121 = vadd.f32 %v1040, %v1092
    %v1122 = vadd.f32 %v1041, %v1095
    %v1123 = vadd.f32 %v1042, %v1098
    %v1124 = vadd.f32 %v1043, %v1101
    %v1125 = vadd.f32 %v1044, %v1104
    %v1126 = vadd.f32 %v1045, %v1107
    %v1127 = vadd.f32 %v1046, %v1110
    %v1128 = vxor.u32 %v1112, 2147483648
    %v1129 = vxor.u32 %v1113, 2147483648
    %v1130 = vxor.u32 %v1114, 2147483648
    %v1131 = vxor.u32 %v1115, 2147483648
    %v1132 = vmul.f32 %v1128, 1.442695
    %v1133 = vpow.pop %v1132
    %v1134 = vmul.f32 %v1129, 1.442695
    %v1135 = vpow.pop %v1134
    %v1136 = vmul.f32 %v1130, 1.442695
    %v1137 = vpow.pop %v1136
    %v1138 = vmul.f32 %v1131, 1.442695
    %v1139 = vpow.pop %v1138
    %v1140 = vadd.f32 %v1133, 1.0
    %v1141 = vadd.f32 %v1135, 1.0
    %v1142 = vadd.f32 %v1137, 1.0
    %v1143 = vadd.f32 %v1139, 1.0
    %v1144 = vrcp.pop %v1140
    %v1145 = vmul.f32 %v1140, %v1144
    %v1146 = vsub.f32 1.0, %v1145
    %v1147 = vmul.f32 %v1144, %v1146
    %v1148 = vadd.f32 %v1144, %v1147
    %vm1149 = vweird.f32 %v1140
    %vm1150 = vweird.f32 %v1144
    %vm1151 = vmor %vm1149, %vm1150
    %v1152 = vsel %vm1151, %v1144, %v1148
    %v1153 = vand.u32 2147483647, %v1140
    %vm1154 = vcmp.eq.f32.partialorder %v1153, 8.507059e+37
    %v1155 = vand.u32 %v1140, 2147483648
    %v1156 = vor.u32 1.1754944e-38, %v1155
    %v1157 = vsel %vm1154, %v1156, %v1152
    %v1158 = vmul.f32 1.0, %v1157
    %v1159 = vrcp.pop %v1141
    %v1160 = vmul.f32 %v1141, %v1159
    %v1161 = vsub.f32 1.0, %v1160
    %v1162 = vmul.f32 %v1159, %v1161
    %v1163 = vadd.f32 %v1159, %v1162
    %vm1164 = vweird.f32 %v1141
    %vm1165 = vweird.f32 %v1159
    %vm1166 = vmor %vm1164, %vm1165
    %v1167 = vsel %vm1166, %v1159, %v1163
    %v1168 = vand.u32 2147483647, %v1141
    %vm1169 = vcmp.eq.f32.partialorder %v1168, 8.507059e+37
    %v1170 = vand.u32 %v1141, 2147483648
    %v1171 = vor.u32 1.1754944e-38, %v1170
    %v1172 = vsel %vm1169, %v1171, %v1167
    %v1173 = vmul.f32 1.0, %v1172
    %v1174 = vrcp.pop %v1142
    %v1175 = vmul.f32 %v1142, %v1174
    %v1176 = vsub.f32 1.0, %v1175
    %v1177 = vmul.f32 %v1174, %v1176
    %v1178 = vadd.f32 %v1174, %v1177
    %vm1179 = vweird.f32 %v1142
    %vm1180 = vweird.f32 %v1174
    %vm1181 = vmor %vm1179, %vm1180
    %v1182 = vsel %vm1181, %v1174, %v1178
    %v1183 = vand.u32 2147483647, %v1142
    %vm1184 = vcmp.eq.f32.partialorder %v1183, 8.507059e+37
    %v1185 = vand.u32 %v1142, 2147483648
    %v1186 = vor.u32 1.1754944e-38, %v1185
    %v1187 = vsel %vm1184, %v1186, %v1182
    %v1188 = vmul.f32 1.0, %v1187
    %v1189 = vrcp.pop %v1143
    %v1190 = vmul.f32 %v1143, %v1189
    %v1191 = vsub.f32 1.0, %v1190
    %v1192 = vmul.f32 %v1189, %v1191
    %v1193 = vadd.f32 %v1189, %v1192
    %vm1194 = vweird.f32 %v1143
    %vm1195 = vweird.f32 %v1189
    %vm1196 = vmor %vm1194, %vm1195
    %v1197 = vsel %vm1196, %v1189, %v1193
    %v1198 = vand.u32 2147483647, %v1143
    %vm1199 = vcmp.eq.f32.partialorder %v1198, 8.507059e+37
    %v1200 = vand.u32 %v1143, 2147483648
    %v1201 = vor.u32 1.1754944e-38, %v1200
    %v1202 = vsel %vm1199, %v1201, %v1197
    %v1203 = vmul.f32 1.0, %v1202
    %v1204 = vxor.u32 %v1116, 2147483648
    %v1205 = vxor.u32 %v1117, 2147483648
    %v1206 = vxor.u32 %v1118, 2147483648
    %v1207 = vxor.u32 %v1119, 2147483648
    %v1208 = vmul.f32 %v1204, 1.442695
    %v1209 = vpow.pop %v1208
    %v1210 = vmul.f32 %v1205, 1.442695
    %v1211 = vpow.pop %v1210
    %v1212 = vmul.f32 %v1206, 1.442695
    %v1213 = vpow.pop %v1212
    %v1214 = vmul.f32 %v1207, 1.442695
    %v1215 = vpow.pop %v1214
    %v1216 = vadd.f32 %v1209, 1.0
    %v1217 = vadd.f32 %v1211, 1.0
    %v1218 = vadd.f32 %v1213, 1.0
    %v1219 = vadd.f32 %v1215, 1.0
    %v1220 = vrcp.pop %v1216
    %v1221 = vmul.f32 %v1216, %v1220
    %v1222 = vsub.f32 1.0, %v1221
    %v1223 = vmul.f32 %v1220, %v1222
    %v1224 = vadd.f32 %v1220, %v1223
    %vm1225 = vweird.f32 %v1216
    %vm1226 = vweird.f32 %v1220
    %vm1227 = vmor %vm1225, %vm1226
    %v1228 = vsel %vm1227, %v1220, %v1224
    %v1229 = vand.u32 2147483647, %v1216
    %vm1230 = vcmp.eq.f32.partialorder %v1229, 8.507059e+37
    %v1231 = vand.u32 %v1216, 2147483648
    %v1232 = vor.u32 1.1754944e-38, %v1231
    %v1233 = vsel %vm1230, %v1232, %v1228
    %v1234 = vmul.f32 1.0, %v1233
    %v1235 = vrcp.pop %v1217
    %v1236 = vmul.f32 %v1217, %v1235
    %v1237 = vsub.f32 1.0, %v1236
    %v1238 = vmul.f32 %v1235, %v1237
    %v1239 = vadd.f32 %v1235, %v1238
    %vm1240 = vweird.f32 %v1217
    %vm1241 = vweird.f32 %v1235
    %vm1242 = vmor %vm1240, %vm1241
    %v1243 = vsel %vm1242, %v1235, %v1239
    %v1244 = vand.u32 2147483647, %v1217
    %vm1245 = vcmp.eq.f32.partialorder %v1244, 8.507059e+37
    %v1246 = vand.u32 %v1217, 2147483648
    %v1247 = vor.u32 1.1754944e-38, %v1246
    %v1248 = vsel %vm1245, %v1247, %v1243
    %v1249 = vmul.f32 1.0, %v1248
    %v1250 = vrcp.pop %v1218
    %v1251 = vmul.f32 %v1218, %v1250
    %v1252 = vsub.f32 1.0, %v1251
    %v1253 = vmul.f32 %v1250, %v1252
    %v1254 = vadd.f32 %v1250, %v1253
    %vm1255 = vweird.f32 %v1218
    %vm1256 = vweird.f32 %v1250
    %vm1257 = vmor %vm1255, %vm1256
    %v1258 = vsel %vm1257, %v1250, %v1254
    %v1259 = vand.u32 2147483647, %v1218
    %vm1260 = vcmp.eq.f32.partialorder %v1259, 8.507059e+37
    %v1261 = vand.u32 %v1218, 2147483648
    %v1262 = vor.u32 1.1754944e-38, %v1261
    %v1263 = vsel %vm1260, %v1262, %v1258
    %v1264 = vmul.f32 1.0, %v1263
    %v1265 = vrcp.pop %v1219
    %v1266 = vmul.f32 %v1219, %v1265
    %v1267 = vsub.f32 1.0, %v1266
    %v1268 = vmul.f32 %v1265, %v1267
    %v1269 = vadd.f32 %v1265, %v1268
    %vm1270 = vweird.f32 %v1219
    %vm1271 = vweird.f32 %v1265
    %vm1272 = vmor %vm1270, %vm1271
    %v1273 = vsel %vm1272, %v1265, %v1269
    %v1274 = vand.u32 2147483647, %v1219
    %vm1275 = vcmp.eq.f32.partialorder %v1274, 8.507059e+37
    %v1276 = vand.u32 %v1219, 2147483648
    %v1277 = vor.u32 1.1754944e-38, %v1276
    %v1278 = vsel %vm1275, %v1277, %v1273
    %v1279 = vmul.f32 1.0, %v1278
    %v1280 = vtanh.pop %v1120
    %v1281 = vtanh.pop %v1121
    %v1282 = vtanh.pop %v1122
    %v1283 = vtanh.pop %v1123
    %v1284 = vxor.u32 %v1124, 2147483648
    %v1285 = vxor.u32 %v1125, 2147483648
    %v1286 = vxor.u32 %v1126, 2147483648
    %v1287 = vxor.u32 %v1127, 2147483648
    %v1288 = vmul.f32 %v1284, 1.442695
    %v1289 = vpow.pop %v1288
    %v1290 = vmul.f32 %v1285, 1.442695
    %v1291 = vpow.pop %v1290
    %v1292 = vmul.f32 %v1286, 1.442695
    %v1293 = vpow.pop %v1292
    %v1294 = vmul.f32 %v1287, 1.442695
    %v1295 = vpow.pop %v1294
    %v1296 = vadd.f32 %v1289, 1.0
    %v1297 = vadd.f32 %v1291, 1.0
    %v1298 = vadd.f32 %v1293, 1.0
    %v1299 = vadd.f32 %v1295, 1.0
    %v1300 = vrcp.pop %v1296
    %v1301 = vmul.f32 %v1296, %v1300
    %v1302 = vsub.f32 1.0, %v1301
    %v1303 = vmul.f32 %v1300, %v1302
    %v1304 = vadd.f32 %v1300, %v1303
    %vm1305 = vweird.f32 %v1296
    %vm1306 = vweird.f32 %v1300
    %vm1307 = vmor %vm1305, %vm1306
    %v1308 = vsel %vm1307, %v1300, %v1304
    %v1309 = vand.u32 2147483647, %v1296
    %vm1310 = vcmp.eq.f32.partialorder %v1309, 8.507059e+37
    %v1311 = vand.u32 %v1296, 2147483648
    %v1312 = vor.u32 1.1754944e-38, %v1311
    %v1313 = vsel %vm1310, %v1312, %v1308
    %v1314 = vmul.f32 1.0, %v1313
    %v1315 = vrcp.pop %v1297
    %v1316 = vmul.f32 %v1297, %v1315
    %v1317 = vsub.f32 1.0, %v1316
    %v1318 = vmul.f32 %v1315, %v1317
    %v1319 = vadd.f32 %v1315, %v1318
    %vm1320 = vweird.f32 %v1297
    %vm1321 = vweird.f32 %v1315
    %vm1322 = vmor %vm1320, %vm1321
    %v1323 = vsel %vm1322, %v1315, %v1319
    %v1324 = vand.u32 2147483647, %v1297
    %vm1325 = vcmp.eq.f32.partialorder %v1324, 8.507059e+37
    %v1326 = vand.u32 %v1297, 2147483648
    %v1327 = vor.u32 1.1754944e-38, %v1326
    %v1328 = vsel %vm1325, %v1327, %v1323
    %v1329 = vmul.f32 1.0, %v1328
    %v1330 = vrcp.pop %v1298
    %v1331 = vmul.f32 %v1298, %v1330
    %v1332 = vsub.f32 1.0, %v1331
    %v1333 = vmul.f32 %v1330, %v1332
    %v1334 = vadd.f32 %v1330, %v1333
    %vm1335 = vweird.f32 %v1298
    %vm1336 = vweird.f32 %v1330
    %vm1337 = vmor %vm1335, %vm1336
    %v1338 = vsel %vm1337, %v1330, %v1334
    %v1339 = vand.u32 2147483647, %v1298
    %vm1340 = vcmp.eq.f32.partialorder %v1339, 8.507059e+37
    %v1341 = vand.u32 %v1298, 2147483648
    %v1342 = vor.u32 1.1754944e-38, %v1341
    %v1343 = vsel %vm1340, %v1342, %v1338
    %v1344 = vmul.f32 1.0, %v1343
    %v1345 = vrcp.pop %v1299
    %v1346 = vmul.f32 %v1299, %v1345
    %v1347 = vsub.f32 1.0, %v1346
    %v1348 = vmul.f32 %v1345, %v1347
    %v1349 = vadd.f32 %v1345, %v1348
    %vm1350 = vweird.f32 %v1299
    %vm1351 = vweird.f32 %v1345
    %vm1352 = vmor %vm1350, %vm1351
    %v1353 = vsel %vm1352, %v1345, %v1349
    %v1354 = vand.u32 2147483647, %v1299
    %vm1355 = vcmp.eq.f32.partialorder %v1354, 8.507059e+37
    %v1356 = vand.u32 %v1299, 2147483648
    %v1357 = vor.u32 1.1754944e-38, %v1356
    %v1358 = vsel %vm1355, %v1357, %v1353
    %v1359 = vmul.f32 1.0, %v1358
    %v1360 = vmul.f32 %v1234, %v1002
    %v1361 = vmul.f32 %v1249, %v1003
    %v1362 = vmul.f32 %v1264, %v1004
    %v1363 = vmul.f32 %v1279, %v1005
    %v1364 = vmul.f32 %v1158, %v1280
    %v1365 = vmul.f32 %v1173, %v1281
    %v1366 = vmul.f32 %v1188, %v1282
    %v1367 = vmul.f32 %v1203, %v1283
    %v1368 = vadd.f32 %v1360, %v1364
    %v1369 = vadd.f32 %v1361, %v1365
    %v1370 = vadd.f32 %v1362, %v1366
    %v1371 = vadd.f32 %v1363, %v1367
    %v1372 = vtanh.pop %v1368
    %v1373 = vtanh.pop %v1369
    %v1374 = vtanh.pop %v1370
    %v1375 = vtanh.pop %v1371
    %v1376 = vmul.f32 %v1314, %v1372
    %v1377 = vmul.f32 %v1329, %v1373
    %v1378 = vmul.f32 %v1344, %v1374
    %v1379 = vmul.f32 %v1359, %v1375
    %v1380 = vperm.slane %v24, 3
    %v1381 = vmul.f32 %v1380, %v157
    %v1382 = vmul.f32 %v1380, %v162
    %v1383 = vmul.f32 %v1380, %v167
    %v1384 = vmul.f32 %v1380, %v172
    %v1385 = vmul.f32 %v1380, %v177
    %v1386 = vmul.f32 %v1380, %v182
    %v1387 = vmul.f32 %v1380, %v187
    %v1388 = vmul.f32 %v1380, %v192
    %v1389 = vmul.f32 %v1380, %v197
    %v1390 = vmul.f32 %v1380, %v202
    %v1391 = vmul.f32 %v1380, %v207
    %v1392 = vmul.f32 %v1380, %v212
    %v1393 = vmul.f32 %v1380, %v217
    %v1394 = vmul.f32 %v1380, %v222
    %v1395 = vmul.f32 %v1380, %v227
    %v1396 = vmul.f32 %v1380, %v232
    %v1397 = vadd.f32 %v1381, %v76
    %v1398 = vadd.f32 %v1382, %v81
    %v1399 = vadd.f32 %v1383, %v86
    %v1400 = vadd.f32 %v1384, %v91
    %v1401 = vadd.f32 %v1385, %v96
    %v1402 = vadd.f32 %v1386, %v101
    %v1403 = vadd.f32 %v1387, %v106
    %v1404 = vadd.f32 %v1388, %v111
    %v1405 = vadd.f32 %v1389, %v116
    %v1406 = vadd.f32 %v1390, %v121
    %v1407 = vadd.f32 %v1391, %v126
    %v1408 = vadd.f32 %v1392, %v131
    %v1409 = vadd.f32 %v1393, %v136
    %v1410 = vadd.f32 %v1394, %v141
    %v1411 = vadd.f32 %v1395, %v146
    %v1412 = vadd.f32 %v1396, %v151
    %1413 = vmatpush.msra.mxu0 0.0
    %1414 = vmatpush.msra.mxu0 0.0
    %1415 = vmatpush.msra.mxu0 0.0
    %1416 = vmatpush.msra.mxu0 0.0
    %1417 = vmatpush.msra.mxu0 0.0
    %1418 = vmatpush.msra.mxu0 0.0
    %1419 = vmatpush.msra.mxu0 0.0
    %1420 = vmatpush.msra.mxu0 0.0
    %1421 = vmatpush.msra.mxu0 0.0
    %1422 = vmatpush.msra.mxu0 0.0
    %1423 = vmatpush.msra.mxu0 0.0
    %1424 = vmatpush.msra.mxu0 0.0
    %1425 = vmatpush.msra.mxu0 %v1379
    %1426 = vmatpush.msra.mxu0 %v1378
    %1427 = vmatpush.msra.mxu0 %v1377
    %1428 = vmatpush.msra.mxu0 %v1376
    %1429 = vmatmul.f32.gmra.mxu0 %v268
    %v1430 = vpop.f32.mrf.mxu0
    %v1431 = vadd.f32 0.0, %v1430
    %1432 = vmatmul.f32.gmra.mxu0 %v271
    %v1433 = vpop.f32.mrf.mxu0
    %v1434 = vadd.f32 0.0, %v1433
    %1435 = vmatmul.f32.gmra.mxu0 %v274
    %v1436 = vpop.f32.mrf.mxu0
    %v1437 = vadd.f32 0.0, %v1436
    %1438 = vmatmul.f32.gmra.mxu0 %v277
    %v1439 = vpop.f32.mrf.mxu0
    %v1440 = vadd.f32 0.0, %v1439
    %1441 = vmatmul.f32.gmra.mxu0 %v280
    %v1442 = vpop.f32.mrf.mxu0
    %v1443 = vadd.f32 0.0, %v1442
    %1444 = vmatmul.f32.gmra.mxu0 %v283
    %v1445 = vpop.f32.mrf.mxu0
    %v1446 = vadd.f32 0.0, %v1445
    %1447 = vmatmul.f32.gmra.mxu0 %v286
    %v1448 = vpop.f32.mrf.mxu0
    %v1449 = vadd.f32 0.0, %v1448
    %1450 = vmatmul.f32.gmra.mxu0 %v289
    %v1451 = vpop.f32.mrf.mxu0
    %v1452 = vadd.f32 0.0, %v1451
    %1453 = vmatmul.f32.gmra.mxu0 %v292
    %v1454 = vpop.f32.mrf.mxu0
    %v1455 = vadd.f32 0.0, %v1454
    %1456 = vmatmul.f32.gmra.mxu0 %v295
    %v1457 = vpop.f32.mrf.mxu0
    %v1458 = vadd.f32 0.0, %v1457
    %1459 = vmatmul.f32.gmra.mxu0 %v298
    %v1460 = vpop.f32.mrf.mxu0
    %v1461 = vadd.f32 0.0, %v1460
    %1462 = vmatmul.f32.gmra.mxu0 %v301
    %v1463 = vpop.f32.mrf.mxu0
    %v1464 = vadd.f32 0.0, %v1463
    %1465 = vmatmul.f32.gmra.mxu0 %v304
    %v1466 = vpop.f32.mrf.mxu0
    %v1467 = vadd.f32 0.0, %v1466
    %1468 = vmatmul.f32.gmra.mxu0 %v307
    %v1469 = vpop.f32.mrf.mxu0
    %v1470 = vadd.f32 0.0, %v1469
    %1471 = vmatmul.f32.gmra.mxu0 %v310
    %v1472 = vpop.f32.mrf.mxu0
    %v1473 = vadd.f32 0.0, %v1472
    %1474 = vmatmul.f32.gmra.mxu0 %v313
    %v1475 = vpop.f32.mrf.mxu0
    %v1476 = vadd.f32 0.0, %v1475
    %1477 = vdwg.mxu0
    %v1478 = vadd.f32 %v1397, %v1431
    %v1479 = vadd.f32 %v1398, %v1434
    %v1480 = vadd.f32 %v1399, %v1437
    %v1481 = vadd.f32 %v1400, %v1440
    %v1482 = vadd.f32 %v1401, %v1443
    %v1483 = vadd.f32 %v1402, %v1446
    %v1484 = vadd.f32 %v1403, %v1449
    %v1485 = vadd.f32 %v1404, %v1452
    %v1486 = vadd.f32 %v1405, %v1455
    %v1487 = vadd.f32 %v1406, %v1458
    %v1488 = vadd.f32 %v1407, %v1461
    %v1489 = vadd.f32 %v1408, %v1464
    %v1490 = vadd.f32 %v1409, %v1467
    %v1491 = vadd.f32 %v1410, %v1470
    %v1492 = vadd.f32 %v1411, %v1473
    %v1493 = vadd.f32 %v1412, %v1476
    %v1494 = vxor.u32 %v1478, 2147483648
    %v1495 = vxor.u32 %v1479, 2147483648
    %v1496 = vxor.u32 %v1480, 2147483648
    %v1497 = vxor.u32 %v1481, 2147483648
    %v1498 = vmul.f32 %v1494, 1.442695
    %v1499 = vpow.pop %v1498
    %v1500 = vmul.f32 %v1495, 1.442695
    %v1501 = vpow.pop %v1500
    %v1502 = vmul.f32 %v1496, 1.442695
    %v1503 = vpow.pop %v1502
    %v1504 = vmul.f32 %v1497, 1.442695
    %v1505 = vpow.pop %v1504
    %v1506 = vadd.f32 %v1499, 1.0
    %v1507 = vadd.f32 %v1501, 1.0
    %v1508 = vadd.f32 %v1503, 1.0
    %v1509 = vadd.f32 %v1505, 1.0
    %v1510 = vrcp.pop %v1506
    %v1511 = vmul.f32 %v1506, %v1510
    %v1512 = vsub.f32 1.0, %v1511
    %v1513 = vmul.f32 %v1510, %v1512
    %v1514 = vadd.f32 %v1510, %v1513
    %vm1515 = vweird.f32 %v1506
    %vm1516 = vweird.f32 %v1510
    %vm1517 = vmor %vm1515, %vm1516
    %v1518 = vsel %vm1517, %v1510, %v1514
    %v1519 = vand.u32 2147483647, %v1506
    %vm1520 = vcmp.eq.f32.partialorder %v1519, 8.507059e+37
    %v1521 = vand.u32 %v1506, 2147483648
    %v1522 = vor.u32 1.1754944e-38, %v1521
    %v1523 = vsel %vm1520, %v1522, %v1518
    %v1524 = vmul.f32 1.0, %v1523
    %v1525 = vrcp.pop %v1507
    %v1526 = vmul.f32 %v1507, %v1525
    %v1527 = vsub.f32 1.0, %v1526
    %v1528 = vmul.f32 %v1525, %v1527
    %v1529 = vadd.f32 %v1525, %v1528
    %vm1530 = vweird.f32 %v1507
    %vm1531 = vweird.f32 %v1525
    %vm1532 = vmor %vm1530, %vm1531
    %v1533 = vsel %vm1532, %v1525, %v1529
    %v1534 = vand.u32 2147483647, %v1507
    %vm1535 = vcmp.eq.f32.partialorder %v1534, 8.507059e+37
    %v1536 = vand.u32 %v1507, 2147483648
    %v1537 = vor.u32 1.1754944e-38, %v1536
    %v1538 = vsel %vm1535, %v1537, %v1533
    %v1539 = vmul.f32 1.0, %v1538
    %v1540 = vrcp.pop %v1508
    %v1541 = vmul.f32 %v1508, %v1540
    %v1542 = vsub.f32 1.0, %v1541
    %v1543 = vmul.f32 %v1540, %v1542
    %v1544 = vadd.f32 %v1540, %v1543
    %vm1545 = vweird.f32 %v1508
    %vm1546 = vweird.f32 %v1540
    %vm1547 = vmor %vm1545, %vm1546
    %v1548 = vsel %vm1547, %v1540, %v1544
    %v1549 = vand.u32 2147483647, %v1508
    %vm1550 = vcmp.eq.f32.partialorder %v1549, 8.507059e+37
    %v1551 = vand.u32 %v1508, 2147483648
    %v1552 = vor.u32 1.1754944e-38, %v1551
    %v1553 = vsel %vm1550, %v1552, %v1548
    %v1554 = vmul.f32 1.0, %v1553
    %v1555 = vrcp.pop %v1509
    %v1556 = vmul.f32 %v1509, %v1555
    %v1557 = vsub.f32 1.0, %v1556
    %v1558 = vmul.f32 %v1555, %v1557
    %v1559 = vadd.f32 %v1555, %v1558
    %vm1560 = vweird.f32 %v1509
    %vm1561 = vweird.f32 %v1555
    %vm1562 = vmor %vm1560, %vm1561
    %v1563 = vsel %vm1562, %v1555, %v1559
    %v1564 = vand.u32 2147483647, %v1509
    %vm1565 = vcmp.eq.f32.partialorder %v1564, 8.507059e+37
    %v1566 = vand.u32 %v1509, 2147483648
    %v1567 = vor.u32 1.1754944e-38, %v1566
    %v1568 = vsel %vm1565, %v1567, %v1563
    %v1569 = vmul.f32 1.0, %v1568
    %v1570 = vxor.u32 %v1482, 2147483648
    %v1571 = vxor.u32 %v1483, 2147483648
    %v1572 = vxor.u32 %v1484, 2147483648
    %v1573 = vxor.u32 %v1485, 2147483648
    %v1574 = vmul.f32 %v1570, 1.442695
    %v1575 = vpow.pop %v1574
    %v1576 = vmul.f32 %v1571, 1.442695
    %v1577 = vpow.pop %v1576
    %v1578 = vmul.f32 %v1572, 1.442695
    %v1579 = vpow.pop %v1578
    %v1580 = vmul.f32 %v1573, 1.442695
    %v1581 = vpow.pop %v1580
    %v1582 = vadd.f32 %v1575, 1.0
    %v1583 = vadd.f32 %v1577, 1.0
    %v1584 = vadd.f32 %v1579, 1.0
    %v1585 = vadd.f32 %v1581, 1.0
    %v1586 = vrcp.pop %v1582
    %v1587 = vmul.f32 %v1582, %v1586
    %v1588 = vsub.f32 1.0, %v1587
    %v1589 = vmul.f32 %v1586, %v1588
    %v1590 = vadd.f32 %v1586, %v1589
    %vm1591 = vweird.f32 %v1582
    %vm1592 = vweird.f32 %v1586
    %vm1593 = vmor %vm1591, %vm1592
    %v1594 = vsel %vm1593, %v1586, %v1590
    %v1595 = vand.u32 2147483647, %v1582
    %vm1596 = vcmp.eq.f32.partialorder %v1595, 8.507059e+37
    %v1597 = vand.u32 %v1582, 2147483648
    %v1598 = vor.u32 1.1754944e-38, %v1597
    %v1599 = vsel %vm1596, %v1598, %v1594
    %v1600 = vmul.f32 1.0, %v1599
    %v1601 = vrcp.pop %v1583
    %v1602 = vmul.f32 %v1583, %v1601
    %v1603 = vsub.f32 1.0, %v1602
    %v1604 = vmul.f32 %v1601, %v1603
    %v1605 = vadd.f32 %v1601, %v1604
    %vm1606 = vweird.f32 %v1583
    %vm1607 = vweird.f32 %v1601
    %vm1608 = vmor %vm1606, %vm1607
    %v1609 = vsel %vm1608, %v1601, %v1605
    %v1610 = vand.u32 2147483647, %v1583
    %vm1611 = vcmp.eq.f32.partialorder %v1610, 8.507059e+37
    %v1612 = vand.u32 %v1583, 2147483648
    %v1613 = vor.u32 1.1754944e-38, %v1612
    %v1614 = vsel %vm1611, %v1613, %v1609
    %v1615 = vmul.f32 1.0, %v1614
    %v1616 = vrcp.pop %v1584
    %v1617 = vmul.f32 %v1584, %v1616
    %v1618 = vsub.f32 1.0, %v1617
    %v1619 = vmul.f32 %v1616, %v1618
    %v1620 = vadd.f32 %v1616, %v1619
    %vm1621 = vweird.f32 %v1584
    %vm1622 = vweird.f32 %v1616
    %vm1623 = vmor %vm1621, %vm1622
    %v1624 = vsel %vm1623, %v1616, %v1620
    %v1625 = vand.u32 2147483647, %v1584
    %vm1626 = vcmp.eq.f32.partialorder %v1625, 8.507059e+37
    %v1627 = vand.u32 %v1584, 2147483648
    %v1628 = vor.u32 1.1754944e-38, %v1627
    %v1629 = vsel %vm1626, %v1628, %v1624
    %v1630 = vmul.f32 1.0, %v1629
    %v1631 = vrcp.pop %v1585
    %v1632 = vmul.f32 %v1585, %v1631
    %v1633 = vsub.f32 1.0, %v1632
    %v1634 = vmul.f32 %v1631, %v1633
    %v1635 = vadd.f32 %v1631, %v1634
    %vm1636 = vweird.f32 %v1585
    %vm1637 = vweird.f32 %v1631
    %vm1638 = vmor %vm1636, %vm1637
    %v1639 = vsel %vm1638, %v1631, %v1635
    %v1640 = vand.u32 2147483647, %v1585
    %vm1641 = vcmp.eq.f32.partialorder %v1640, 8.507059e+37
    %v1642 = vand.u32 %v1585, 2147483648
    %v1643 = vor.u32 1.1754944e-38, %v1642
    %v1644 = vsel %vm1641, %v1643, %v1639
    %v1645 = vmul.f32 1.0, %v1644
    %v1646 = vtanh.pop %v1486
    %v1647 = vtanh.pop %v1487
    %v1648 = vtanh.pop %v1488
    %v1649 = vtanh.pop %v1489
    %v1650 = vxor.u32 %v1490, 2147483648
    %v1651 = vxor.u32 %v1491, 2147483648
    %v1652 = vxor.u32 %v1492, 2147483648
    %v1653 = vxor.u32 %v1493, 2147483648
    %v1654 = vmul.f32 %v1650, 1.442695
    %v1655 = vpow.pop %v1654
    %v1656 = vmul.f32 %v1651, 1.442695
    %v1657 = vpow.pop %v1656
    %v1658 = vmul.f32 %v1652, 1.442695
    %v1659 = vpow.pop %v1658
    %v1660 = vmul.f32 %v1653, 1.442695
    %v1661 = vpow.pop %v1660
    %v1662 = vadd.f32 %v1655, 1.0
    %v1663 = vadd.f32 %v1657, 1.0
    %v1664 = vadd.f32 %v1659, 1.0
    %v1665 = vadd.f32 %v1661, 1.0
    %v1666 = vrcp.pop %v1662
    %v1667 = vmul.f32 %v1662, %v1666
    %v1668 = vsub.f32 1.0, %v1667
    %v1669 = vmul.f32 %v1666, %v1668
    %v1670 = vadd.f32 %v1666, %v1669
    %vm1671 = vweird.f32 %v1662
    %vm1672 = vweird.f32 %v1666
    %vm1673 = vmor %vm1671, %vm1672
    %v1674 = vsel %vm1673, %v1666, %v1670
    %v1675 = vand.u32 2147483647, %v1662
    %vm1676 = vcmp.eq.f32.partialorder %v1675, 8.507059e+37
    %v1677 = vand.u32 %v1662, 2147483648
    %v1678 = vor.u32 1.1754944e-38, %v1677
    %v1679 = vsel %vm1676, %v1678, %v1674
    %v1680 = vmul.f32 1.0, %v1679
    %v1681 = vrcp.pop %v1663
    %v1682 = vmul.f32 %v1663, %v1681
    %v1683 = vsub.f32 1.0, %v1682
    %v1684 = vmul.f32 %v1681, %v1683
    %v1685 = vadd.f32 %v1681, %v1684
    %vm1686 = vweird.f32 %v1663
    %vm1687 = vweird.f32 %v1681
    %vm1688 = vmor %vm1686, %vm1687
    %v1689 = vsel %vm1688, %v1681, %v1685
    %v1690 = vand.u32 2147483647, %v1663
    %vm1691 = vcmp.eq.f32.partialorder %v1690, 8.507059e+37
    %v1692 = vand.u32 %v1663, 2147483648
    %v1693 = vor.u32 1.1754944e-38, %v1692
    %v1694 = vsel %vm1691, %v1693, %v1689
    %v1695 = vmul.f32 1.0, %v1694
    %v1696 = vrcp.pop %v1664
    %v1697 = vmul.f32 %v1664, %v1696
    %v1698 = vsub.f32 1.0, %v1697
    %v1699 = vmul.f32 %v1696, %v1698
    %v1700 = vadd.f32 %v1696, %v1699
    %vm1701 = vweird.f32 %v1664
    %vm1702 = vweird.f32 %v1696
    %vm1703 = vmor %vm1701, %vm1702
    %v1704 = vsel %vm1703, %v1696, %v1700
    %v1705 = vand.u32 2147483647, %v1664
    %vm1706 = vcmp.eq.f32.partialorder %v1705, 8.507059e+37
    %v1707 = vand.u32 %v1664, 2147483648
    %v1708 = vor.u32 1.1754944e-38, %v1707
    %v1709 = vsel %vm1706, %v1708, %v1704
    %v1710 = vmul.f32 1.0, %v1709
    %v1711 = vrcp.pop %v1665
    %v1712 = vmul.f32 %v1665, %v1711
    %v1713 = vsub.f32 1.0, %v1712
    %v1714 = vmul.f32 %v1711, %v1713
    %v1715 = vadd.f32 %v1711, %v1714
    %vm1716 = vweird.f32 %v1665
    %vm1717 = vweird.f32 %v1711
    %vm1718 = vmor %vm1716, %vm1717
    %v1719 = vsel %vm1718, %v1711, %v1715
    %v1720 = vand.u32 2147483647, %v1665
    %vm1721 = vcmp.eq.f32.partialorder %v1720, 8.507059e+37
    %v1722 = vand.u32 %v1665, 2147483648
    %v1723 = vor.u32 1.1754944e-38, %v1722
    %v1724 = vsel %vm1721, %v1723, %v1719
    %v1725 = vmul.f32 1.0, %v1724
    %v1726 = vmul.f32 %v1600, %v1368
    %v1727 = vmul.f32 %v1615, %v1369
    %v1728 = vmul.f32 %v1630, %v1370
    %v1729 = vmul.f32 %v1645, %v1371
    %v1730 = vmul.f32 %v1524, %v1646
    %v1731 = vmul.f32 %v1539, %v1647
    %v1732 = vmul.f32 %v1554, %v1648
    %v1733 = vmul.f32 %v1569, %v1649
    %v1734 = vadd.f32 %v1726, %v1730
    %v1735 = vadd.f32 %v1727, %v1731
    %v1736 = vadd.f32 %v1728, %v1732
    %v1737 = vadd.f32 %v1729, %v1733
    %v1738 = vtanh.pop %v1734
    %v1739 = vtanh.pop %v1735
    %v1740 = vtanh.pop %v1736
    %v1741 = vtanh.pop %v1737
    %v1742 = vmul.f32 %v1680, %v1738
    %v1743 = vmul.f32 %v1695, %v1739
    %v1744 = vmul.f32 %v1710, %v1740
    %v1745 = vmul.f32 %v1725, %v1741
    %v1746 = vperm.slane %v24, 4
    %v1747 = vmul.f32 %v1746, %v157
    %v1748 = vmul.f32 %v1746, %v162
    %v1749 = vmul.f32 %v1746, %v167
    %v1750 = vmul.f32 %v1746, %v172
    %v1751 = vmul.f32 %v1746, %v177
    %v1752 = vmul.f32 %v1746, %v182
    %v1753 = vmul.f32 %v1746, %v187
    %v1754 = vmul.f32 %v1746, %v192
    %v1755 = vmul.f32 %v1746, %v197
    %v1756 = vmul.f32 %v1746, %v202
    %v1757 = vmul.f32 %v1746, %v207
    %v1758 = vmul.f32 %v1746, %v212
    %v1759 = vmul.f32 %v1746, %v217
    %v1760 = vmul.f32 %v1746, %v222
    %v1761 = vmul.f32 %v1746, %v227
    %v1762 = vmul.f32 %v1746, %v232
    %v1763 = vadd.f32 %v1747, %v76
    %v1764 = vadd.f32 %v1748, %v81
    %v1765 = vadd.f32 %v1749, %v86
    %v1766 = vadd.f32 %v1750, %v91
    %v1767 = vadd.f32 %v1751, %v96
    %v1768 = vadd.f32 %v1752, %v101
    %v1769 = vadd.f32 %v1753, %v106
    %v1770 = vadd.f32 %v1754, %v111
    %v1771 = vadd.f32 %v1755, %v116
    %v1772 = vadd.f32 %v1756, %v121
    %v1773 = vadd.f32 %v1757, %v126
    %v1774 = vadd.f32 %v1758, %v131
    %v1775 = vadd.f32 %v1759, %v136
    %v1776 = vadd.f32 %v1760, %v141
    %v1777 = vadd.f32 %v1761, %v146
    %v1778 = vadd.f32 %v1762, %v151
    %1779 = vmatpush.msra.mxu0 0.0
    %1780 = vmatpush.msra.mxu0 0.0
    %1781 = vmatpush.msra.mxu0 0.0
    %1782 = vmatpush.msra.mxu0 0.0
    %1783 = vmatpush.msra.mxu0 0.0
    %1784 = vmatpush.msra.mxu0 0.0
    %1785 = vmatpush.msra.mxu0 0.0
    %1786 = vmatpush.msra.mxu0 0.0
    %1787 = vmatpush.msra.mxu0 0.0
    %1788 = vmatpush.msra.mxu0 0.0
    %1789 = vmatpush.msra.mxu0 0.0
    %1790 = vmatpush.msra.mxu0 0.0
    %1791 = vmatpush.msra.mxu0 %v1745
    %1792 = vmatpush.msra.mxu0 %v1744
    %1793 = vmatpush.msra.mxu0 %v1743
    %1794 = vmatpush.msra.mxu0 %v1742
    %1795 = vmatmul.f32.gmra.mxu0 %v268
    %v1796 = vpop.f32.mrf.mxu0
    %v1797 = vadd.f32 0.0, %v1796
    %1798 = vmatmul.f32.gmra.mxu0 %v271
    %v1799 = vpop.f32.mrf.mxu0
    %v1800 = vadd.f32 0.0, %v1799
    %1801 = vmatmul.f32.gmra.mxu0 %v274
    %v1802 = vpop.f32.mrf.mxu0
    %v1803 = vadd.f32 0.0, %v1802
    %1804 = vmatmul.f32.gmra.mxu0 %v277
    %v1805 = vpop.f32.mrf.mxu0
    %v1806 = vadd.f32 0.0, %v1805
    %1807 = vmatmul.f32.gmra.mxu0 %v280
    %v1808 = vpop.f32.mrf.mxu0
    %v1809 = vadd.f32 0.0, %v1808
    %1810 = vmatmul.f32.gmra.mxu0 %v283
    %v1811 = vpop.f32.mrf.mxu0
    %v1812 = vadd.f32 0.0, %v1811
    %1813 = vmatmul.f32.gmra.mxu0 %v286
    %v1814 = vpop.f32.mrf.mxu0
    %v1815 = vadd.f32 0.0, %v1814
    %1816 = vmatmul.f32.gmra.mxu0 %v289
    %v1817 = vpop.f32.mrf.mxu0
    %v1818 = vadd.f32 0.0, %v1817
    %1819 = vmatmul.f32.gmra.mxu0 %v292
    %v1820 = vpop.f32.mrf.mxu0
    %v1821 = vadd.f32 0.0, %v1820
    %1822 = vmatmul.f32.gmra.mxu0 %v295
    %v1823 = vpop.f32.mrf.mxu0
    %v1824 = vadd.f32 0.0, %v1823
    %1825 = vmatmul.f32.gmra.mxu0 %v298
    %v1826 = vpop.f32.mrf.mxu0
    %v1827 = vadd.f32 0.0, %v1826
    %1828 = vmatmul.f32.gmra.mxu0 %v301
    %v1829 = vpop.f32.mrf.mxu0
    %v1830 = vadd.f32 0.0, %v1829
    %1831 = vmatmul.f32.gmra.mxu0 %v304
    %v1832 = vpop.f32.mrf.mxu0
    %v1833 = vadd.f32 0.0, %v1832
    %1834 = vmatmul.f32.gmra.mxu0 %v307
    %v1835 = vpop.f32.mrf.mxu0
    %v1836 = vadd.f32 0.0, %v1835
    %1837 = vmatmul.f32.gmra.mxu0 %v310
    %v1838 = vpop.f32.mrf.mxu0
    %v1839 = vadd.f32 0.0, %v1838
    %1840 = vmatmul.f32.gmra.mxu0 %v313
    %v1841 = vpop.f32.mrf.mxu0
    %v1842 = vadd.f32 0.0, %v1841
    %1843 = vdwg.mxu0
    %v1844 = vadd.f32 %v1763, %v1797
    %v1845 = vadd.f32 %v1764, %v1800
    %v1846 = vadd.f32 %v1765, %v1803
    %v1847 = vadd.f32 %v1766, %v1806
    %v1848 = vadd.f32 %v1767, %v1809
    %v1849 = vadd.f32 %v1768, %v1812
    %v1850 = vadd.f32 %v1769, %v1815
    %v1851 = vadd.f32 %v1770, %v1818
    %v1852 = vadd.f32 %v1771, %v1821
    %v1853 = vadd.f32 %v1772, %v1824
    %v1854 = vadd.f32 %v1773, %v1827
    %v1855 = vadd.f32 %v1774, %v1830
    %v1856 = vadd.f32 %v1775, %v1833
    %v1857 = vadd.f32 %v1776, %v1836
    %v1858 = vadd.f32 %v1777, %v1839
    %v1859 = vadd.f32 %v1778, %v1842
    %v1860 = vxor.u32 %v1844, 2147483648
    %v1861 = vxor.u32 %v1845, 2147483648
    %v1862 = vxor.u32 %v1846, 2147483648
    %v1863 = vxor.u32 %v1847, 2147483648
    %v1864 = vmul.f32 %v1860, 1.442695
    %v1865 = vpow.pop %v1864
    %v1866 = vmul.f32 %v1861, 1.442695
    %v1867 = vpow.pop %v1866
    %v1868 = vmul.f32 %v1862, 1.442695
    %v1869 = vpow.pop %v1868
    %v1870 = vmul.f32 %v1863, 1.442695
    %v1871 = vpow.pop %v1870
    %v1872 = vadd.f32 %v1865, 1.0
    %v1873 = vadd.f32 %v1867, 1.0
    %v1874 = vadd.f32 %v1869, 1.0
    %v1875 = vadd.f32 %v1871, 1.0
    %v1876 = vrcp.pop %v1872
    %v1877 = vmul.f32 %v1872, %v1876
    %v1878 = vsub.f32 1.0, %v1877
    %v1879 = vmul.f32 %v1876, %v1878
    %v1880 = vadd.f32 %v1876, %v1879
    %vm1881 = vweird.f32 %v1872
    %vm1882 = vweird.f32 %v1876
    %vm1883 = vmor %vm1881, %vm1882
    %v1884 = vsel %vm1883, %v1876, %v1880
    %v1885 = vand.u32 2147483647, %v1872
    %vm1886 = vcmp.eq.f32.partialorder %v1885, 8.507059e+37
    %v1887 = vand.u32 %v1872, 2147483648
    %v1888 = vor.u32 1.1754944e-38, %v1887
    %v1889 = vsel %vm1886, %v1888, %v1884
    %v1890 = vmul.f32 1.0, %v1889
    %v1891 = vrcp.pop %v1873
    %v1892 = vmul.f32 %v1873, %v1891
    %v1893 = vsub.f32 1.0, %v1892
    %v1894 = vmul.f32 %v1891, %v1893
    %v1895 = vadd.f32 %v1891, %v1894
    %vm1896 = vweird.f32 %v1873
    %vm1897 = vweird.f32 %v1891
    %vm1898 = vmor %vm1896, %vm1897
    %v1899 = vsel %vm1898, %v1891, %v1895
    %v1900 = vand.u32 2147483647, %v1873
    %vm1901 = vcmp.eq.f32.partialorder %v1900, 8.507059e+37
    %v1902 = vand.u32 %v1873, 2147483648
    %v1903 = vor.u32 1.1754944e-38, %v1902
    %v1904 = vsel %vm1901, %v1903, %v1899
    %v1905 = vmul.f32 1.0, %v1904
    %v1906 = vrcp.pop %v1874
    %v1907 = vmul.f32 %v1874, %v1906
    %v1908 = vsub.f32 1.0, %v1907
    %v1909 = vmul.f32 %v1906, %v1908
    %v1910 = vadd.f32 %v1906, %v1909
    %vm1911 = vweird.f32 %v1874
    %vm1912 = vweird.f32 %v1906
    %vm1913 = vmor %vm1911, %vm1912
    %v1914 = vsel %vm1913, %v1906, %v1910
    %v1915 = vand.u32 2147483647, %v1874
    %vm1916 = vcmp.eq.f32.partialorder %v1915, 8.507059e+37
    %v1917 = vand.u32 %v1874, 2147483648
    %v1918 = vor.u32 1.1754944e-38, %v1917
    %v1919 = vsel %vm1916, %v1918, %v1914
    %v1920 = vmul.f32 1.0, %v1919
    %v1921 = vrcp.pop %v1875
    %v1922 = vmul.f32 %v1875, %v1921
    %v1923 = vsub.f32 1.0, %v1922
    %v1924 = vmul.f32 %v1921, %v1923
    %v1925 = vadd.f32 %v1921, %v1924
    %vm1926 = vweird.f32 %v1875
    %vm1927 = vweird.f32 %v1921
    %vm1928 = vmor %vm1926, %vm1927
    %v1929 = vsel %vm1928, %v1921, %v1925
    %v1930 = vand.u32 2147483647, %v1875
    %vm1931 = vcmp.eq.f32.partialorder %v1930, 8.507059e+37
    %v1932 = vand.u32 %v1875, 2147483648
    %v1933 = vor.u32 1.1754944e-38, %v1932
    %v1934 = vsel %vm1931, %v1933, %v1929
    %v1935 = vmul.f32 1.0, %v1934
    %v1936 = vxor.u32 %v1848, 2147483648
    %v1937 = vxor.u32 %v1849, 2147483648
    %v1938 = vxor.u32 %v1850, 2147483648
    %v1939 = vxor.u32 %v1851, 2147483648
    %v1940 = vmul.f32 %v1936, 1.442695
    %v1941 = vpow.pop %v1940
    %v1942 = vmul.f32 %v1937, 1.442695
    %v1943 = vpow.pop %v1942
    %v1944 = vmul.f32 %v1938, 1.442695
    %v1945 = vpow.pop %v1944
    %v1946 = vmul.f32 %v1939, 1.442695
    %v1947 = vpow.pop %v1946
    %v1948 = vadd.f32 %v1941, 1.0
    %v1949 = vadd.f32 %v1943, 1.0
    %v1950 = vadd.f32 %v1945, 1.0
    %v1951 = vadd.f32 %v1947, 1.0
    %v1952 = vrcp.pop %v1948
    %v1953 = vmul.f32 %v1948, %v1952
    %v1954 = vsub.f32 1.0, %v1953
    %v1955 = vmul.f32 %v1952, %v1954
    %v1956 = vadd.f32 %v1952, %v1955
    %vm1957 = vweird.f32 %v1948
    %vm1958 = vweird.f32 %v1952
    %vm1959 = vmor %vm1957, %vm1958
    %v1960 = vsel %vm1959, %v1952, %v1956
    %v1961 = vand.u32 2147483647, %v1948
    %vm1962 = vcmp.eq.f32.partialorder %v1961, 8.507059e+37
    %v1963 = vand.u32 %v1948, 2147483648
    %v1964 = vor.u32 1.1754944e-38, %v1963
    %v1965 = vsel %vm1962, %v1964, %v1960
    %v1966 = vmul.f32 1.0, %v1965
    %v1967 = vrcp.pop %v1949
    %v1968 = vmul.f32 %v1949, %v1967
    %v1969 = vsub.f32 1.0, %v1968
    %v1970 = vmul.f32 %v1967, %v1969
    %v1971 = vadd.f32 %v1967, %v1970
    %vm1972 = vweird.f32 %v1949
    %vm1973 = vweird.f32 %v1967
    %vm1974 = vmor %vm1972, %vm1973
    %v1975 = vsel %vm1974, %v1967, %v1971
    %v1976 = vand.u32 2147483647, %v1949
    %vm1977 = vcmp.eq.f32.partialorder %v1976, 8.507059e+37
    %v1978 = vand.u32 %v1949, 2147483648
    %v1979 = vor.u32 1.1754944e-38, %v1978
    %v1980 = vsel %vm1977, %v1979, %v1975
    %v1981 = vmul.f32 1.0, %v1980
    %v1982 = vrcp.pop %v1950
    %v1983 = vmul.f32 %v1950, %v1982
    %v1984 = vsub.f32 1.0, %v1983
    %v1985 = vmul.f32 %v1982, %v1984
    %v1986 = vadd.f32 %v1982, %v1985
    %vm1987 = vweird.f32 %v1950
    %vm1988 = vweird.f32 %v1982
    %vm1989 = vmor %vm1987, %vm1988
    %v1990 = vsel %vm1989, %v1982, %v1986
    %v1991 = vand.u32 2147483647, %v1950
    %vm1992 = vcmp.eq.f32.partialorder %v1991, 8.507059e+37
    %v1993 = vand.u32 %v1950, 2147483648
    %v1994 = vor.u32 1.1754944e-38, %v1993
    %v1995 = vsel %vm1992, %v1994, %v1990
    %v1996 = vmul.f32 1.0, %v1995
    %v1997 = vrcp.pop %v1951
    %v1998 = vmul.f32 %v1951, %v1997
    %v1999 = vsub.f32 1.0, %v1998
    %v2000 = vmul.f32 %v1997, %v1999
    %v2001 = vadd.f32 %v1997, %v2000
    %vm2002 = vweird.f32 %v1951
    %vm2003 = vweird.f32 %v1997
    %vm2004 = vmor %vm2002, %vm2003
    %v2005 = vsel %vm2004, %v1997, %v2001
    %v2006 = vand.u32 2147483647, %v1951
    %vm2007 = vcmp.eq.f32.partialorder %v2006, 8.507059e+37
    %v2008 = vand.u32 %v1951, 2147483648
    %v2009 = vor.u32 1.1754944e-38, %v2008
    %v2010 = vsel %vm2007, %v2009, %v2005
    %v2011 = vmul.f32 1.0, %v2010
    %v2012 = vtanh.pop %v1852
    %v2013 = vtanh.pop %v1853
    %v2014 = vtanh.pop %v1854
    %v2015 = vtanh.pop %v1855
    %v2016 = vxor.u32 %v1856, 2147483648
    %v2017 = vxor.u32 %v1857, 2147483648
    %v2018 = vxor.u32 %v1858, 2147483648
    %v2019 = vxor.u32 %v1859, 2147483648
    %v2020 = vmul.f32 %v2016, 1.442695
    %v2021 = vpow.pop %v2020
    %v2022 = vmul.f32 %v2017, 1.442695
    %v2023 = vpow.pop %v2022
    %v2024 = vmul.f32 %v2018, 1.442695
    %v2025 = vpow.pop %v2024
    %v2026 = vmul.f32 %v2019, 1.442695
    %v2027 = vpow.pop %v2026
    %v2028 = vadd.f32 %v2021, 1.0
    %v2029 = vadd.f32 %v2023, 1.0
    %v2030 = vadd.f32 %v2025, 1.0
    %v2031 = vadd.f32 %v2027, 1.0
    %v2032 = vrcp.pop %v2028
    %v2033 = vmul.f32 %v2028, %v2032
    %v2034 = vsub.f32 1.0, %v2033
    %v2035 = vmul.f32 %v2032, %v2034
    %v2036 = vadd.f32 %v2032, %v2035
    %vm2037 = vweird.f32 %v2028
    %vm2038 = vweird.f32 %v2032
    %vm2039 = vmor %vm2037, %vm2038
    %v2040 = vsel %vm2039, %v2032, %v2036
    %v2041 = vand.u32 2147483647, %v2028
    %vm2042 = vcmp.eq.f32.partialorder %v2041, 8.507059e+37
    %v2043 = vand.u32 %v2028, 2147483648
    %v2044 = vor.u32 1.1754944e-38, %v2043
    %v2045 = vsel %vm2042, %v2044, %v2040
    %v2046 = vmul.f32 1.0, %v2045
    %v2047 = vrcp.pop %v2029
    %v2048 = vmul.f32 %v2029, %v2047
    %v2049 = vsub.f32 1.0, %v2048
    %v2050 = vmul.f32 %v2047, %v2049
    %v2051 = vadd.f32 %v2047, %v2050
    %vm2052 = vweird.f32 %v2029
    %vm2053 = vweird.f32 %v2047
    %vm2054 = vmor %vm2052, %vm2053
    %v2055 = vsel %vm2054, %v2047, %v2051
    %v2056 = vand.u32 2147483647, %v2029
    %vm2057 = vcmp.eq.f32.partialorder %v2056, 8.507059e+37
    %v2058 = vand.u32 %v2029, 2147483648
    %v2059 = vor.u32 1.1754944e-38, %v2058
    %v2060 = vsel %vm2057, %v2059, %v2055
    %v2061 = vmul.f32 1.0, %v2060
    %v2062 = vrcp.pop %v2030
    %v2063 = vmul.f32 %v2030, %v2062
    %v2064 = vsub.f32 1.0, %v2063
    %v2065 = vmul.f32 %v2062, %v2064
    %v2066 = vadd.f32 %v2062, %v2065
    %vm2067 = vweird.f32 %v2030
    %vm2068 = vweird.f32 %v2062
    %vm2069 = vmor %vm2067, %vm2068
    %v2070 = vsel %vm2069, %v2062, %v2066
    %v2071 = vand.u32 2147483647, %v2030
    %vm2072 = vcmp.eq.f32.partialorder %v2071, 8.507059e+37
    %v2073 = vand.u32 %v2030, 2147483648
    %v2074 = vor.u32 1.1754944e-38, %v2073
    %v2075 = vsel %vm2072, %v2074, %v2070
    %v2076 = vmul.f32 1.0, %v2075
    %v2077 = vrcp.pop %v2031
    %v2078 = vmul.f32 %v2031, %v2077
    %v2079 = vsub.f32 1.0, %v2078
    %v2080 = vmul.f32 %v2077, %v2079
    %v2081 = vadd.f32 %v2077, %v2080
    %vm2082 = vweird.f32 %v2031
    %vm2083 = vweird.f32 %v2077
    %vm2084 = vmor %vm2082, %vm2083
    %v2085 = vsel %vm2084, %v2077, %v2081
    %v2086 = vand.u32 2147483647, %v2031
    %vm2087 = vcmp.eq.f32.partialorder %v2086, 8.507059e+37
    %v2088 = vand.u32 %v2031, 2147483648
    %v2089 = vor.u32 1.1754944e-38, %v2088
    %v2090 = vsel %vm2087, %v2089, %v2085
    %v2091 = vmul.f32 1.0, %v2090
    %v2092 = vmul.f32 %v1966, %v1734
    %v2093 = vmul.f32 %v1981, %v1735
    %v2094 = vmul.f32 %v1996, %v1736
    %v2095 = vmul.f32 %v2011, %v1737
    %v2096 = vmul.f32 %v1890, %v2012
    %v2097 = vmul.f32 %v1905, %v2013
    %v2098 = vmul.f32 %v1920, %v2014
    %v2099 = vmul.f32 %v1935, %v2015
    %v2100 = vadd.f32 %v2092, %v2096
    %v2101 = vadd.f32 %v2093, %v2097
    %v2102 = vadd.f32 %v2094, %v2098
    %v2103 = vadd.f32 %v2095, %v2099
    %v2104 = vtanh.pop %v2100
    %v2105 = vtanh.pop %v2101
    %v2106 = vtanh.pop %v2102
    %v2107 = vtanh.pop %v2103
    %v2108 = vmul.f32 %v2046, %v2104
    %v2109 = vmul.f32 %v2061, %v2105
    %v2110 = vmul.f32 %v2076, %v2106
    %v2111 = vmul.f32 %v2091, %v2107
    %v2112 = vperm.slane %v24, 5
    %v2113 = vmul.f32 %v2112, %v157
    %v2114 = vmul.f32 %v2112, %v162
    %v2115 = vmul.f32 %v2112, %v167
    %v2116 = vmul.f32 %v2112, %v172
    %v2117 = vmul.f32 %v2112, %v177
    %v2118 = vmul.f32 %v2112, %v182
    %v2119 = vmul.f32 %v2112, %v187
    %v2120 = vmul.f32 %v2112, %v192
    %v2121 = vmul.f32 %v2112, %v197
    %v2122 = vmul.f32 %v2112, %v202
    %v2123 = vmul.f32 %v2112, %v207
    %v2124 = vmul.f32 %v2112, %v212
    %v2125 = vmul.f32 %v2112, %v217
    %v2126 = vmul.f32 %v2112, %v222
    %v2127 = vmul.f32 %v2112, %v227
    %v2128 = vmul.f32 %v2112, %v232
    %v2129 = vadd.f32 %v2113, %v76
    %v2130 = vadd.f32 %v2114, %v81
    %v2131 = vadd.f32 %v2115, %v86
    %v2132 = vadd.f32 %v2116, %v91
    %v2133 = vadd.f32 %v2117, %v96
    %v2134 = vadd.f32 %v2118, %v101
    %v2135 = vadd.f32 %v2119, %v106
    %v2136 = vadd.f32 %v2120, %v111
    %v2137 = vadd.f32 %v2121, %v116
    %v2138 = vadd.f32 %v2122, %v121
    %v2139 = vadd.f32 %v2123, %v126
    %v2140 = vadd.f32 %v2124, %v131
    %v2141 = vadd.f32 %v2125, %v136
    %v2142 = vadd.f32 %v2126, %v141
    %v2143 = vadd.f32 %v2127, %v146
    %v2144 = vadd.f32 %v2128, %v151
    %2145 = vmatpush.msra.mxu0 0.0
    %2146 = vmatpush.msra.mxu0 0.0
    %2147 = vmatpush.msra.mxu0 0.0
    %2148 = vmatpush.msra.mxu0 0.0
    %2149 = vmatpush.msra.mxu0 0.0
    %2150 = vmatpush.msra.mxu0 0.0
    %2151 = vmatpush.msra.mxu0 0.0
    %2152 = vmatpush.msra.mxu0 0.0
    %2153 = vmatpush.msra.mxu0 0.0
    %2154 = vmatpush.msra.mxu0 0.0
    %2155 = vmatpush.msra.mxu0 0.0
    %2156 = vmatpush.msra.mxu0 0.0
    %2157 = vmatpush.msra.mxu0 %v2111
    %2158 = vmatpush.msra.mxu0 %v2110
    %2159 = vmatpush.msra.mxu0 %v2109
    %2160 = vmatpush.msra.mxu0 %v2108
    %2161 = vmatmul.f32.gmra.mxu0 %v268
    %v2162 = vpop.f32.mrf.mxu0
    %v2163 = vadd.f32 0.0, %v2162
    %2164 = vmatmul.f32.gmra.mxu0 %v271
    %v2165 = vpop.f32.mrf.mxu0
    %v2166 = vadd.f32 0.0, %v2165
    %2167 = vmatmul.f32.gmra.mxu0 %v274
    %v2168 = vpop.f32.mrf.mxu0
    %v2169 = vadd.f32 0.0, %v2168
    %2170 = vmatmul.f32.gmra.mxu0 %v277
    %v2171 = vpop.f32.mrf.mxu0
    %v2172 = vadd.f32 0.0, %v2171
    %2173 = vmatmul.f32.gmra.mxu0 %v280
    %v2174 = vpop.f32.mrf.mxu0
    %v2175 = vadd.f32 0.0, %v2174
    %2176 = vmatmul.f32.gmra.mxu0 %v283
    %v2177 = vpop.f32.mrf.mxu0
    %v2178 = vadd.f32 0.0, %v2177
    %2179 = vmatmul.f32.gmra.mxu0 %v286
    %v2180 = vpop.f32.mrf.mxu0
    %v2181 = vadd.f32 0.0, %v2180
    %2182 = vmatmul.f32.gmra.mxu0 %v289
    %v2183 = vpop.f32.mrf.mxu0
    %v2184 = vadd.f32 0.0, %v2183
    %2185 = vmatmul.f32.gmra.mxu0 %v292
    %v2186 = vpop.f32.mrf.mxu0
    %v2187 = vadd.f32 0.0, %v2186
    %2188 = vmatmul.f32.gmra.mxu0 %v295
    %v2189 = vpop.f32.mrf.mxu0
    %v2190 = vadd.f32 0.0, %v2189
    %2191 = vmatmul.f32.gmra.mxu0 %v298
    %v2192 = vpop.f32.mrf.mxu0
    %v2193 = vadd.f32 0.0, %v2192
    %2194 = vmatmul.f32.gmra.mxu0 %v301
    %v2195 = vpop.f32.mrf.mxu0
    %v2196 = vadd.f32 0.0, %v2195
    %2197 = vmatmul.f32.gmra.mxu0 %v304
    %v2198 = vpop.f32.mrf.mxu0
    %v2199 = vadd.f32 0.0, %v2198
    %2200 = vmatmul.f32.gmra.mxu0 %v307
    %v2201 = vpop.f32.mrf.mxu0
    %v2202 = vadd.f32 0.0, %v2201
    %2203 = vmatmul.f32.gmra.mxu0 %v310
    %v2204 = vpop.f32.mrf.mxu0
    %v2205 = vadd.f32 0.0, %v2204
    %2206 = vmatmul.f32.gmra.mxu0 %v313
    %v2207 = vpop.f32.mrf.mxu0
    %v2208 = vadd.f32 0.0, %v2207
    %2209 = vdwg.mxu0
    %v2210 = vadd.f32 %v2129, %v2163
    %v2211 = vadd.f32 %v2130, %v2166
    %v2212 = vadd.f32 %v2131, %v2169
    %v2213 = vadd.f32 %v2132, %v2172
    %v2214 = vadd.f32 %v2133, %v2175
    %v2215 = vadd.f32 %v2134, %v2178
    %v2216 = vadd.f32 %v2135, %v2181
    %v2217 = vadd.f32 %v2136, %v2184
    %v2218 = vadd.f32 %v2137, %v2187
    %v2219 = vadd.f32 %v2138, %v2190
    %v2220 = vadd.f32 %v2139, %v2193
    %v2221 = vadd.f32 %v2140, %v2196
    %v2222 = vadd.f32 %v2141, %v2199
    %v2223 = vadd.f32 %v2142, %v2202
    %v2224 = vadd.f32 %v2143, %v2205
    %v2225 = vadd.f32 %v2144, %v2208
    %v2226 = vxor.u32 %v2210, 2147483648
    %v2227 = vxor.u32 %v2211, 2147483648
    %v2228 = vxor.u32 %v2212, 2147483648
    %v2229 = vxor.u32 %v2213, 2147483648
    %v2230 = vmul.f32 %v2226, 1.442695
    %v2231 = vpow.pop %v2230
    %v2232 = vmul.f32 %v2227, 1.442695
    %v2233 = vpow.pop %v2232
    %v2234 = vmul.f32 %v2228, 1.442695
    %v2235 = vpow.pop %v2234
    %v2236 = vmul.f32 %v2229, 1.442695
    %v2237 = vpow.pop %v2236
    %v2238 = vadd.f32 %v2231, 1.0
    %v2239 = vadd.f32 %v2233, 1.0
    %v2240 = vadd.f32 %v2235, 1.0
    %v2241 = vadd.f32 %v2237, 1.0
    %v2242 = vrcp.pop %v2238
    %v2243 = vmul.f32 %v2238, %v2242
    %v2244 = vsub.f32 1.0, %v2243
    %v2245 = vmul.f32 %v2242, %v2244
    %v2246 = vadd.f32 %v2242, %v2245
    %vm2247 = vweird.f32 %v2238
    %vm2248 = vweird.f32 %v2242
    %vm2249 = vmor %vm2247, %vm2248
    %v2250 = vsel %vm2249, %v2242, %v2246
    %v2251 = vand.u32 2147483647, %v2238
    %vm2252 = vcmp.eq.f32.partialorder %v2251, 8.507059e+37
    %v2253 = vand.u32 %v2238, 2147483648
    %v2254 = vor.u32 1.1754944e-38, %v2253
    %v2255 = vsel %vm2252, %v2254, %v2250
    %v2256 = vmul.f32 1.0, %v2255
    %v2257 = vrcp.pop %v2239
    %v2258 = vmul.f32 %v2239, %v2257
    %v2259 = vsub.f32 1.0, %v2258
    %v2260 = vmul.f32 %v2257, %v2259
    %v2261 = vadd.f32 %v2257, %v2260
    %vm2262 = vweird.f32 %v2239
    %vm2263 = vweird.f32 %v2257
    %vm2264 = vmor %vm2262, %vm2263
    %v2265 = vsel %vm2264, %v2257, %v2261
    %v2266 = vand.u32 2147483647, %v2239
    %vm2267 = vcmp.eq.f32.partialorder %v2266, 8.507059e+37
    %v2268 = vand.u32 %v2239, 2147483648
    %v2269 = vor.u32 1.1754944e-38, %v2268
    %v2270 = vsel %vm2267, %v2269, %v2265
    %v2271 = vmul.f32 1.0, %v2270
    %v2272 = vrcp.pop %v2240
    %v2273 = vmul.f32 %v2240, %v2272
    %v2274 = vsub.f32 1.0, %v2273
    %v2275 = vmul.f32 %v2272, %v2274
    %v2276 = vadd.f32 %v2272, %v2275
    %vm2277 = vweird.f32 %v2240
    %vm2278 = vweird.f32 %v2272
    %vm2279 = vmor %vm2277, %vm2278
    %v2280 = vsel %vm2279, %v2272, %v2276
    %v2281 = vand.u32 2147483647, %v2240
    %vm2282 = vcmp.eq.f32.partialorder %v2281, 8.507059e+37
    %v2283 = vand.u32 %v2240, 2147483648
    %v2284 = vor.u32 1.1754944e-38, %v2283
    %v2285 = vsel %vm2282, %v2284, %v2280
    %v2286 = vmul.f32 1.0, %v2285
    %v2287 = vrcp.pop %v2241
    %v2288 = vmul.f32 %v2241, %v2287
    %v2289 = vsub.f32 1.0, %v2288
    %v2290 = vmul.f32 %v2287, %v2289
    %v2291 = vadd.f32 %v2287, %v2290
    %vm2292 = vweird.f32 %v2241
    %vm2293 = vweird.f32 %v2287
    %vm2294 = vmor %vm2292, %vm2293
    %v2295 = vsel %vm2294, %v2287, %v2291
    %v2296 = vand.u32 2147483647, %v2241
    %vm2297 = vcmp.eq.f32.partialorder %v2296, 8.507059e+37
    %v2298 = vand.u32 %v2241, 2147483648
    %v2299 = vor.u32 1.1754944e-38, %v2298
    %v2300 = vsel %vm2297, %v2299, %v2295
    %v2301 = vmul.f32 1.0, %v2300
    %v2302 = vxor.u32 %v2214, 2147483648
    %v2303 = vxor.u32 %v2215, 2147483648
    %v2304 = vxor.u32 %v2216, 2147483648
    %v2305 = vxor.u32 %v2217, 2147483648
    %v2306 = vmul.f32 %v2302, 1.442695
    %v2307 = vpow.pop %v2306
    %v2308 = vmul.f32 %v2303, 1.442695
    %v2309 = vpow.pop %v2308
    %v2310 = vmul.f32 %v2304, 1.442695
    %v2311 = vpow.pop %v2310
    %v2312 = vmul.f32 %v2305, 1.442695
    %v2313 = vpow.pop %v2312
    %v2314 = vadd.f32 %v2307, 1.0
    %v2315 = vadd.f32 %v2309, 1.0
    %v2316 = vadd.f32 %v2311, 1.0
    %v2317 = vadd.f32 %v2313, 1.0
    %v2318 = vrcp.pop %v2314
    %v2319 = vmul.f32 %v2314, %v2318
    %v2320 = vsub.f32 1.0, %v2319
    %v2321 = vmul.f32 %v2318, %v2320
    %v2322 = vadd.f32 %v2318, %v2321
    %vm2323 = vweird.f32 %v2314
    %vm2324 = vweird.f32 %v2318
    %vm2325 = vmor %vm2323, %vm2324
    %v2326 = vsel %vm2325, %v2318, %v2322
    %v2327 = vand.u32 2147483647, %v2314
    %vm2328 = vcmp.eq.f32.partialorder %v2327, 8.507059e+37
    %v2329 = vand.u32 %v2314, 2147483648
    %v2330 = vor.u32 1.1754944e-38, %v2329
    %v2331 = vsel %vm2328, %v2330, %v2326
    %v2332 = vmul.f32 1.0, %v2331
    %v2333 = vrcp.pop %v2315
    %v2334 = vmul.f32 %v2315, %v2333
    %v2335 = vsub.f32 1.0, %v2334
    %v2336 = vmul.f32 %v2333, %v2335
    %v2337 = vadd.f32 %v2333, %v2336
    %vm2338 = vweird.f32 %v2315
    %vm2339 = vweird.f32 %v2333
    %vm2340 = vmor %vm2338, %vm2339
    %v2341 = vsel %vm2340, %v2333, %v2337
    %v2342 = vand.u32 2147483647, %v2315
    %vm2343 = vcmp.eq.f32.partialorder %v2342, 8.507059e+37
    %v2344 = vand.u32 %v2315, 2147483648
    %v2345 = vor.u32 1.1754944e-38, %v2344
    %v2346 = vsel %vm2343, %v2345, %v2341
    %v2347 = vmul.f32 1.0, %v2346
    %v2348 = vrcp.pop %v2316
    %v2349 = vmul.f32 %v2316, %v2348
    %v2350 = vsub.f32 1.0, %v2349
    %v2351 = vmul.f32 %v2348, %v2350
    %v2352 = vadd.f32 %v2348, %v2351
    %vm2353 = vweird.f32 %v2316
    %vm2354 = vweird.f32 %v2348
    %vm2355 = vmor %vm2353, %vm2354
    %v2356 = vsel %vm2355, %v2348, %v2352
    %v2357 = vand.u32 2147483647, %v2316
    %vm2358 = vcmp.eq.f32.partialorder %v2357, 8.507059e+37
    %v2359 = vand.u32 %v2316, 2147483648
    %v2360 = vor.u32 1.1754944e-38, %v2359
    %v2361 = vsel %vm2358, %v2360, %v2356
    %v2362 = vmul.f32 1.0, %v2361
    %v2363 = vrcp.pop %v2317
    %v2364 = vmul.f32 %v2317, %v2363
    %v2365 = vsub.f32 1.0, %v2364
    %v2366 = vmul.f32 %v2363, %v2365
    %v2367 = vadd.f32 %v2363, %v2366
    %vm2368 = vweird.f32 %v2317
    %vm2369 = vweird.f32 %v2363
    %vm2370 = vmor %vm2368, %vm2369
    %v2371 = vsel %vm2370, %v2363, %v2367
    %v2372 = vand.u32 2147483647, %v2317
    %vm2373 = vcmp.eq.f32.partialorder %v2372, 8.507059e+37
    %v2374 = vand.u32 %v2317, 2147483648
    %v2375 = vor.u32 1.1754944e-38, %v2374
    %v2376 = vsel %vm2373, %v2375, %v2371
    %v2377 = vmul.f32 1.0, %v2376
    %v2378 = vtanh.pop %v2218
    %v2379 = vtanh.pop %v2219
    %v2380 = vtanh.pop %v2220
    %v2381 = vtanh.pop %v2221
    %v2382 = vxor.u32 %v2222, 2147483648
    %v2383 = vxor.u32 %v2223, 2147483648
    %v2384 = vxor.u32 %v2224, 2147483648
    %v2385 = vxor.u32 %v2225, 2147483648
    %v2386 = vmul.f32 %v2382, 1.442695
    %v2387 = vpow.pop %v2386
    %v2388 = vmul.f32 %v2383, 1.442695
    %v2389 = vpow.pop %v2388
    %v2390 = vmul.f32 %v2384, 1.442695
    %v2391 = vpow.pop %v2390
    %v2392 = vmul.f32 %v2385, 1.442695
    %v2393 = vpow.pop %v2392
    %v2394 = vadd.f32 %v2387, 1.0
    %v2395 = vadd.f32 %v2389, 1.0
    %v2396 = vadd.f32 %v2391, 1.0
    %v2397 = vadd.f32 %v2393, 1.0
    %v2398 = vrcp.pop %v2394
    %v2399 = vmul.f32 %v2394, %v2398
    %v2400 = vsub.f32 1.0, %v2399
    %v2401 = vmul.f32 %v2398, %v2400
    %v2402 = vadd.f32 %v2398, %v2401
    %vm2403 = vweird.f32 %v2394
    %vm2404 = vweird.f32 %v2398
    %vm2405 = vmor %vm2403, %vm2404
    %v2406 = vsel %vm2405, %v2398, %v2402
    %v2407 = vand.u32 2147483647, %v2394
    %vm2408 = vcmp.eq.f32.partialorder %v2407, 8.507059e+37
    %v2409 = vand.u32 %v2394, 2147483648
    %v2410 = vor.u32 1.1754944e-38, %v2409
    %v2411 = vsel %vm2408, %v2410, %v2406
    %v2412 = vmul.f32 1.0, %v2411
    %v2413 = vrcp.pop %v2395
    %v2414 = vmul.f32 %v2395, %v2413
    %v2415 = vsub.f32 1.0, %v2414
    %v2416 = vmul.f32 %v2413, %v2415
    %v2417 = vadd.f32 %v2413, %v2416
    %vm2418 = vweird.f32 %v2395
    %vm2419 = vweird.f32 %v2413
    %vm2420 = vmor %vm2418, %vm2419
    %v2421 = vsel %vm2420, %v2413, %v2417
    %v2422 = vand.u32 2147483647, %v2395
    %vm2423 = vcmp.eq.f32.partialorder %v2422, 8.507059e+37
    %v2424 = vand.u32 %v2395, 2147483648
    %v2425 = vor.u32 1.1754944e-38, %v2424
    %v2426 = vsel %vm2423, %v2425, %v2421
    %v2427 = vmul.f32 1.0, %v2426
    %v2428 = vrcp.pop %v2396
    %v2429 = vmul.f32 %v2396, %v2428
    %v2430 = vsub.f32 1.0, %v2429
    %v2431 = vmul.f32 %v2428, %v2430
    %v2432 = vadd.f32 %v2428, %v2431
    %vm2433 = vweird.f32 %v2396
    %vm2434 = vweird.f32 %v2428
    %vm2435 = vmor %vm2433, %vm2434
    %v2436 = vsel %vm2435, %v2428, %v2432
    %v2437 = vand.u32 2147483647, %v2396
    %vm2438 = vcmp.eq.f32.partialorder %v2437, 8.507059e+37
    %v2439 = vand.u32 %v2396, 2147483648
    %v2440 = vor.u32 1.1754944e-38, %v2439
    %v2441 = vsel %vm2438, %v2440, %v2436
    %v2442 = vmul.f32 1.0, %v2441
    %v2443 = vrcp.pop %v2397
    %v2444 = vmul.f32 %v2397, %v2443
    %v2445 = vsub.f32 1.0, %v2444
    %v2446 = vmul.f32 %v2443, %v2445
    %v2447 = vadd.f32 %v2443, %v2446
    %vm2448 = vweird.f32 %v2397
    %vm2449 = vweird.f32 %v2443
    %vm2450 = vmor %vm2448, %vm2449
    %v2451 = vsel %vm2450, %v2443, %v2447
    %v2452 = vand.u32 2147483647, %v2397
    %vm2453 = vcmp.eq.f32.partialorder %v2452, 8.507059e+37
    %v2454 = vand.u32 %v2397, 2147483648
    %v2455 = vor.u32 1.1754944e-38, %v2454
    %v2456 = vsel %vm2453, %v2455, %v2451
    %v2457 = vmul.f32 1.0, %v2456
    %v2458 = vmul.f32 %v2332, %v2100
    %v2459 = vmul.f32 %v2347, %v2101
    %v2460 = vmul.f32 %v2362, %v2102
    %v2461 = vmul.f32 %v2377, %v2103
    %v2462 = vmul.f32 %v2256, %v2378
    %v2463 = vmul.f32 %v2271, %v2379
    %v2464 = vmul.f32 %v2286, %v2380
    %v2465 = vmul.f32 %v2301, %v2381
    %v2466 = vadd.f32 %v2458, %v2462
    %v2467 = vadd.f32 %v2459, %v2463
    %v2468 = vadd.f32 %v2460, %v2464
    %v2469 = vadd.f32 %v2461, %v2465
    %v2470 = vtanh.pop %v2466
    %v2471 = vtanh.pop %v2467
    %v2472 = vtanh.pop %v2468
    %v2473 = vtanh.pop %v2469
    %v2474 = vmul.f32 %v2412, %v2470
    %v2475 = vmul.f32 %v2427, %v2471
    %v2476 = vmul.f32 %v2442, %v2472
    %v2477 = vmul.f32 %v2457, %v2473
    %v2478 = vperm.slane %v24, 6
    %v2479 = vmul.f32 %v2478, %v157
    %v2480 = vmul.f32 %v2478, %v162
    %v2481 = vmul.f32 %v2478, %v167
    %v2482 = vmul.f32 %v2478, %v172
    %v2483 = vmul.f32 %v2478, %v177
    %v2484 = vmul.f32 %v2478, %v182
    %v2485 = vmul.f32 %v2478, %v187
    %v2486 = vmul.f32 %v2478, %v192
    %v2487 = vmul.f32 %v2478, %v197
    %v2488 = vmul.f32 %v2478, %v202
    %v2489 = vmul.f32 %v2478, %v207
    %v2490 = vmul.f32 %v2478, %v212
    %v2491 = vmul.f32 %v2478, %v217
    %v2492 = vmul.f32 %v2478, %v222
    %v2493 = vmul.f32 %v2478, %v227
    %v2494 = vmul.f32 %v2478, %v232
    %v2495 = vadd.f32 %v2479, %v76
    %v2496 = vadd.f32 %v2480, %v81
    %v2497 = vadd.f32 %v2481, %v86
    %v2498 = vadd.f32 %v2482, %v91
    %v2499 = vadd.f32 %v2483, %v96
    %v2500 = vadd.f32 %v2484, %v101
    %v2501 = vadd.f32 %v2485, %v106
    %v2502 = vadd.f32 %v2486, %v111
    %v2503 = vadd.f32 %v2487, %v116
    %v2504 = vadd.f32 %v2488, %v121
    %v2505 = vadd.f32 %v2489, %v126
    %v2506 = vadd.f32 %v2490, %v131
    %v2507 = vadd.f32 %v2491, %v136
    %v2508 = vadd.f32 %v2492, %v141
    %v2509 = vadd.f32 %v2493, %v146
    %v2510 = vadd.f32 %v2494, %v151
    %2511 = vmatpush.msra.mxu0 0.0
    %2512 = vmatpush.msra.mxu0 0.0
    %2513 = vmatpush.msra.mxu0 0.0
    %2514 = vmatpush.msra.mxu0 0.0
    %2515 = vmatpush.msra.mxu0 0.0
    %2516 = vmatpush.msra.mxu0 0.0
    %2517 = vmatpush.msra.mxu0 0.0
    %2518 = vmatpush.msra.mxu0 0.0
    %2519 = vmatpush.msra.mxu0 0.0
    %2520 = vmatpush.msra.mxu0 0.0
    %2521 = vmatpush.msra.mxu0 0.0
    %2522 = vmatpush.msra.mxu0 0.0
    %2523 = vmatpush.msra.mxu0 %v2477
    %2524 = vmatpush.msra.mxu0 %v2476
    %2525 = vmatpush.msra.mxu0 %v2475
    %2526 = vmatpush.msra.mxu0 %v2474
    %2527 = vmatmul.f32.gmra.mxu0 %v268
    %v2528 = vpop.f32.mrf.mxu0
    %v2529 = vadd.f32 0.0, %v2528
    %2530 = vmatmul.f32.gmra.mxu0 %v271
    %v2531 = vpop.f32.mrf.mxu0
    %v2532 = vadd.f32 0.0, %v2531
    %2533 = vmatmul.f32.gmra.mxu0 %v274
    %v2534 = vpop.f32.mrf.mxu0
    %v2535 = vadd.f32 0.0, %v2534
    %2536 = vmatmul.f32.gmra.mxu0 %v277
    %v2537 = vpop.f32.mrf.mxu0
    %v2538 = vadd.f32 0.0, %v2537
    %2539 = vmatmul.f32.gmra.mxu0 %v280
    %v2540 = vpop.f32.mrf.mxu0
    %v2541 = vadd.f32 0.0, %v2540
    %2542 = vmatmul.f32.gmra.mxu0 %v283
    %v2543 = vpop.f32.mrf.mxu0
    %v2544 = vadd.f32 0.0, %v2543
    %2545 = vmatmul.f32.gmra.mxu0 %v286
    %v2546 = vpop.f32.mrf.mxu0
    %v2547 = vadd.f32 0.0, %v2546
    %2548 = vmatmul.f32.gmra.mxu0 %v289
    %v2549 = vpop.f32.mrf.mxu0
    %v2550 = vadd.f32 0.0, %v2549
    %2551 = vmatmul.f32.gmra.mxu0 %v292
    %v2552 = vpop.f32.mrf.mxu0
    %v2553 = vadd.f32 0.0, %v2552
    %2554 = vmatmul.f32.gmra.mxu0 %v295
    %v2555 = vpop.f32.mrf.mxu0
    %v2556 = vadd.f32 0.0, %v2555
    %2557 = vmatmul.f32.gmra.mxu0 %v298
    %v2558 = vpop.f32.mrf.mxu0
    %v2559 = vadd.f32 0.0, %v2558
    %2560 = vmatmul.f32.gmra.mxu0 %v301
    %v2561 = vpop.f32.mrf.mxu0
    %v2562 = vadd.f32 0.0, %v2561
    %2563 = vmatmul.f32.gmra.mxu0 %v304
    %v2564 = vpop.f32.mrf.mxu0
    %v2565 = vadd.f32 0.0, %v2564
    %2566 = vmatmul.f32.gmra.mxu0 %v307
    %v2567 = vpop.f32.mrf.mxu0
    %v2568 = vadd.f32 0.0, %v2567
    %2569 = vmatmul.f32.gmra.mxu0 %v310
    %v2570 = vpop.f32.mrf.mxu0
    %v2571 = vadd.f32 0.0, %v2570
    %2572 = vmatmul.f32.gmra.mxu0 %v313
    %v2573 = vpop.f32.mrf.mxu0
    %v2574 = vadd.f32 0.0, %v2573
    %2575 = vdwg.mxu0
    %v2576 = vadd.f32 %v2495, %v2529
    %v2577 = vadd.f32 %v2496, %v2532
    %v2578 = vadd.f32 %v2497, %v2535
    %v2579 = vadd.f32 %v2498, %v2538
    %v2580 = vadd.f32 %v2499, %v2541
    %v2581 = vadd.f32 %v2500, %v2544
    %v2582 = vadd.f32 %v2501, %v2547
    %v2583 = vadd.f32 %v2502, %v2550
    %v2584 = vadd.f32 %v2503, %v2553
    %v2585 = vadd.f32 %v2504, %v2556
    %v2586 = vadd.f32 %v2505, %v2559
    %v2587 = vadd.f32 %v2506, %v2562
    %v2588 = vadd.f32 %v2507, %v2565
    %v2589 = vadd.f32 %v2508, %v2568
    %v2590 = vadd.f32 %v2509, %v2571
    %v2591 = vadd.f32 %v2510, %v2574
    %v2592 = vxor.u32 %v2576, 2147483648
    %v2593 = vxor.u32 %v2577, 2147483648
    %v2594 = vxor.u32 %v2578, 2147483648
    %v2595 = vxor.u32 %v2579, 2147483648
    %v2596 = vmul.f32 %v2592, 1.442695
    %v2597 = vpow.pop %v2596
    %v2598 = vmul.f32 %v2593, 1.442695
    %v2599 = vpow.pop %v2598
    %v2600 = vmul.f32 %v2594, 1.442695
    %v2601 = vpow.pop %v2600
    %v2602 = vmul.f32 %v2595, 1.442695
    %v2603 = vpow.pop %v2602
    %v2604 = vadd.f32 %v2597, 1.0
    %v2605 = vadd.f32 %v2599, 1.0
    %v2606 = vadd.f32 %v2601, 1.0
    %v2607 = vadd.f32 %v2603, 1.0
    %v2608 = vrcp.pop %v2604
    %v2609 = vmul.f32 %v2604, %v2608
    %v2610 = vsub.f32 1.0, %v2609
    %v2611 = vmul.f32 %v2608, %v2610
    %v2612 = vadd.f32 %v2608, %v2611
    %vm2613 = vweird.f32 %v2604
    %vm2614 = vweird.f32 %v2608
    %vm2615 = vmor %vm2613, %vm2614
    %v2616 = vsel %vm2615, %v2608, %v2612
    %v2617 = vand.u32 2147483647, %v2604
    %vm2618 = vcmp.eq.f32.partialorder %v2617, 8.507059e+37
    %v2619 = vand.u32 %v2604, 2147483648
    %v2620 = vor.u32 1.1754944e-38, %v2619
    %v2621 = vsel %vm2618, %v2620, %v2616
    %v2622 = vmul.f32 1.0, %v2621
    %v2623 = vrcp.pop %v2605
    %v2624 = vmul.f32 %v2605, %v2623
    %v2625 = vsub.f32 1.0, %v2624
    %v2626 = vmul.f32 %v2623, %v2625
    %v2627 = vadd.f32 %v2623, %v2626
    %vm2628 = vweird.f32 %v2605
    %vm2629 = vweird.f32 %v2623
    %vm2630 = vmor %vm2628, %vm2629
    %v2631 = vsel %vm2630, %v2623, %v2627
    %v2632 = vand.u32 2147483647, %v2605
    %vm2633 = vcmp.eq.f32.partialorder %v2632, 8.507059e+37
    %v2634 = vand.u32 %v2605, 2147483648
    %v2635 = vor.u32 1.1754944e-38, %v2634
    %v2636 = vsel %vm2633, %v2635, %v2631
    %v2637 = vmul.f32 1.0, %v2636
    %v2638 = vrcp.pop %v2606
    %v2639 = vmul.f32 %v2606, %v2638
    %v2640 = vsub.f32 1.0, %v2639
    %v2641 = vmul.f32 %v2638, %v2640
    %v2642 = vadd.f32 %v2638, %v2641
    %vm2643 = vweird.f32 %v2606
    %vm2644 = vweird.f32 %v2638
    %vm2645 = vmor %vm2643, %vm2644
    %v2646 = vsel %vm2645, %v2638, %v2642
    %v2647 = vand.u32 2147483647, %v2606
    %vm2648 = vcmp.eq.f32.partialorder %v2647, 8.507059e+37
    %v2649 = vand.u32 %v2606, 2147483648
    %v2650 = vor.u32 1.1754944e-38, %v2649
    %v2651 = vsel %vm2648, %v2650, %v2646
    %v2652 = vmul.f32 1.0, %v2651
    %v2653 = vrcp.pop %v2607
    %v2654 = vmul.f32 %v2607, %v2653
    %v2655 = vsub.f32 1.0, %v2654
    %v2656 = vmul.f32 %v2653, %v2655
    %v2657 = vadd.f32 %v2653, %v2656
    %vm2658 = vweird.f32 %v2607
    %vm2659 = vweird.f32 %v2653
    %vm2660 = vmor %vm2658, %vm2659
    %v2661 = vsel %vm2660, %v2653, %v2657
    %v2662 = vand.u32 2147483647, %v2607
    %vm2663 = vcmp.eq.f32.partialorder %v2662, 8.507059e+37
    %v2664 = vand.u32 %v2607, 2147483648
    %v2665 = vor.u32 1.1754944e-38, %v2664
    %v2666 = vsel %vm2663, %v2665, %v2661
    %v2667 = vmul.f32 1.0, %v2666
    %v2668 = vxor.u32 %v2580, 2147483648
    %v2669 = vxor.u32 %v2581, 2147483648
    %v2670 = vxor.u32 %v2582, 2147483648
    %v2671 = vxor.u32 %v2583, 2147483648
    %v2672 = vmul.f32 %v2668, 1.442695
    %v2673 = vpow.pop %v2672
    %v2674 = vmul.f32 %v2669, 1.442695
    %v2675 = vpow.pop %v2674
    %v2676 = vmul.f32 %v2670, 1.442695
    %v2677 = vpow.pop %v2676
    %v2678 = vmul.f32 %v2671, 1.442695
    %v2679 = vpow.pop %v2678
    %v2680 = vadd.f32 %v2673, 1.0
    %v2681 = vadd.f32 %v2675, 1.0
    %v2682 = vadd.f32 %v2677, 1.0
    %v2683 = vadd.f32 %v2679, 1.0
    %v2684 = vrcp.pop %v2680
    %v2685 = vmul.f32 %v2680, %v2684
    %v2686 = vsub.f32 1.0, %v2685
    %v2687 = vmul.f32 %v2684, %v2686
    %v2688 = vadd.f32 %v2684, %v2687
    %vm2689 = vweird.f32 %v2680
    %vm2690 = vweird.f32 %v2684
    %vm2691 = vmor %vm2689, %vm2690
    %v2692 = vsel %vm2691, %v2684, %v2688
    %v2693 = vand.u32 2147483647, %v2680
    %vm2694 = vcmp.eq.f32.partialorder %v2693, 8.507059e+37
    %v2695 = vand.u32 %v2680, 2147483648
    %v2696 = vor.u32 1.1754944e-38, %v2695
    %v2697 = vsel %vm2694, %v2696, %v2692
    %v2698 = vmul.f32 1.0, %v2697
    %v2699 = vrcp.pop %v2681
    %v2700 = vmul.f32 %v2681, %v2699
    %v2701 = vsub.f32 1.0, %v2700
    %v2702 = vmul.f32 %v2699, %v2701
    %v2703 = vadd.f32 %v2699, %v2702
    %vm2704 = vweird.f32 %v2681
    %vm2705 = vweird.f32 %v2699
    %vm2706 = vmor %vm2704, %vm2705
    %v2707 = vsel %vm2706, %v2699, %v2703
    %v2708 = vand.u32 2147483647, %v2681
    %vm2709 = vcmp.eq.f32.partialorder %v2708, 8.507059e+37
    %v2710 = vand.u32 %v2681, 2147483648
    %v2711 = vor.u32 1.1754944e-38, %v2710
    %v2712 = vsel %vm2709, %v2711, %v2707
    %v2713 = vmul.f32 1.0, %v2712
    %v2714 = vrcp.pop %v2682
    %v2715 = vmul.f32 %v2682, %v2714
    %v2716 = vsub.f32 1.0, %v2715
    %v2717 = vmul.f32 %v2714, %v2716
    %v2718 = vadd.f32 %v2714, %v2717
    %vm2719 = vweird.f32 %v2682
    %vm2720 = vweird.f32 %v2714
    %vm2721 = vmor %vm2719, %vm2720
    %v2722 = vsel %vm2721, %v2714, %v2718
    %v2723 = vand.u32 2147483647, %v2682
    %vm2724 = vcmp.eq.f32.partialorder %v2723, 8.507059e+37
    %v2725 = vand.u32 %v2682, 2147483648
    %v2726 = vor.u32 1.1754944e-38, %v2725
    %v2727 = vsel %vm2724, %v2726, %v2722
    %v2728 = vmul.f32 1.0, %v2727
    %v2729 = vrcp.pop %v2683
    %v2730 = vmul.f32 %v2683, %v2729
    %v2731 = vsub.f32 1.0, %v2730
    %v2732 = vmul.f32 %v2729, %v2731
    %v2733 = vadd.f32 %v2729, %v2732
    %vm2734 = vweird.f32 %v2683
    %vm2735 = vweird.f32 %v2729
    %vm2736 = vmor %vm2734, %vm2735
    %v2737 = vsel %vm2736, %v2729, %v2733
    %v2738 = vand.u32 2147483647, %v2683
    %vm2739 = vcmp.eq.f32.partialorder %v2738, 8.507059e+37
    %v2740 = vand.u32 %v2683, 2147483648
    %v2741 = vor.u32 1.1754944e-38, %v2740
    %v2742 = vsel %vm2739, %v2741, %v2737
    %v2743 = vmul.f32 1.0, %v2742
    %v2744 = vtanh.pop %v2584
    %v2745 = vtanh.pop %v2585
    %v2746 = vtanh.pop %v2586
    %v2747 = vtanh.pop %v2587
    %v2748 = vxor.u32 %v2588, 2147483648
    %v2749 = vxor.u32 %v2589, 2147483648
    %v2750 = vxor.u32 %v2590, 2147483648
    %v2751 = vxor.u32 %v2591, 2147483648
    %v2752 = vmul.f32 %v2748, 1.442695
    %v2753 = vpow.pop %v2752
    %v2754 = vmul.f32 %v2749, 1.442695
    %v2755 = vpow.pop %v2754
    %v2756 = vmul.f32 %v2750, 1.442695
    %v2757 = vpow.pop %v2756
    %v2758 = vmul.f32 %v2751, 1.442695
    %v2759 = vpow.pop %v2758
    %v2760 = vadd.f32 %v2753, 1.0
    %v2761 = vadd.f32 %v2755, 1.0
    %v2762 = vadd.f32 %v2757, 1.0
    %v2763 = vadd.f32 %v2759, 1.0
    %v2764 = vrcp.pop %v2760
    %v2765 = vmul.f32 %v2760, %v2764
    %v2766 = vsub.f32 1.0, %v2765
    %v2767 = vmul.f32 %v2764, %v2766
    %v2768 = vadd.f32 %v2764, %v2767
    %vm2769 = vweird.f32 %v2760
    %vm2770 = vweird.f32 %v2764
    %vm2771 = vmor %vm2769, %vm2770
    %v2772 = vsel %vm2771, %v2764, %v2768
    %v2773 = vand.u32 2147483647, %v2760
    %vm2774 = vcmp.eq.f32.partialorder %v2773, 8.507059e+37
    %v2775 = vand.u32 %v2760, 2147483648
    %v2776 = vor.u32 1.1754944e-38, %v2775
    %v2777 = vsel %vm2774, %v2776, %v2772
    %v2778 = vmul.f32 1.0, %v2777
    %v2779 = vrcp.pop %v2761
    %v2780 = vmul.f32 %v2761, %v2779
    %v2781 = vsub.f32 1.0, %v2780
    %v2782 = vmul.f32 %v2779, %v2781
    %v2783 = vadd.f32 %v2779, %v2782
    %vm2784 = vweird.f32 %v2761
    %vm2785 = vweird.f32 %v2779
    %vm2786 = vmor %vm2784, %vm2785
    %v2787 = vsel %vm2786, %v2779, %v2783
    %v2788 = vand.u32 2147483647, %v2761
    %vm2789 = vcmp.eq.f32.partialorder %v2788, 8.507059e+37
    %v2790 = vand.u32 %v2761, 2147483648
    %v2791 = vor.u32 1.1754944e-38, %v2790
    %v2792 = vsel %vm2789, %v2791, %v2787
    %v2793 = vmul.f32 1.0, %v2792
    %v2794 = vrcp.pop %v2762
    %v2795 = vmul.f32 %v2762, %v2794
    %v2796 = vsub.f32 1.0, %v2795
    %v2797 = vmul.f32 %v2794, %v2796
    %v2798 = vadd.f32 %v2794, %v2797
    %vm2799 = vweird.f32 %v2762
    %vm2800 = vweird.f32 %v2794
    %vm2801 = vmor %vm2799, %vm2800
    %v2802 = vsel %vm2801, %v2794, %v2798
    %v2803 = vand.u32 2147483647, %v2762
    %vm2804 = vcmp.eq.f32.partialorder %v2803, 8.507059e+37
    %v2805 = vand.u32 %v2762, 2147483648
    %v2806 = vor.u32 1.1754944e-38, %v2805
    %v2807 = vsel %vm2804, %v2806, %v2802
    %v2808 = vmul.f32 1.0, %v2807
    %v2809 = vrcp.pop %v2763
    %v2810 = vmul.f32 %v2763, %v2809
    %v2811 = vsub.f32 1.0, %v2810
    %v2812 = vmul.f32 %v2809, %v2811
    %v2813 = vadd.f32 %v2809, %v2812
    %vm2814 = vweird.f32 %v2763
    %vm2815 = vweird.f32 %v2809
    %vm2816 = vmor %vm2814, %vm2815
    %v2817 = vsel %vm2816, %v2809, %v2813
    %v2818 = vand.u32 2147483647, %v2763
    %vm2819 = vcmp.eq.f32.partialorder %v2818, 8.507059e+37
    %v2820 = vand.u32 %v2763, 2147483648
    %v2821 = vor.u32 1.1754944e-38, %v2820
    %v2822 = vsel %vm2819, %v2821, %v2817
    %v2823 = vmul.f32 1.0, %v2822
    %v2824 = vmul.f32 %v2698, %v2466
    %v2825 = vmul.f32 %v2713, %v2467
    %v2826 = vmul.f32 %v2728, %v2468
    %v2827 = vmul.f32 %v2743, %v2469
    %v2828 = vmul.f32 %v2622, %v2744
    %v2829 = vmul.f32 %v2637, %v2745
    %v2830 = vmul.f32 %v2652, %v2746
    %v2831 = vmul.f32 %v2667, %v2747
    %v2832 = vadd.f32 %v2824, %v2828
    %v2833 = vadd.f32 %v2825, %v2829
    %v2834 = vadd.f32 %v2826, %v2830
    %v2835 = vadd.f32 %v2827, %v2831
    %v2836 = vtanh.pop %v2832
    %v2837 = vtanh.pop %v2833
    %v2838 = vtanh.pop %v2834
    %v2839 = vtanh.pop %v2835
    %v2840 = vmul.f32 %v2778, %v2836
    %v2841 = vmul.f32 %v2793, %v2837
    %v2842 = vmul.f32 %v2808, %v2838
    %v2843 = vmul.f32 %v2823, %v2839
    %v2844 = vperm.slane %v24, 7
    %v2845 = vmul.f32 %v2844, %v157
    %v2846 = vmul.f32 %v2844, %v162
    %v2847 = vmul.f32 %v2844, %v167
    %v2848 = vmul.f32 %v2844, %v172
    %v2849 = vmul.f32 %v2844, %v177
    %v2850 = vmul.f32 %v2844, %v182
    %v2851 = vmul.f32 %v2844, %v187
    %v2852 = vmul.f32 %v2844, %v192
    %v2853 = vmul.f32 %v2844, %v197
    %v2854 = vmul.f32 %v2844, %v202
    %v2855 = vmul.f32 %v2844, %v207
    %v2856 = vmul.f32 %v2844, %v212
    %v2857 = vmul.f32 %v2844, %v217
    %v2858 = vmul.f32 %v2844, %v222
    %v2859 = vmul.f32 %v2844, %v227
    %v2860 = vmul.f32 %v2844, %v232
    %v2861 = vadd.f32 %v2845, %v76
    %v2862 = vadd.f32 %v2846, %v81
    %v2863 = vadd.f32 %v2847, %v86
    %v2864 = vadd.f32 %v2848, %v91
    %v2865 = vadd.f32 %v2849, %v96
    %v2866 = vadd.f32 %v2850, %v101
    %v2867 = vadd.f32 %v2851, %v106
    %v2868 = vadd.f32 %v2852, %v111
    %v2869 = vadd.f32 %v2853, %v116
    %v2870 = vadd.f32 %v2854, %v121
    %v2871 = vadd.f32 %v2855, %v126
    %v2872 = vadd.f32 %v2856, %v131
    %v2873 = vadd.f32 %v2857, %v136
    %v2874 = vadd.f32 %v2858, %v141
    %v2875 = vadd.f32 %v2859, %v146
    %v2876 = vadd.f32 %v2860, %v151
    %2877 = vmatpush.msra.mxu0 0.0
    %2878 = vmatpush.msra.mxu0 0.0
    %2879 = vmatpush.msra.mxu0 0.0
    %2880 = vmatpush.msra.mxu0 0.0
    %2881 = vmatpush.msra.mxu0 0.0
    %2882 = vmatpush.msra.mxu0 0.0
    %2883 = vmatpush.msra.mxu0 0.0
    %2884 = vmatpush.msra.mxu0 0.0
    %2885 = vmatpush.msra.mxu0 0.0
    %2886 = vmatpush.msra.mxu0 0.0
    %2887 = vmatpush.msra.mxu0 0.0
    %2888 = vmatpush.msra.mxu0 0.0
    %2889 = vmatpush.msra.mxu0 %v2843
    %2890 = vmatpush.msra.mxu0 %v2842
    %2891 = vmatpush.msra.mxu0 %v2841
    %2892 = vmatpush.msra.mxu0 %v2840
    %2893 = vmatmul.f32.gmra.mxu0 %v268
    %v2894 = vpop.f32.mrf.mxu0
    %v2895 = vadd.f32 0.0, %v2894
    %2896 = vmatmul.f32.gmra.mxu0 %v271
    %v2897 = vpop.f32.mrf.mxu0
    %v2898 = vadd.f32 0.0, %v2897
    %2899 = vmatmul.f32.gmra.mxu0 %v274
    %v2900 = vpop.f32.mrf.mxu0
    %v2901 = vadd.f32 0.0, %v2900
    %2902 = vmatmul.f32.gmra.mxu0 %v277
    %v2903 = vpop.f32.mrf.mxu0
    %v2904 = vadd.f32 0.0, %v2903
    %2905 = vmatmul.f32.gmra.mxu0 %v280
    %v2906 = vpop.f32.mrf.mxu0
    %v2907 = vadd.f32 0.0, %v2906
    %2908 = vmatmul.f32.gmra.mxu0 %v283
    %v2909 = vpop.f32.mrf.mxu0
    %v2910 = vadd.f32 0.0, %v2909
    %2911 = vmatmul.f32.gmra.mxu0 %v286
    %v2912 = vpop.f32.mrf.mxu0
    %v2913 = vadd.f32 0.0, %v2912
    %2914 = vmatmul.f32.gmra.mxu0 %v289
    %v2915 = vpop.f32.mrf.mxu0
    %v2916 = vadd.f32 0.0, %v2915
    %2917 = vmatmul.f32.gmra.mxu0 %v292
    %v2918 = vpop.f32.mrf.mxu0
    %v2919 = vadd.f32 0.0, %v2918
    %2920 = vmatmul.f32.gmra.mxu0 %v295
    %v2921 = vpop.f32.mrf.mxu0
    %v2922 = vadd.f32 0.0, %v2921
    %2923 = vmatmul.f32.gmra.mxu0 %v298
    %v2924 = vpop.f32.mrf.mxu0
    %v2925 = vadd.f32 0.0, %v2924
    %2926 = vmatmul.f32.gmra.mxu0 %v301
    %v2927 = vpop.f32.mrf.mxu0
    %v2928 = vadd.f32 0.0, %v2927
    %2929 = vmatmul.f32.gmra.mxu0 %v304
    %v2930 = vpop.f32.mrf.mxu0
    %v2931 = vadd.f32 0.0, %v2930
    %2932 = vmatmul.f32.gmra.mxu0 %v307
    %v2933 = vpop.f32.mrf.mxu0
    %v2934 = vadd.f32 0.0, %v2933
    %2935 = vmatmul.f32.gmra.mxu0 %v310
    %v2936 = vpop.f32.mrf.mxu0
    %v2937 = vadd.f32 0.0, %v2936
    %2938 = vmatmul.f32.gmra.mxu0 %v313
    %v2939 = vpop.f32.mrf.mxu0
    %v2940 = vadd.f32 0.0, %v2939
    %2941 = vdwg.mxu0
    %v2942 = vadd.f32 %v2861, %v2895
    %v2943 = vadd.f32 %v2862, %v2898
    %v2944 = vadd.f32 %v2863, %v2901
    %v2945 = vadd.f32 %v2864, %v2904
    %v2946 = vadd.f32 %v2865, %v2907
    %v2947 = vadd.f32 %v2866, %v2910
    %v2948 = vadd.f32 %v2867, %v2913
    %v2949 = vadd.f32 %v2868, %v2916
    %v2950 = vadd.f32 %v2869, %v2919
    %v2951 = vadd.f32 %v2870, %v2922
    %v2952 = vadd.f32 %v2871, %v2925
    %v2953 = vadd.f32 %v2872, %v2928
    %v2954 = vadd.f32 %v2873, %v2931
    %v2955 = vadd.f32 %v2874, %v2934
    %v2956 = vadd.f32 %v2875, %v2937
    %v2957 = vadd.f32 %v2876, %v2940
    %v2958 = vxor.u32 %v2942, 2147483648
    %v2959 = vxor.u32 %v2943, 2147483648
    %v2960 = vxor.u32 %v2944, 2147483648
    %v2961 = vxor.u32 %v2945, 2147483648
    %v2962 = vmul.f32 %v2958, 1.442695
    %v2963 = vpow.pop %v2962
    %v2964 = vmul.f32 %v2959, 1.442695
    %v2965 = vpow.pop %v2964
    %v2966 = vmul.f32 %v2960, 1.442695
    %v2967 = vpow.pop %v2966
    %v2968 = vmul.f32 %v2961, 1.442695
    %v2969 = vpow.pop %v2968
    %v2970 = vadd.f32 %v2963, 1.0
    %v2971 = vadd.f32 %v2965, 1.0
    %v2972 = vadd.f32 %v2967, 1.0
    %v2973 = vadd.f32 %v2969, 1.0
    %v2974 = vrcp.pop %v2970
    %v2975 = vmul.f32 %v2970, %v2974
    %v2976 = vsub.f32 1.0, %v2975
    %v2977 = vmul.f32 %v2974, %v2976
    %v2978 = vadd.f32 %v2974, %v2977
    %vm2979 = vweird.f32 %v2970
    %vm2980 = vweird.f32 %v2974
    %vm2981 = vmor %vm2979, %vm2980
    %v2982 = vsel %vm2981, %v2974, %v2978
    %v2983 = vand.u32 2147483647, %v2970
    %vm2984 = vcmp.eq.f32.partialorder %v2983, 8.507059e+37
    %v2985 = vand.u32 %v2970, 2147483648
    %v2986 = vor.u32 1.1754944e-38, %v2985
    %v2987 = vsel %vm2984, %v2986, %v2982
    %v2988 = vmul.f32 1.0, %v2987
    %v2989 = vrcp.pop %v2971
    %v2990 = vmul.f32 %v2971, %v2989
    %v2991 = vsub.f32 1.0, %v2990
    %v2992 = vmul.f32 %v2989, %v2991
    %v2993 = vadd.f32 %v2989, %v2992
    %vm2994 = vweird.f32 %v2971
    %vm2995 = vweird.f32 %v2989
    %vm2996 = vmor %vm2994, %vm2995
    %v2997 = vsel %vm2996, %v2989, %v2993
    %v2998 = vand.u32 2147483647, %v2971
    %vm2999 = vcmp.eq.f32.partialorder %v2998, 8.507059e+37
    %v3000 = vand.u32 %v2971, 2147483648
    %v3001 = vor.u32 1.1754944e-38, %v3000
    %v3002 = vsel %vm2999, %v3001, %v2997
    %v3003 = vmul.f32 1.0, %v3002
    %v3004 = vrcp.pop %v2972
    %v3005 = vmul.f32 %v2972, %v3004
    %v3006 = vsub.f32 1.0, %v3005
    %v3007 = vmul.f32 %v3004, %v3006
    %v3008 = vadd.f32 %v3004, %v3007
    %vm3009 = vweird.f32 %v2972
    %vm3010 = vweird.f32 %v3004
    %vm3011 = vmor %vm3009, %vm3010
    %v3012 = vsel %vm3011, %v3004, %v3008
    %v3013 = vand.u32 2147483647, %v2972
    %vm3014 = vcmp.eq.f32.partialorder %v3013, 8.507059e+37
    %v3015 = vand.u32 %v2972, 2147483648
    %v3016 = vor.u32 1.1754944e-38, %v3015
    %v3017 = vsel %vm3014, %v3016, %v3012
    %v3018 = vmul.f32 1.0, %v3017
    %v3019 = vrcp.pop %v2973
    %v3020 = vmul.f32 %v2973, %v3019
    %v3021 = vsub.f32 1.0, %v3020
    %v3022 = vmul.f32 %v3019, %v3021
    %v3023 = vadd.f32 %v3019, %v3022
    %vm3024 = vweird.f32 %v2973
    %vm3025 = vweird.f32 %v3019
    %vm3026 = vmor %vm3024, %vm3025
    %v3027 = vsel %vm3026, %v3019, %v3023
    %v3028 = vand.u32 2147483647, %v2973
    %vm3029 = vcmp.eq.f32.partialorder %v3028, 8.507059e+37
    %v3030 = vand.u32 %v2973, 2147483648
    %v3031 = vor.u32 1.1754944e-38, %v3030
    %v3032 = vsel %vm3029, %v3031, %v3027
    %v3033 = vmul.f32 1.0, %v3032
    %v3034 = vxor.u32 %v2946, 2147483648
    %v3035 = vxor.u32 %v2947, 2147483648
    %v3036 = vxor.u32 %v2948, 2147483648
    %v3037 = vxor.u32 %v2949, 2147483648
    %v3038 = vmul.f32 %v3034, 1.442695
    %v3039 = vpow.pop %v3038
    %v3040 = vmul.f32 %v3035, 1.442695
    %v3041 = vpow.pop %v3040
    %v3042 = vmul.f32 %v3036, 1.442695
    %v3043 = vpow.pop %v3042
    %v3044 = vmul.f32 %v3037, 1.442695
    %v3045 = vpow.pop %v3044
    %v3046 = vadd.f32 %v3039, 1.0
    %v3047 = vadd.f32 %v3041, 1.0
    %v3048 = vadd.f32 %v3043, 1.0
    %v3049 = vadd.f32 %v3045, 1.0
    %v3050 = vrcp.pop %v3046
    %v3051 = vmul.f32 %v3046, %v3050
    %v3052 = vsub.f32 1.0, %v3051
    %v3053 = vmul.f32 %v3050, %v3052
    %v3054 = vadd.f32 %v3050, %v3053
    %vm3055 = vweird.f32 %v3046
    %vm3056 = vweird.f32 %v3050
    %vm3057 = vmor %vm3055, %vm3056
    %v3058 = vsel %vm3057, %v3050, %v3054
    %v3059 = vand.u32 2147483647, %v3046
    %vm3060 = vcmp.eq.f32.partialorder %v3059, 8.507059e+37
    %v3061 = vand.u32 %v3046, 2147483648
    %v3062 = vor.u32 1.1754944e-38, %v3061
    %v3063 = vsel %vm3060, %v3062, %v3058
    %v3064 = vmul.f32 1.0, %v3063
    %v3065 = vrcp.pop %v3047
    %v3066 = vmul.f32 %v3047, %v3065
    %v3067 = vsub.f32 1.0, %v3066
    %v3068 = vmul.f32 %v3065, %v3067
    %v3069 = vadd.f32 %v3065, %v3068
    %vm3070 = vweird.f32 %v3047
    %vm3071 = vweird.f32 %v3065
    %vm3072 = vmor %vm3070, %vm3071
    %v3073 = vsel %vm3072, %v3065, %v3069
    %v3074 = vand.u32 2147483647, %v3047
    %vm3075 = vcmp.eq.f32.partialorder %v3074, 8.507059e+37
    %v3076 = vand.u32 %v3047, 2147483648
    %v3077 = vor.u32 1.1754944e-38, %v3076
    %v3078 = vsel %vm3075, %v3077, %v3073
    %v3079 = vmul.f32 1.0, %v3078
    %v3080 = vrcp.pop %v3048
    %v3081 = vmul.f32 %v3048, %v3080
    %v3082 = vsub.f32 1.0, %v3081
    %v3083 = vmul.f32 %v3080, %v3082
    %v3084 = vadd.f32 %v3080, %v3083
    %vm3085 = vweird.f32 %v3048
    %vm3086 = vweird.f32 %v3080
    %vm3087 = vmor %vm3085, %vm3086
    %v3088 = vsel %vm3087, %v3080, %v3084
    %v3089 = vand.u32 2147483647, %v3048
    %vm3090 = vcmp.eq.f32.partialorder %v3089, 8.507059e+37
    %v3091 = vand.u32 %v3048, 2147483648
    %v3092 = vor.u32 1.1754944e-38, %v3091
    %v3093 = vsel %vm3090, %v3092, %v3088
    %v3094 = vmul.f32 1.0, %v3093
    %v3095 = vrcp.pop %v3049
    %v3096 = vmul.f32 %v3049, %v3095
    %v3097 = vsub.f32 1.0, %v3096
    %v3098 = vmul.f32 %v3095, %v3097
    %v3099 = vadd.f32 %v3095, %v3098
    %vm3100 = vweird.f32 %v3049
    %vm3101 = vweird.f32 %v3095
    %vm3102 = vmor %vm3100, %vm3101
    %v3103 = vsel %vm3102, %v3095, %v3099
    %v3104 = vand.u32 2147483647, %v3049
    %vm3105 = vcmp.eq.f32.partialorder %v3104, 8.507059e+37
    %v3106 = vand.u32 %v3049, 2147483648
    %v3107 = vor.u32 1.1754944e-38, %v3106
    %v3108 = vsel %vm3105, %v3107, %v3103
    %v3109 = vmul.f32 1.0, %v3108
    %v3110 = vtanh.pop %v2950
    %v3111 = vtanh.pop %v2951
    %v3112 = vtanh.pop %v2952
    %v3113 = vtanh.pop %v2953
    %v3114 = vxor.u32 %v2954, 2147483648
    %v3115 = vxor.u32 %v2955, 2147483648
    %v3116 = vxor.u32 %v2956, 2147483648
    %v3117 = vxor.u32 %v2957, 2147483648
    %v3118 = vmul.f32 %v3114, 1.442695
    %v3119 = vpow.pop %v3118
    %v3120 = vmul.f32 %v3115, 1.442695
    %v3121 = vpow.pop %v3120
    %v3122 = vmul.f32 %v3116, 1.442695
    %v3123 = vpow.pop %v3122
    %v3124 = vmul.f32 %v3117, 1.442695
    %v3125 = vpow.pop %v3124
    %v3126 = vadd.f32 %v3119, 1.0
    %v3127 = vadd.f32 %v3121, 1.0
    %v3128 = vadd.f32 %v3123, 1.0
    %v3129 = vadd.f32 %v3125, 1.0
    %v3130 = vrcp.pop %v3126
    %v3131 = vmul.f32 %v3126, %v3130
    %v3132 = vsub.f32 1.0, %v3131
    %v3133 = vmul.f32 %v3130, %v3132
    %v3134 = vadd.f32 %v3130, %v3133
    %vm3135 = vweird.f32 %v3126
    %vm3136 = vweird.f32 %v3130
    %vm3137 = vmor %vm3135, %vm3136
    %v3138 = vsel %vm3137, %v3130, %v3134
    %v3139 = vand.u32 2147483647, %v3126
    %vm3140 = vcmp.eq.f32.partialorder %v3139, 8.507059e+37
    %v3141 = vand.u32 %v3126, 2147483648
    %v3142 = vor.u32 1.1754944e-38, %v3141
    %v3143 = vsel %vm3140, %v3142, %v3138
    %v3144 = vmul.f32 1.0, %v3143
    %v3145 = vrcp.pop %v3127
    %v3146 = vmul.f32 %v3127, %v3145
    %v3147 = vsub.f32 1.0, %v3146
    %v3148 = vmul.f32 %v3145, %v3147
    %v3149 = vadd.f32 %v3145, %v3148
    %vm3150 = vweird.f32 %v3127
    %vm3151 = vweird.f32 %v3145
    %vm3152 = vmor %vm3150, %vm3151
    %v3153 = vsel %vm3152, %v3145, %v3149
    %v3154 = vand.u32 2147483647, %v3127
    %vm3155 = vcmp.eq.f32.partialorder %v3154, 8.507059e+37
    %v3156 = vand.u32 %v3127, 2147483648
    %v3157 = vor.u32 1.1754944e-38, %v3156
    %v3158 = vsel %vm3155, %v3157, %v3153
    %v3159 = vmul.f32 1.0, %v3158
    %v3160 = vrcp.pop %v3128
    %v3161 = vmul.f32 %v3128, %v3160
    %v3162 = vsub.f32 1.0, %v3161
    %v3163 = vmul.f32 %v3160, %v3162
    %v3164 = vadd.f32 %v3160, %v3163
    %vm3165 = vweird.f32 %v3128
    %vm3166 = vweird.f32 %v3160
    %vm3167 = vmor %vm3165, %vm3166
    %v3168 = vsel %vm3167, %v3160, %v3164
    %v3169 = vand.u32 2147483647, %v3128
    %vm3170 = vcmp.eq.f32.partialorder %v3169, 8.507059e+37
    %v3171 = vand.u32 %v3128, 2147483648
    %v3172 = vor.u32 1.1754944e-38, %v3171
    %v3173 = vsel %vm3170, %v3172, %v3168
    %v3174 = vmul.f32 1.0, %v3173
    %v3175 = vrcp.pop %v3129
    %v3176 = vmul.f32 %v3129, %v3175
    %v3177 = vsub.f32 1.0, %v3176
    %v3178 = vmul.f32 %v3175, %v3177
    %v3179 = vadd.f32 %v3175, %v3178
    %vm3180 = vweird.f32 %v3129
    %vm3181 = vweird.f32 %v3175
    %vm3182 = vmor %vm3180, %vm3181
    %v3183 = vsel %vm3182, %v3175, %v3179
    %v3184 = vand.u32 2147483647, %v3129
    %vm3185 = vcmp.eq.f32.partialorder %v3184, 8.507059e+37
    %v3186 = vand.u32 %v3129, 2147483648
    %v3187 = vor.u32 1.1754944e-38, %v3186
    %v3188 = vsel %vm3185, %v3187, %v3183
    %v3189 = vmul.f32 1.0, %v3188
    %v3190 = vmul.f32 %v3064, %v2832
    %v3191 = vmul.f32 %v3079, %v2833
    %v3192 = vmul.f32 %v3094, %v2834
    %v3193 = vmul.f32 %v3109, %v2835
    %v3194 = vmul.f32 %v2988, %v3110
    %v3195 = vmul.f32 %v3003, %v3111
    %v3196 = vmul.f32 %v3018, %v3112
    %v3197 = vmul.f32 %v3033, %v3113
    %v3198 = vadd.f32 %v3190, %v3194
    %v3199 = vadd.f32 %v3191, %v3195
    %v3200 = vadd.f32 %v3192, %v3196
    %v3201 = vadd.f32 %v3193, %v3197
    %v3202 = vtanh.pop %v3198
    %v3203 = vtanh.pop %v3199
    %v3204 = vtanh.pop %v3200
    %v3205 = vtanh.pop %v3201
    %v3206 = vmul.f32 %v3144, %v3202
    %v3207 = vmul.f32 %v3159, %v3203
    %v3208 = vmul.f32 %v3174, %v3204
    %v3209 = vmul.f32 %v3189, %v3205
    %v3210 = vld [vmem:[%s4] sm:$0xff]
    %v3211 = vld [vmem:[%s5] sm:$0xff]
    %3213 = vset.pattern.permute.xlu0 0
    %3214 = vperm.xlu0 %3213, %v3211
    %v3215 = vpop.permute.xlu0 %3214
    %v3218 = vsel %vm266, %v3210, 0
    %3220 = vmatpush.msra.mxu0 0.0
    %3221 = vmatpush.msra.mxu0 0.0
    %3222 = vmatpush.msra.mxu0 0.0
    %3223 = vmatpush.msra.mxu0 0.0
    %3224 = vmatpush.msra.mxu0 0.0
    %3225 = vmatpush.msra.mxu0 0.0
    %3226 = vmatpush.msra.mxu0 0.0
    %3227 = vmatpush.msra.mxu0 0.0
    %3228 = vmatpush.msra.mxu0 0.0
    %3229 = vmatpush.msra.mxu0 0.0
    %3230 = vmatpush.msra.mxu0 0.0
    %3231 = vmatpush.msra.mxu0 0.0
    %3232 = vmatpush.msra.mxu0 %v3209
    %3233 = vmatpush.msra.mxu0 %v3208
    %3234 = vmatpush.msra.mxu0 %v3207
    %3235 = vmatpush.msra.mxu0 %v3206
    %3236 = vmatmul.f32.gmra.mxu0 %v3218
    %v3237 = vpop.f32.mrf.mxu0
    %v3238 = vadd.f32 %v3215, %v3237
    %3239 = vdwg.mxu0
    %3240 = vst [vmem:[#allocation2] sm:$0xff] %v3238
    // Predicated region
    $region26: #{tpu_custom_call.1} parent=1 // pred_check
      _
    $region27: #{tpu_custom_call.1} parent=1 // pred_check_branch
      %3242 = sbr.rel (0) target = $region29
    $region28: #{tpu_custom_call.1} parent=1 // pred_region
      %3244 = vsyncadd [#allocation3], 0
      %s3246 = sshll.u32 [#allocation2], 4
      %s3247 = int_to_ptr.vmem [resolvable:$true] %s3246
      %s3248 = sshll.u32 %s6, 4
      %s3249 = int_to_ptr.hbm [resolvable:$true] %s3248
      %3251 = dma.vmem_to_hbm [thread:$0]  %s3247, 128, %s3249, [#allocation3]
    $region29: #{tpu_custom_call.1} parent=1 // pred_fallthru
      _
    // Predicated region
    $region30: #{tpu_custom_call.1} parent=1 // pred_check
      _
    $region31: #{tpu_custom_call.1} parent=1 // pred_check_branch
      %3253 = sbr.rel (0) target = $region33
    $region32: #{tpu_custom_call.1} parent=1 // pred_region
      %3255 = dma.done [#allocation3], 128
    $region33: #{tpu_custom_call.1} parent=1 // pred_fallthru
      _
    %3256 = vsyncpa [#allocation3], 1

</llo_original>
